<compile_context>
chip_gen: v5e
topology: v5e:2x2
jax: 0.10.0
libtpu: 0.0.40
codegen_flags: <defaults>
</compile_context>

<pallas_src>
import functools

import jax
import jax.numpy as jnp
from jax.experimental import pallas as pl
from jax.experimental.pallas import tpu as pltpu


# ---------------------------------------------------------------------------
# helpers
# ---------------------------------------------------------------------------
def _round_up(x, m):
    return ((x + m - 1) // m) * m


def _pad_weight(w_out_in, k_pad, n_pad):
    """PyTorch (out, in) weight -> (in_pad, out_pad) bf16, zero padded."""
    o, i = w_out_in.shape
    wt = w_out_in.T.astype(jnp.float32)                      # (in, out)
    wt = jnp.zeros((k_pad, n_pad), jnp.float32).at[:i, :o].set(wt)
    return wt.astype(jnp.bfloat16)


def _pad_bias(b, n_pad):
    """(out,) bias -> (1, out_pad) f32, zero padded."""
    o = b.shape[0]
    bp = jnp.zeros((1, n_pad), jnp.float32).at[0, :o].set(b.astype(jnp.float32))
    return bp


# ---------------------------------------------------------------------------
# Pallas kernel: the whole 4-layer MLP, fused.
#   x tile (tm, K0) bf16 ; weights (K, N) bf16 ; biases (1, N) f32
#   accumulate in f32 on the MXU, re-cast to bf16 between layers.
# ---------------------------------------------------------------------------
def _mlp_kernel(x_ref, w1_ref, b1_ref, w2_ref, b2_ref, w3_ref, b3_ref,
                w4_ref, b4_ref, o_ref):
    h = jnp.dot(x_ref[...], w1_ref[...], preferred_element_type=jnp.float32)
    h = jnp.maximum(h + b1_ref[...], 0.0).astype(jnp.bfloat16)

    h = jnp.dot(h, w2_ref[...], preferred_element_type=jnp.float32)
    h = jnp.maximum(h + b2_ref[...], 0.0).astype(jnp.bfloat16)

    h = jnp.dot(h, w3_ref[...], preferred_element_type=jnp.float32)
    h = jnp.maximum(h + b3_ref[...], 0.0).astype(jnp.bfloat16)

    y = jnp.dot(h, w4_ref[...], preferred_element_type=jnp.float32)
    o_ref[...] = (y + b4_ref[...]).astype(o_ref.dtype)


# ---------------------------------------------------------------------------
# Parameter init (PyTorch layout) + one-time prep (pad / transpose / cast)
# ---------------------------------------------------------------------------
def encoder_init_params(key, input_dim, output_dim):
    ks = jax.random.split(key, 8)
    s = 0.05
    return {
        "w1": s * jax.random.normal(ks[0], (500, input_dim), jnp.float32),
        "b1": s * jax.random.normal(ks[1], (500,), jnp.float32),
        "w2": s * jax.random.normal(ks[2], (500, 500), jnp.float32),
        "b2": s * jax.random.normal(ks[3], (500,), jnp.float32),
        "w3": s * jax.random.normal(ks[4], (2000, 500), jnp.float32),
        "b3": s * jax.random.normal(ks[5], (2000,), jnp.float32),
        "w4": s * jax.random.normal(ks[6], (output_dim, 2000), jnp.float32),
        "b4": s * jax.random.normal(ks[7], (output_dim,), jnp.float32),
    }


def encoder_prep_params(params, input_dim, output_dim):
    """One-time host-side prep: transpose to (in,out), pad to lane-dense dims,
    cast weights to bf16. Padded rows/cols are zero so results are exact."""
    k0 = _round_up(input_dim, 128)
    h1 = _round_up(500, 128)       # 512
    h2 = _round_up(500, 128)       # 512
    h3 = _round_up(2000, 128)      # 2048
    no = _round_up(output_dim, 128)
    return {
        "w1": _pad_weight(params["w1"], k0, h1), "b1": _pad_bias(params["b1"], h1),
        "w2": _pad_weight(params["w2"], h1, h2), "b2": _pad_bias(params["b2"], h2),
        "w3": _pad_weight(params["w3"], h2, h3), "b3": _pad_bias(params["b3"], h3),
        "w4": _pad_weight(params["w4"], h3, no), "b4": _pad_bias(params["b4"], no),
    }


# ---------------------------------------------------------------------------
# Forward pass
# ---------------------------------------------------------------------------
def encoder_forward(prepped, x, *, output_dim):
    B, d_in = x.shape
    k0 = prepped["w1"].shape[0]
    h1 = prepped["w1"].shape[1]
    h2 = prepped["w2"].shape[1]
    h3 = prepped["w3"].shape[1]
    no = prepped["w4"].shape[1]

    # Pad rows to a sublane-aligned, tile-divisible count; cap the row tile so
    # VMEM stays bounded as batch grows and the grid stays "parallel"-shardable.
    m_pad = _round_up(max(B, 8), 8)
    tm = min(m_pad, 256)
    m_pad = _round_up(m_pad, tm)
    grid = (m_pad // tm,)

    x_p = jnp.zeros((m_pad, k0), jnp.bfloat16)
    x_p = x_p.at[:B, :d_in].set(x.astype(jnp.bfloat16))

    flops = 2 * m_pad * (k0 * h1 + h1 * h2 + h2 * h3 + h3 * no)
    bytes_accessed = (
        m_pad * k0 * 2                                           # x (bf16)
        + 2 * (k0 * h1 + h1 * h2 + h2 * h3 + h3 * no)            # weights (bf16)
        + 4 * (h1 + h2 + h3 + no)                                # biases (f32)
        + 4 * m_pad * no                                         # output (f32)
    )

    full = lambda i: (0, 0)
    out_padded = pl.pallas_call(
        _mlp_kernel,
        out_shape=jax.ShapeDtypeStruct((m_pad, no), jnp.float32),
        grid=grid,
        in_specs=[
            pl.BlockSpec((tm, k0), lambda i: (i, 0)),   # x row tile
            pl.BlockSpec((k0, h1), full), pl.BlockSpec((1, h1), full),
            pl.BlockSpec((h1, h2), full), pl.BlockSpec((1, h2), full),
            pl.BlockSpec((h2, h3), full), pl.BlockSpec((1, h3), full),
            pl.BlockSpec((h3, no), full), pl.BlockSpec((1, no), full),
        ],
        out_specs=pl.BlockSpec((tm, no), lambda i: (i, 0)),
        compiler_params=pltpu.CompilerParams(
            dimension_semantics=("parallel",)),
        cost_estimate=pl.CostEstimate(
            flops=flops, transcendentals=0, bytes_accessed=bytes_accessed),
    )(x_p, prepped["w1"], prepped["b1"], prepped["w2"], prepped["b2"],
      prepped["w3"], prepped["b3"], prepped["w4"], prepped["b4"])

    return out_padded[:B, :output_dim]


# ---------------------------------------------------------------------------
# main
# ---------------------------------------------------------------------------
if __name__ == "__main__":
    key = jax.random.PRNGKey(0)
    k_x, k_p = jax.random.split(key)

    B, input_dim, output_dim = 2, 64, 10
    x = jax.random.normal(k_x, (B, input_dim), jnp.float32)

    params = encoder_init_params(k_p, input_dim, output_dim)
    prepped = encoder_prep_params(params, input_dim, output_dim)

    fwd = jax.jit(functools.partial(encoder_forward, output_dim=output_dim))
    out = fwd(prepped, x)
    out = jax.block_until_ready(out)

    assert out.shape == (B, output_dim), out.shape
    assert out.dtype == jnp.float32
    assert bool(jnp.all(jnp.isfinite(out)))

    # Reference using the same bf16 padded weights (loose tol: bf16 operands).
    def ref(xin):
        h = xin.astype(jnp.bfloat16) @ prepped["w1"][:input_dim].astype(jnp.float32)
        h = jnp.maximum(h + prepped["b1"], 0.0)
        h = h.astype(jnp.bfloat16).astype(jnp.float32) @ prepped["w2"].astype(jnp.float32)
        h = jnp.maximum(h + prepped["b2"], 0.0)
        h = h.astype(jnp.bfloat16).astype(jnp.float32) @ prepped["w3"].astype(jnp.float32)
        h = jnp.maximum(h + prepped["b3"], 0.0)
        y = h.astype(jnp.bfloat16).astype(jnp.float32) @ prepped["w4"].astype(jnp.float32)
        return (y + prepped["b4"])[:, :output_dim]

    r = ref(x)
    assert bool(jnp.allclose(out, r, rtol=5e-2, atol=5e-2)), (out, r)

    print("KERNEL_OK")
</pallas_src>

<mosaic_0001>
module attributes {stable_mosaic.version = 11 : i64} {
  func.func @_mlp_kernel(%arg0: i32, %arg1: memref<8x128xbf16, #tpu.memory_space<vmem>>, %arg2: memref<128x512xbf16, #tpu.memory_space<vmem>>, %arg3: memref<1x512xf32, #tpu.memory_space<vmem>>, %arg4: memref<512x512xbf16, #tpu.memory_space<vmem>>, %arg5: memref<1x512xf32, #tpu.memory_space<vmem>>, %arg6: memref<512x2048xbf16, #tpu.memory_space<vmem>>, %arg7: memref<1x2048xf32, #tpu.memory_space<vmem>>, %arg8: memref<2048x128xbf16, #tpu.memory_space<vmem>>, %arg9: memref<1x128xf32, #tpu.memory_space<vmem>>, %arg10: memref<8x128xf32, #tpu.memory_space<vmem>>) attributes {dimension_semantics = [#tpu.dimension_semantics<parallel>], iteration_bounds = array<i64: 1>, scalar_prefetch = 0 : i64, scratch_operands = 0 : i64, tpu.core_type = #tpu.core_type<tc>, window_params = [{transform_indices = @transform_0, window_bounds = array<i64: 8, 128>}, {pipeline_mode = #tpu.pipeline_mode<synchronous>, transform_indices = @transform_1, window_bounds = array<i64: 128, 512>}, {pipeline_mode = #tpu.pipeline_mode<synchronous>, transform_indices = @transform_2, window_bounds = array<i64: 1, 512>}, {pipeline_mode = #tpu.pipeline_mode<synchronous>, transform_indices = @transform_3, window_bounds = array<i64: 512, 512>}, {pipeline_mode = #tpu.pipeline_mode<synchronous>, transform_indices = @transform_4, window_bounds = array<i64: 1, 512>}, {pipeline_mode = #tpu.pipeline_mode<synchronous>, transform_indices = @transform_5, window_bounds = array<i64: 512, 2048>}, {pipeline_mode = #tpu.pipeline_mode<synchronous>, transform_indices = @transform_6, window_bounds = array<i64: 1, 2048>}, {pipeline_mode = #tpu.pipeline_mode<synchronous>, transform_indices = @transform_7, window_bounds = array<i64: 2048, 128>}, {pipeline_mode = #tpu.pipeline_mode<synchronous>, transform_indices = @transform_8, window_bounds = array<i64: 1, 128>}, {transform_indices = @transform_9, window_bounds = array<i64: 8, 128>}]} {
    %c0 = arith.constant 0 : index
    %c0_0 = arith.constant 0 : index
    %0 = vector.load %arg1[%c0, %c0_0] : memref<8x128xbf16, #tpu.memory_space<vmem>>, vector<8x128xbf16>
    %c0_1 = arith.constant 0 : index
    %c0_2 = arith.constant 0 : index
    %1 = vector.load %arg2[%c0_1, %c0_2] : memref<128x512xbf16, #tpu.memory_space<vmem>>, vector<128x512xbf16>
    %cst = arith.constant dense<0.000000e+00> : vector<8x512xf32>
    %2 = tpu.matmul %0, %1, %cst {dimension_numbers = #tpu.dot_dimension_numbers<[1], [0], [0], [1], [0, 0, 1, 1], [], []>} : vector<8x128xbf16>, vector<128x512xbf16>, vector<8x512xf32> -> vector<8x512xf32>
    %c0_3 = arith.constant 0 : index
    %c0_4 = arith.constant 0 : index
    %3 = vector.load %arg3[%c0_3, %c0_4] : memref<1x512xf32, #tpu.memory_space<vmem>>, vector<1x512xf32>
    %4 = vector.broadcast %3 : vector<1x512xf32> to vector<8x512xf32>
    %5 = arith.addf %2, %4 : vector<8x512xf32>
    %cst_5 = arith.constant 0.000000e+00 : f32
    %6 = vector.broadcast %cst_5 : f32 to vector<8x512xf32>
    %7 = arith.maximumf %5, %6 : vector<8x512xf32>
    %8 = arith.truncf %7 : vector<8x512xf32> to vector<8x512xbf16>
    %c0_6 = arith.constant 0 : index
    %c0_7 = arith.constant 0 : index
    %9 = vector.load %arg4[%c0_6, %c0_7] : memref<512x512xbf16, #tpu.memory_space<vmem>>, vector<512x512xbf16>
    %cst_8 = arith.constant dense<0.000000e+00> : vector<8x512xf32>
    %10 = tpu.matmul %8, %9, %cst_8 {dimension_numbers = #tpu.dot_dimension_numbers<[1], [0], [0], [1], [0, 0, 1, 1], [], []>} : vector<8x512xbf16>, vector<512x512xbf16>, vector<8x512xf32> -> vector<8x512xf32>
    %c0_9 = arith.constant 0 : index
    %c0_10 = arith.constant 0 : index
    %11 = vector.load %arg5[%c0_9, %c0_10] : memref<1x512xf32, #tpu.memory_space<vmem>>, vector<1x512xf32>
    %12 = vector.broadcast %11 : vector<1x512xf32> to vector<8x512xf32>
    %13 = arith.addf %10, %12 : vector<8x512xf32>
    %cst_11 = arith.constant 0.000000e+00 : f32
    %14 = vector.broadcast %cst_11 : f32 to vector<8x512xf32>
    %15 = arith.maximumf %13, %14 : vector<8x512xf32>
    %16 = arith.truncf %15 : vector<8x512xf32> to vector<8x512xbf16>
    %c0_12 = arith.constant 0 : index
    %c0_13 = arith.constant 0 : index
    %17 = vector.load %arg6[%c0_12, %c0_13] : memref<512x2048xbf16, #tpu.memory_space<vmem>>, vector<512x2048xbf16>
    %cst_14 = arith.constant dense<0.000000e+00> : vector<8x2048xf32>
    %18 = tpu.matmul %16, %17, %cst_14 {dimension_numbers = #tpu.dot_dimension_numbers<[1], [0], [0], [1], [0, 0, 1, 1], [], []>} : vector<8x512xbf16>, vector<512x2048xbf16>, vector<8x2048xf32> -> vector<8x2048xf32>
    %c0_15 = arith.constant 0 : index
    %c0_16 = arith.constant 0 : index
    %19 = vector.load %arg7[%c0_15, %c0_16] : memref<1x2048xf32, #tpu.memory_space<vmem>>, vector<1x2048xf32>
    %20 = vector.broadcast %19 : vector<1x2048xf32> to vector<8x2048xf32>
    %21 = arith.addf %18, %20 : vector<8x2048xf32>
    %cst_17 = arith.constant 0.000000e+00 : f32
    %22 = vector.broadcast %cst_17 : f32 to vector<8x2048xf32>
    %23 = arith.maximumf %21, %22 : vector<8x2048xf32>
    %24 = arith.truncf %23 : vector<8x2048xf32> to vector<8x2048xbf16>
    %c0_18 = arith.constant 0 : index
    %c0_19 = arith.constant 0 : index
    %25 = vector.load %arg8[%c0_18, %c0_19] : memref<2048x128xbf16, #tpu.memory_space<vmem>>, vector<2048x128xbf16>
    %cst_20 = arith.constant dense<0.000000e+00> : vector<8x128xf32>
    %26 = tpu.matmul %24, %25, %cst_20 {dimension_numbers = #tpu.dot_dimension_numbers<[1], [0], [0], [1], [0, 0, 1, 1], [], []>} : vector<8x2048xbf16>, vector<2048x128xbf16>, vector<8x128xf32> -> vector<8x128xf32>
    %c0_21 = arith.constant 0 : index
    %c0_22 = arith.constant 0 : index
    %27 = vector.load %arg9[%c0_21, %c0_22] : memref<1x128xf32, #tpu.memory_space<vmem>>, vector<1x128xf32>
    %28 = vector.broadcast %27 : vector<1x128xf32> to vector<8x128xf32>
    %29 = arith.addf %26, %28 : vector<8x128xf32>
    %c0_23 = arith.constant 0 : index
    %c0_24 = arith.constant 0 : index
    %30 = vector.load %arg10[%c0_23, %c0_24] : memref<8x128xf32, #tpu.memory_space<vmem>>, vector<8x128xf32>
    tpu.vector_store %arg10[%c0_23, %c0_24], %29 {strides = array<i32>} : memref<8x128xf32, #tpu.memory_space<vmem>>, vector<8x128xf32>,
    return
  }
  func.func @transform_0(%arg0: i32) -> (i32, i32) {
    %c0_i32 = arith.constant 0 : i32
    %c0_i32_0 = arith.constant 0 : i32
    return %arg0, %c0_i32 : i32, i32
  }
  func.func @transform_1(%arg0: i32) -> (i32, i32) {
    %c0_i32 = arith.constant 0 : i32
    %c0_i32_0 = arith.constant 0 : i32
    %c0_i32_1 = arith.constant 0 : i32
    return %c0_i32, %c0_i32_0 : i32, i32
  }
  func.func @transform_2(%arg0: i32) -> (i32, i32) {
    %c0_i32 = arith.constant 0 : i32
    %c0_i32_0 = arith.constant 0 : i32
    %c0_i32_1 = arith.constant 0 : i32
    return %c0_i32, %c0_i32_0 : i32, i32
  }
  func.func @transform_3(%arg0: i32) -> (i32, i32) {
    %c0_i32 = arith.constant 0 : i32
    %c0_i32_0 = arith.constant 0 : i32
    %c0_i32_1 = arith.constant 0 : i32
    return %c0_i32, %c0_i32_0 : i32, i32
  }
  func.func @transform_4(%arg0: i32) -> (i32, i32) {
    %c0_i32 = arith.constant 0 : i32
    %c0_i32_0 = arith.constant 0 : i32
    %c0_i32_1 = arith.constant 0 : i32
    return %c0_i32, %c0_i32_0 : i32, i32
  }
  func.func @transform_5(%arg0: i32) -> (i32, i32) {
    %c0_i32 = arith.constant 0 : i32
    %c0_i32_0 = arith.constant 0 : i32
    %c0_i32_1 = arith.constant 0 : i32
    return %c0_i32, %c0_i32_0 : i32, i32
  }
  func.func @transform_6(%arg0: i32) -> (i32, i32) {
    %c0_i32 = arith.constant 0 : i32
    %c0_i32_0 = arith.constant 0 : i32
    %c0_i32_1 = arith.constant 0 : i32
    return %c0_i32, %c0_i32_0 : i32, i32
  }
  func.func @transform_7(%arg0: i32) -> (i32, i32) {
    %c0_i32 = arith.constant 0 : i32
    %c0_i32_0 = arith.constant 0 : i32
    %c0_i32_1 = arith.constant 0 : i32
    return %c0_i32, %c0_i32_0 : i32, i32
  }
  func.func @transform_8(%arg0: i32) -> (i32, i32) {
    %c0_i32 = arith.constant 0 : i32
    %c0_i32_0 = arith.constant 0 : i32
    %c0_i32_1 = arith.constant 0 : i32
    return %c0_i32, %c0_i32_0 : i32, i32
  }
  func.func @transform_9(%arg0: i32) -> (i32, i32) {
    %c0_i32 = arith.constant 0 : i32
    %c0_i32_0 = arith.constant 0 : i32
    return %arg0, %c0_i32 : i32, i32
  }
}

</mosaic_0001>

<llo_original>
// kernel: encoder_forward.1
$region0: #{encoder_forward.1}
  #allocation0 [shape = 'u32[]', space=smem, size = 0x4, offset = 0x4, fixed_abs, tag = 'smem constant byte address 0x4 - core index']
  #allocation1 [shape = 'u32[72,128]{1,0:T(1,128)}', space=vmem, size = 0x9000, scoped, tag = 'internal scratch']
  %s0 = inlined_call_operand.vmem [shape: bf16[8,128], index: 0, kind: input, shape index: {}]
  %s1 = inlined_call_operand.hbm [shape: bf16[128,512], index: 1, kind: input, shape index: {}]
  %s2 = inlined_call_operand.hbm [shape: f32[1,512], index: 2, kind: input, shape index: {}]
  %s3 = inlined_call_operand.hbm [shape: bf16[512,512], index: 3, kind: input, shape index: {}]
  %s4 = inlined_call_operand.hbm [shape: f32[1,512], index: 4, kind: input, shape index: {}]
  %s5 = inlined_call_operand.hbm [shape: bf16[512,2048], index: 5, kind: input, shape index: {}]
  %s6 = inlined_call_operand.hbm [shape: f32[1,2048], index: 6, kind: input, shape index: {}]
  %s7 = inlined_call_operand.hbm [shape: bf16[2048,128], index: 7, kind: input, shape index: {}]
  %s8 = inlined_call_operand.hbm [shape: f32[1,128], index: 8, kind: input, shape index: {}]
  %s9 = inlined_call_operand.vmem [shape: f32[8,128], index: 9, kind: output, shape index: {}]
  %s10 = sld [smem:[#allocation0]]
  $region78: #{encoder_forward.1} parent=0
    _
  %s12 = ssub.s32 1, %s10
  %s13 = scalar_select 0, %s12, %s10
  $region1: #{encoder_forward.1} parent=0
    #allocation2 [shape = 'u8[131072]{0}', space=vmem, size = 0x20000, scoped, tag = 'input window, operand 1, single buffered']
    #allocation3 [shape = 's32[1]{0}', space=sflag, size = 0x4, scoped, tag = 'scoped memory for encoder_forward.1']
    #allocation4 [shape = 'u8[2048]{0}', space=vmem, size = 0x800, scoped, tag = 'input window, operand 2, single buffered']
    #allocation5 [shape = 's32[1]{0}', space=sflag, size = 0x4, scoped, tag = 'scoped memory for encoder_forward.1']
    #allocation6 [shape = 'u8[524288]{0}', space=vmem, size = 0x80000, scoped, tag = 'input window, operand 3, single buffered']
    #allocation7 [shape = 'u8[2048]{0}', space=vmem, size = 0x800, scoped, tag = 'input window, operand 4, single buffered']
    #allocation8 [shape = 's32[1]{0}', space=sflag, size = 0x4, scoped, tag = 'scoped memory for encoder_forward.1']
    #allocation9 [shape = 'u8[2097152]{0}', space=vmem, size = 0x200000, scoped, tag = 'input window, operand 5, single buffered']
    #allocation10 [shape = 'u8[8192]{0}', space=vmem, size = 0x2000, scoped, tag = 'input window, operand 6, single buffered']
    #allocation11 [shape = 's32[1]{0}', space=sflag, size = 0x4, scoped, tag = 'scoped memory for encoder_forward.1']
    #allocation12 [shape = 'u8[524288]{0}', space=vmem, size = 0x80000, scoped, tag = 'input window, operand 7, single buffered']
    #allocation13 [shape = 'u8[512]{0}', space=vmem, size = 0x400, scoped, tag = 'input window, operand 8, single buffered']
    #allocation14 [shape = 's32[1]{0}', space=sflag, size = 0x4, scoped, tag = 'scoped memory for encoder_forward.1']
    %14 = vsyncpa [#allocation3], 0
    %15 = vsyncpa [#allocation5], 0
    %16 = vsyncpa [#allocation8], 0
    %17 = vsyncpa [#allocation11], 0
    %18 = vsyncpa [#allocation14], 0
    // Predicated region
    $region2: #{encoder_forward.1} parent=1 // pred_check
      _
    $region3: #{encoder_forward.1} parent=1 // pred_check_branch
      %20 = sbr.rel (0) target = $region5
    $region4: #{encoder_forward.1} parent=1 // pred_region
      _
    $region5: #{encoder_forward.1} parent=1 // pred_fallthru
      _
    // Predicated region
    $region6: #{encoder_forward.1} parent=1 // pred_check
      _
    $region7: #{encoder_forward.1} parent=1 // pred_check_branch
      %22 = sbr.rel (0) target = $region9
    $region8: #{encoder_forward.1} parent=1 // pred_region
      %24 = vsyncadd [#allocation3], 0
      %s25 = sshll.u32 %s1, 4
      %s26 = int_to_ptr.hbm [resolvable:$true] %s25
      %s27 = sshll.u32 [#allocation2], 4
      %s28 = int_to_ptr.vmem [resolvable:$true] %s27
      %33 = dma.hbm_to_vmem [thread:$0]  %s26, 4096, %s28, [#allocation3], 256, 256, 16
    $region9: #{encoder_forward.1} parent=1 // pred_fallthru
      _
    // Predicated region
    $region10: #{encoder_forward.1} parent=1 // pred_check
      _
    $region11: #{encoder_forward.1} parent=1 // pred_check_branch
      %35 = sbr.rel (0) target = $region13
    $region12: #{encoder_forward.1} parent=1 // pred_region
      %37 = vsyncadd [#allocation5], 0
      %s39 = sshll.u32 %s2, 4
      %s40 = int_to_ptr.hbm [resolvable:$true] %s39
      %s41 = sshll.u32 [#allocation4], 4
      %s42 = int_to_ptr.vmem [resolvable:$true] %s41
      %44 = dma.hbm_to_vmem [thread:$0]  %s40, 64, %s42, [#allocation5]
    $region13: #{encoder_forward.1} parent=1 // pred_fallthru
      _
    // Predicated region
    $region14: #{encoder_forward.1} parent=1 // pred_check
      _
    $region15: #{encoder_forward.1} parent=1 // pred_check_branch
      %46 = sbr.rel (0) target = $region17
    $region16: #{encoder_forward.1} parent=1 // pred_region
      %48 = vsyncadd [#allocation5], 0
      %s49 = sshll.u32 %s3, 4
      %s50 = int_to_ptr.hbm [resolvable:$true] %s49
      %s51 = sshll.u32 [#allocation6], 4
      %s52 = int_to_ptr.vmem [resolvable:$true] %s51
      %57 = dma.hbm_to_vmem [thread:$0]  %s50, 16384, %s52, [#allocation5], 256, 256, 16
    $region17: #{encoder_forward.1} parent=1 // pred_fallthru
      _
    // Predicated region
    $region18: #{encoder_forward.1} parent=1 // pred_check
      _
    $region19: #{encoder_forward.1} parent=1 // pred_check_branch
      %59 = sbr.rel (0) target = $region21
    $region20: #{encoder_forward.1} parent=1 // pred_region
      %61 = vsyncadd [#allocation8], 0
      %s63 = sshll.u32 %s4, 4
      %s64 = int_to_ptr.hbm [resolvable:$true] %s63
      %s65 = sshll.u32 [#allocation7], 4
      %s66 = int_to_ptr.vmem [resolvable:$true] %s65
      %68 = dma.hbm_to_vmem [thread:$0]  %s64, 64, %s66, [#allocation8]
    $region21: #{encoder_forward.1} parent=1 // pred_fallthru
      _
    // Predicated region
    $region22: #{encoder_forward.1} parent=1 // pred_check
      _
    $region23: #{encoder_forward.1} parent=1 // pred_check_branch
      %70 = sbr.rel (0) target = $region25
    $region24: #{encoder_forward.1} parent=1 // pred_region
      %72 = vsyncadd [#allocation8], 0
      %s73 = sshll.u32 %s5, 4
      %s74 = int_to_ptr.hbm [resolvable:$true] %s73
      %s75 = sshll.u32 [#allocation9], 4
      %s76 = int_to_ptr.vmem [resolvable:$true] %s75
      %81 = dma.hbm_to_vmem [thread:$0]  %s74, 65536, %s76, [#allocation8], 1024, 1024, 64
    $region25: #{encoder_forward.1} parent=1 // pred_fallthru
      _
    // Predicated region
    $region26: #{encoder_forward.1} parent=1 // pred_check
      _
    $region27: #{encoder_forward.1} parent=1 // pred_check_branch
      %83 = sbr.rel (0) target = $region29
    $region28: #{encoder_forward.1} parent=1 // pred_region
      %85 = vsyncadd [#allocation11], 0
      %s87 = sshll.u32 %s6, 4
      %s88 = int_to_ptr.hbm [resolvable:$true] %s87
      %s89 = sshll.u32 [#allocation10], 4
      %s90 = int_to_ptr.vmem [resolvable:$true] %s89
      %92 = dma.hbm_to_vmem [thread:$0]  %s88, 256, %s90, [#allocation11]
    $region29: #{encoder_forward.1} parent=1 // pred_fallthru
      _
    // Predicated region
    $region30: #{encoder_forward.1} parent=1 // pred_check
      _
    $region31: #{encoder_forward.1} parent=1 // pred_check_branch
      %94 = sbr.rel (0) target = $region33
    $region32: #{encoder_forward.1} parent=1 // pred_region
      %96 = vsyncadd [#allocation11], 0
      %s97 = sshll.u32 %s7, 4
      %s98 = int_to_ptr.hbm [resolvable:$true] %s97
      %s99 = sshll.u32 [#allocation12], 4
      %s100 = int_to_ptr.vmem [resolvable:$true] %s99
      %105 = dma.hbm_to_vmem [thread:$0]  %s98, 16384, %s100, [#allocation11], 64, 64, 4
    $region33: #{encoder_forward.1} parent=1 // pred_fallthru
      _
    // Predicated region
    $region34: #{encoder_forward.1} parent=1 // pred_check
      _
    $region35: #{encoder_forward.1} parent=1 // pred_check_branch
      %107 = sbr.rel (0) target = $region37
    $region36: #{encoder_forward.1} parent=1 // pred_region
      %109 = vsyncadd [#allocation14], 0
      %s111 = sshll.u32 %s8, 4
      %s112 = int_to_ptr.hbm [resolvable:$true] %s111
      %s113 = sshll.u32 [#allocation13], 4
      %s114 = int_to_ptr.vmem [resolvable:$true] %s113
      %116 = dma.hbm_to_vmem [thread:$0]  %s112, 16, %s114, [#allocation14]
    $region37: #{encoder_forward.1} parent=1 // pred_fallthru
      _
    // Predicated region
    $region38: #{encoder_forward.1} parent=1 // pred_check
      _
    $region39: #{encoder_forward.1} parent=1 // pred_check_branch
      %118 = sbr.rel (0) target = $region41
    $region40: #{encoder_forward.1} parent=1 // pred_region
      %120 = dma.done [#allocation3], 4096
    $region41: #{encoder_forward.1} parent=1 // pred_fallthru
      _
    // Predicated region
    $region42: #{encoder_forward.1} parent=1 // pred_check
      _
    $region43: #{encoder_forward.1} parent=1 // pred_check_branch
      %122 = sbr.rel (0) target = $region45
    $region44: #{encoder_forward.1} parent=1 // pred_region
      %124 = dma.done [#allocation5], 64
    $region45: #{encoder_forward.1} parent=1 // pred_fallthru
      _
    // Predicated region
    $region46: #{encoder_forward.1} parent=1 // pred_check
      _
    $region47: #{encoder_forward.1} parent=1 // pred_check_branch
      %126 = sbr.rel (0) target = $region49
    $region48: #{encoder_forward.1} parent=1 // pred_region
      %128 = dma.done [#allocation5], 16384
    $region49: #{encoder_forward.1} parent=1 // pred_fallthru
      _
    // Predicated region
    $region50: #{encoder_forward.1} parent=1 // pred_check
      _
    $region51: #{encoder_forward.1} parent=1 // pred_check_branch
      %130 = sbr.rel (0) target = $region53
    $region52: #{encoder_forward.1} parent=1 // pred_region
      %132 = dma.done [#allocation8], 64
    $region53: #{encoder_forward.1} parent=1 // pred_fallthru
      _
    // Predicated region
    $region54: #{encoder_forward.1} parent=1 // pred_check
      _
    $region55: #{encoder_forward.1} parent=1 // pred_check_branch
      %134 = sbr.rel (0) target = $region57
    $region56: #{encoder_forward.1} parent=1 // pred_region
      %136 = dma.done [#allocation8], 65536
    $region57: #{encoder_forward.1} parent=1 // pred_fallthru
      _
    // Predicated region
    $region58: #{encoder_forward.1} parent=1 // pred_check
      _
    $region59: #{encoder_forward.1} parent=1 // pred_check_branch
      %138 = sbr.rel (0) target = $region61
    $region60: #{encoder_forward.1} parent=1 // pred_region
      %140 = dma.done [#allocation11], 256
    $region61: #{encoder_forward.1} parent=1 // pred_fallthru
      _
    // Predicated region
    $region62: #{encoder_forward.1} parent=1 // pred_check
      _
    $region63: #{encoder_forward.1} parent=1 // pred_check_branch
      %142 = sbr.rel (0) target = $region65
    $region64: #{encoder_forward.1} parent=1 // pred_region
      %144 = dma.done [#allocation11], 16384
    $region65: #{encoder_forward.1} parent=1 // pred_fallthru
      _
    // Predicated region
    $region66: #{encoder_forward.1} parent=1 // pred_check
      _
    $region67: #{encoder_forward.1} parent=1 // pred_check_branch
      %146 = sbr.rel (0) target = $region69
    $region68: #{encoder_forward.1} parent=1 // pred_region
      %148 = dma.done [#allocation14], 16
    $region69: #{encoder_forward.1} parent=1 // pred_fallthru
      _
    %v149 = vld [vmem:[%s0] sm:$0xf]
    %v150 = vld [vmem:[#allocation2] sm:$0xff]
    %v151 = vld [vmem:[#allocation2 + $0x8] sm:$0xff]
    %v152 = vld [vmem:[#allocation2 + $0x10] sm:$0xff]
    %v153 = vld [vmem:[#allocation2 + $0x18] sm:$0xff]
    %v154 = vld [vmem:[#allocation2 + $0x20] sm:$0xff]
    %v155 = vld [vmem:[#allocation2 + $0x28] sm:$0xff]
    %v156 = vld [vmem:[#allocation2 + $0x30] sm:$0xff]
    %v157 = vld [vmem:[#allocation2 + $0x38] sm:$0xff]
    %v158 = vld [vmem:[#allocation2 + $0x40] sm:$0xff]
    %v159 = vld [vmem:[#allocation2 + $0x48] sm:$0xff]
    %v160 = vld [vmem:[#allocation2 + $0x50] sm:$0xff]
    %v161 = vld [vmem:[#allocation2 + $0x58] sm:$0xff]
    %v162 = vld [vmem:[#allocation2 + $0x60] sm:$0xff]
    %v163 = vld [vmem:[#allocation2 + $0x68] sm:$0xff]
    %v164 = vld [vmem:[#allocation2 + $0x70] sm:$0xff]
    %v165 = vld [vmem:[#allocation2 + $0x78] sm:$0xff]
    %v166 = vld [vmem:[#allocation2 + $0x80] sm:$0xff]
    %v167 = vld [vmem:[#allocation2 + $0x88] sm:$0xff]
    %v168 = vld [vmem:[#allocation2 + $0x90] sm:$0xff]
    %v169 = vld [vmem:[#allocation2 + $0x98] sm:$0xff]
    %v170 = vld [vmem:[#allocation2 + $0xa0] sm:$0xff]
    %v171 = vld [vmem:[#allocation2 + $0xa8] sm:$0xff]
    %v172 = vld [vmem:[#allocation2 + $0xb0] sm:$0xff]
    %v173 = vld [vmem:[#allocation2 + $0xb8] sm:$0xff]
    %v174 = vld [vmem:[#allocation2 + $0xc0] sm:$0xff]
    %v175 = vld [vmem:[#allocation2 + $0xc8] sm:$0xff]
    %v176 = vld [vmem:[#allocation2 + $0xd0] sm:$0xff]
    %v177 = vld [vmem:[#allocation2 + $0xd8] sm:$0xff]
    %v178 = vld [vmem:[#allocation2 + $0xe0] sm:$0xff]
    %v179 = vld [vmem:[#allocation2 + $0xe8] sm:$0xff]
    %v180 = vld [vmem:[#allocation2 + $0xf0] sm:$0xff]
    %v181 = vld [vmem:[#allocation2 + $0xf8] sm:$0xff]
    %v182 = vld [vmem:[#allocation4] sm:$0xf]
    %v184 = vperm.slane %v182, 0
    %v185 = vperm.slane %v182, 1
    %v186 = vperm.slane %v182, 2
    %v187 = vperm.slane %v182, 3
    %v224 = vunpack.c.l.b16 %v150
    %v225 = vunpack.c.h.b16 %v150
    %v226 = vunpack.c.l.b16 %v151
    %v227 = vunpack.c.h.b16 %v151
    %v228 = vunpack.c.l.b16 %v152
    %v229 = vunpack.c.h.b16 %v152
    %v230 = vunpack.c.l.b16 %v153
    %v231 = vunpack.c.h.b16 %v153
    %v232 = vunpack.c.l.b16 %v154
    %v233 = vunpack.c.h.b16 %v154
    %v234 = vunpack.c.l.b16 %v155
    %v235 = vunpack.c.h.b16 %v155
    %v236 = vunpack.c.l.b16 %v156
    %v237 = vunpack.c.h.b16 %v156
    %v238 = vunpack.c.l.b16 %v157
    %v239 = vunpack.c.h.b16 %v157
    %v240 = vunpack.c.l.b16 %v158
    %v241 = vunpack.c.h.b16 %v158
    %v242 = vunpack.c.l.b16 %v159
    %v243 = vunpack.c.h.b16 %v159
    %v244 = vunpack.c.l.b16 %v160
    %v245 = vunpack.c.h.b16 %v160
    %v246 = vunpack.c.l.b16 %v161
    %v247 = vunpack.c.h.b16 %v161
    %v248 = vunpack.c.l.b16 %v162
    %v249 = vunpack.c.h.b16 %v162
    %v250 = vunpack.c.l.b16 %v163
    %v251 = vunpack.c.h.b16 %v163
    %v252 = vunpack.c.l.b16 %v164
    %v253 = vunpack.c.h.b16 %v164
    %v254 = vunpack.c.l.b16 %v165
    %v255 = vunpack.c.h.b16 %v165
    %v256 = vunpack.c.l.b16 %v166
    %v257 = vunpack.c.h.b16 %v166
    %v258 = vunpack.c.l.b16 %v167
    %v259 = vunpack.c.h.b16 %v167
    %v260 = vunpack.c.l.b16 %v168
    %v261 = vunpack.c.h.b16 %v168
    %v262 = vunpack.c.l.b16 %v169
    %v263 = vunpack.c.h.b16 %v169
    %v264 = vunpack.c.l.b16 %v170
    %v265 = vunpack.c.h.b16 %v170
    %v266 = vunpack.c.l.b16 %v171
    %v267 = vunpack.c.h.b16 %v171
    %v268 = vunpack.c.l.b16 %v172
    %v269 = vunpack.c.h.b16 %v172
    %v270 = vunpack.c.l.b16 %v173
    %v271 = vunpack.c.h.b16 %v173
    %v272 = vunpack.c.l.b16 %v174
    %v273 = vunpack.c.h.b16 %v174
    %v274 = vunpack.c.l.b16 %v175
    %v275 = vunpack.c.h.b16 %v175
    %v276 = vunpack.c.l.b16 %v176
    %v277 = vunpack.c.h.b16 %v176
    %v278 = vunpack.c.l.b16 %v177
    %v279 = vunpack.c.h.b16 %v177
    %v280 = vunpack.c.l.b16 %v178
    %v281 = vunpack.c.h.b16 %v178
    %v282 = vunpack.c.l.b16 %v179
    %v283 = vunpack.c.h.b16 %v179
    %v284 = vunpack.c.l.b16 %v180
    %v285 = vunpack.c.h.b16 %v180
    %v286 = vunpack.c.l.b16 %v181
    %v287 = vunpack.c.h.b16 %v181
    %v288 = vpack.c.b16 %v228, %v224
    %v289 = vpack.c.b16 %v229, %v225
    %v290 = vpack.c.b16 %v230, %v226
    %v291 = vpack.c.b16 %v231, %v227
    %v292 = vpack.c.b16 %v236, %v232
    %v293 = vpack.c.b16 %v237, %v233
    %v294 = vpack.c.b16 %v238, %v234
    %v295 = vpack.c.b16 %v239, %v235
    %v296 = vpack.c.b16 %v244, %v240
    %v297 = vpack.c.b16 %v245, %v241
    %v298 = vpack.c.b16 %v246, %v242
    %v299 = vpack.c.b16 %v247, %v243
    %v300 = vpack.c.b16 %v252, %v248
    %v301 = vpack.c.b16 %v253, %v249
    %v302 = vpack.c.b16 %v254, %v250
    %v303 = vpack.c.b16 %v255, %v251
    %v304 = vpack.c.b16 %v260, %v256
    %v305 = vpack.c.b16 %v261, %v257
    %v306 = vpack.c.b16 %v262, %v258
    %v307 = vpack.c.b16 %v263, %v259
    %v308 = vpack.c.b16 %v268, %v264
    %v309 = vpack.c.b16 %v269, %v265
    %v310 = vpack.c.b16 %v270, %v266
    %v311 = vpack.c.b16 %v271, %v267
    %v312 = vpack.c.b16 %v276, %v272
    %v313 = vpack.c.b16 %v277, %v273
    %v314 = vpack.c.b16 %v278, %v274
    %v315 = vpack.c.b16 %v279, %v275
    %v316 = vpack.c.b16 %v284, %v280
    %v317 = vpack.c.b16 %v285, %v281
    %v318 = vpack.c.b16 %v286, %v282
    %v319 = vpack.c.b16 %v287, %v283
    %352 = vmatpush.bf16.msra.mxu0 %v316
    %353 = vmatpush.bf16.msra.mxu0 %v312
    %354 = vmatpush.bf16.msra.mxu0 %v308
    %355 = vmatpush.bf16.msra.mxu0 %v304
    %356 = vmatpush.bf16.msra.mxu0 %v300
    %357 = vmatpush.bf16.msra.mxu0 %v296
    %358 = vmatpush.bf16.msra.mxu0 %v292
    %359 = vmatpush.bf16.msra.mxu0 %v288
    %360 = vmatmul.bf16.gmra.mxu0 %v149
    %v361 = vpop.f32.mrf.mxu0
    %v362 = vadd.f32 %v184, %v361
    %v363 = vpop.f32.mrf.mxu0
    %364 = vdwg.mxu0
    %365 = vmatpush.bf16.msra.mxu0 %v317
    %366 = vmatpush.bf16.msra.mxu0 %v313
    %367 = vmatpush.bf16.msra.mxu0 %v309
    %368 = vmatpush.bf16.msra.mxu0 %v305
    %369 = vmatpush.bf16.msra.mxu0 %v301
    %370 = vmatpush.bf16.msra.mxu0 %v297
    %371 = vmatpush.bf16.msra.mxu0 %v293
    %372 = vmatpush.bf16.msra.mxu0 %v289
    %373 = vmatmul.bf16.gmra.mxu0 %v149
    %v374 = vpop.f32.mrf.mxu0
    %v375 = vadd.f32 %v185, %v374
    %v376 = vpop.f32.mrf.mxu0
    %377 = vdwg.mxu0
    %378 = vmatpush.bf16.msra.mxu0 %v318
    %379 = vmatpush.bf16.msra.mxu0 %v314
    %380 = vmatpush.bf16.msra.mxu0 %v310
    %381 = vmatpush.bf16.msra.mxu0 %v306
    %382 = vmatpush.bf16.msra.mxu0 %v302
    %383 = vmatpush.bf16.msra.mxu0 %v298
    %384 = vmatpush.bf16.msra.mxu0 %v294
    %385 = vmatpush.bf16.msra.mxu0 %v290
    %386 = vmatmul.bf16.gmra.mxu0 %v149
    %v387 = vpop.f32.mrf.mxu0
    %v388 = vadd.f32 %v186, %v387
    %v389 = vpop.f32.mrf.mxu0
    %390 = vdwg.mxu0
    %391 = vmatpush.bf16.msra.mxu0 %v319
    %392 = vmatpush.bf16.msra.mxu0 %v315
    %393 = vmatpush.bf16.msra.mxu0 %v311
    %394 = vmatpush.bf16.msra.mxu0 %v307
    %395 = vmatpush.bf16.msra.mxu0 %v303
    %396 = vmatpush.bf16.msra.mxu0 %v299
    %397 = vmatpush.bf16.msra.mxu0 %v295
    %398 = vmatpush.bf16.msra.mxu0 %v291
    %399 = vmatmul.bf16.gmra.mxu0 %v149
    %v400 = vpop.f32.mrf.mxu0
    %v401 = vadd.f32 %v187, %v400
    %v402 = vpop.f32.mrf.mxu0
    %403 = vdwg.mxu0
    %v404 = vmax.f32 %v362, 0.0
    %v405 = vmax.f32 %v375, 0.0
    %v406 = vmax.f32 %v388, 0.0
    %v407 = vmax.f32 %v401, 0.0
    %v408 = vpack.c.bf16 %v404, %v404
    %v409 = vpack.c.bf16 %v405, %v405
    %v410 = vpack.c.bf16 %v406, %v406
    %v411 = vpack.c.bf16 %v407, %v407
    %v412 = vld [vmem:[#allocation6] sm:$0xff]
    %v413 = vld [vmem:[#allocation6 + $0x8] sm:$0xff]
    %v414 = vld [vmem:[#allocation6 + $0x10] sm:$0xff]
    %v415 = vld [vmem:[#allocation6 + $0x18] sm:$0xff]
    %v416 = vld [vmem:[#allocation6 + $0x20] sm:$0xff]
    %v417 = vld [vmem:[#allocation6 + $0x28] sm:$0xff]
    %v418 = vld [vmem:[#allocation6 + $0x30] sm:$0xff]
    %v419 = vld [vmem:[#allocation6 + $0x38] sm:$0xff]
    %v420 = vld [vmem:[#allocation6 + $0x40] sm:$0xff]
    %v421 = vld [vmem:[#allocation6 + $0x48] sm:$0xff]
    %v422 = vld [vmem:[#allocation6 + $0x50] sm:$0xff]
    %v423 = vld [vmem:[#allocation6 + $0x58] sm:$0xff]
    %v424 = vld [vmem:[#allocation6 + $0x60] sm:$0xff]
    %v425 = vld [vmem:[#allocation6 + $0x68] sm:$0xff]
    %v426 = vld [vmem:[#allocation6 + $0x70] sm:$0xff]
    %v427 = vld [vmem:[#allocation6 + $0x78] sm:$0xff]
    %v428 = vld [vmem:[#allocation6 + $0x80] sm:$0xff]
    %v429 = vld [vmem:[#allocation6 + $0x88] sm:$0xff]
    %v430 = vld [vmem:[#allocation6 + $0x90] sm:$0xff]
    %v431 = vld [vmem:[#allocation6 + $0x98] sm:$0xff]
    %v432 = vld [vmem:[#allocation6 + $0xa0] sm:$0xff]
    %v433 = vld [vmem:[#allocation6 + $0xa8] sm:$0xff]
    %v434 = vld [vmem:[#allocation6 + $0xb0] sm:$0xff]
    %v435 = vld [vmem:[#allocation6 + $0xb8] sm:$0xff]
    %v436 = vld [vmem:[#allocation6 + $0xc0] sm:$0xff]
    %v437 = vld [vmem:[#allocation6 + $0xc8] sm:$0xff]
    %v438 = vld [vmem:[#allocation6 + $0xd0] sm:$0xff]
    %v439 = vld [vmem:[#allocation6 + $0xd8] sm:$0xff]
    %v440 = vld [vmem:[#allocation6 + $0xe0] sm:$0xff]
    %v441 = vld [vmem:[#allocation6 + $0xe8] sm:$0xff]
    %v442 = vld [vmem:[#allocation6 + $0xf0] sm:$0xff]
    %v443 = vld [vmem:[#allocation6 + $0xf8] sm:$0xff]
    %v444 = vld [vmem:[#allocation6 + $0x100] sm:$0xff]
    %v445 = vld [vmem:[#allocation6 + $0x108] sm:$0xff]
    %v446 = vld [vmem:[#allocation6 + $0x110] sm:$0xff]
    %v447 = vld [vmem:[#allocation6 + $0x118] sm:$0xff]
    %v448 = vld [vmem:[#allocation6 + $0x120] sm:$0xff]
    %v449 = vld [vmem:[#allocation6 + $0x128] sm:$0xff]
    %v450 = vld [vmem:[#allocation6 + $0x130] sm:$0xff]
    %v451 = vld [vmem:[#allocation6 + $0x138] sm:$0xff]
    %v452 = vld [vmem:[#allocation6 + $0x140] sm:$0xff]
    %v453 = vld [vmem:[#allocation6 + $0x148] sm:$0xff]
    %v454 = vld [vmem:[#allocation6 + $0x150] sm:$0xff]
    %v455 = vld [vmem:[#allocation6 + $0x158] sm:$0xff]
    %v456 = vld [vmem:[#allocation6 + $0x160] sm:$0xff]
    %v457 = vld [vmem:[#allocation6 + $0x168] sm:$0xff]
    %v458 = vld [vmem:[#allocation6 + $0x170] sm:$0xff]
    %v459 = vld [vmem:[#allocation6 + $0x178] sm:$0xff]
    %v460 = vld [vmem:[#allocation6 + $0x180] sm:$0xff]
    %v461 = vld [vmem:[#allocation6 + $0x188] sm:$0xff]
    %v462 = vld [vmem:[#allocation6 + $0x190] sm:$0xff]
    %v463 = vld [vmem:[#allocation6 + $0x198] sm:$0xff]
    %v464 = vld [vmem:[#allocation6 + $0x1a0] sm:$0xff]
    %v465 = vld [vmem:[#allocation6 + $0x1a8] sm:$0xff]
    %v466 = vld [vmem:[#allocation6 + $0x1b0] sm:$0xff]
    %v467 = vld [vmem:[#allocation6 + $0x1b8] sm:$0xff]
    %v468 = vld [vmem:[#allocation6 + $0x1c0] sm:$0xff]
    %v469 = vld [vmem:[#allocation6 + $0x1c8] sm:$0xff]
    %v470 = vld [vmem:[#allocation6 + $0x1d0] sm:$0xff]
    %v471 = vld [vmem:[#allocation6 + $0x1d8] sm:$0xff]
    %v472 = vld [vmem:[#allocation6 + $0x1e0] sm:$0xff]
    %v473 = vld [vmem:[#allocation6 + $0x1e8] sm:$0xff]
    %v474 = vld [vmem:[#allocation6 + $0x1f0] sm:$0xff]
    %v475 = vld [vmem:[#allocation6 + $0x1f8] sm:$0xff]
    %v476 = vld [vmem:[#allocation6 + $0x200] sm:$0xff]
    %v477 = vld [vmem:[#allocation6 + $0x208] sm:$0xff]
    %v478 = vld [vmem:[#allocation6 + $0x210] sm:$0xff]
    %v479 = vld [vmem:[#allocation6 + $0x218] sm:$0xff]
    %v480 = vld [vmem:[#allocation6 + $0x220] sm:$0xff]
    %v481 = vld [vmem:[#allocation6 + $0x228] sm:$0xff]
    %v482 = vld [vmem:[#allocation6 + $0x230] sm:$0xff]
    %v483 = vld [vmem:[#allocation6 + $0x238] sm:$0xff]
    %v484 = vld [vmem:[#allocation6 + $0x240] sm:$0xff]
    %v485 = vld [vmem:[#allocation6 + $0x248] sm:$0xff]
    %v486 = vld [vmem:[#allocation6 + $0x250] sm:$0xff]
    %v487 = vld [vmem:[#allocation6 + $0x258] sm:$0xff]
    %v488 = vld [vmem:[#allocation6 + $0x260] sm:$0xff]
    %v489 = vld [vmem:[#allocation6 + $0x268] sm:$0xff]
    %v490 = vld [vmem:[#allocation6 + $0x270] sm:$0xff]
    %v491 = vld [vmem:[#allocation6 + $0x278] sm:$0xff]
    %v492 = vld [vmem:[#allocation6 + $0x280] sm:$0xff]
    %v493 = vld [vmem:[#allocation6 + $0x288] sm:$0xff]
    %v494 = vld [vmem:[#allocation6 + $0x290] sm:$0xff]
    %v495 = vld [vmem:[#allocation6 + $0x298] sm:$0xff]
    %v496 = vld [vmem:[#allocation6 + $0x2a0] sm:$0xff]
    %v497 = vld [vmem:[#allocation6 + $0x2a8] sm:$0xff]
    %v498 = vld [vmem:[#allocation6 + $0x2b0] sm:$0xff]
    %v499 = vld [vmem:[#allocation6 + $0x2b8] sm:$0xff]
    %v500 = vld [vmem:[#allocation6 + $0x2c0] sm:$0xff]
    %v501 = vld [vmem:[#allocation6 + $0x2c8] sm:$0xff]
    %v502 = vld [vmem:[#allocation6 + $0x2d0] sm:$0xff]
    %v503 = vld [vmem:[#allocation6 + $0x2d8] sm:$0xff]
    %v504 = vld [vmem:[#allocation6 + $0x2e0] sm:$0xff]
    %v505 = vld [vmem:[#allocation6 + $0x2e8] sm:$0xff]
    %v506 = vld [vmem:[#allocation6 + $0x2f0] sm:$0xff]
    %v507 = vld [vmem:[#allocation6 + $0x2f8] sm:$0xff]
    %v508 = vld [vmem:[#allocation6 + $0x300] sm:$0xff]
    %v509 = vld [vmem:[#allocation6 + $0x308] sm:$0xff]
    %v510 = vld [vmem:[#allocation6 + $0x310] sm:$0xff]
    %v511 = vld [vmem:[#allocation6 + $0x318] sm:$0xff]
    %v512 = vld [vmem:[#allocation6 + $0x320] sm:$0xff]
    %v513 = vld [vmem:[#allocation6 + $0x328] sm:$0xff]
    %v514 = vld [vmem:[#allocation6 + $0x330] sm:$0xff]
    %v515 = vld [vmem:[#allocation6 + $0x338] sm:$0xff]
    %v516 = vld [vmem:[#allocation6 + $0x340] sm:$0xff]
    %v517 = vld [vmem:[#allocation6 + $0x348] sm:$0xff]
    %v518 = vld [vmem:[#allocation6 + $0x350] sm:$0xff]
    %v519 = vld [vmem:[#allocation6 + $0x358] sm:$0xff]
    %v520 = vld [vmem:[#allocation6 + $0x360] sm:$0xff]
    %v521 = vld [vmem:[#allocation6 + $0x368] sm:$0xff]
    %v522 = vld [vmem:[#allocation6 + $0x370] sm:$0xff]
    %v523 = vld [vmem:[#allocation6 + $0x378] sm:$0xff]
    %v524 = vld [vmem:[#allocation6 + $0x380] sm:$0xff]
    %v525 = vld [vmem:[#allocation6 + $0x388] sm:$0xff]
    %v526 = vld [vmem:[#allocation6 + $0x390] sm:$0xff]
    %v527 = vld [vmem:[#allocation6 + $0x398] sm:$0xff]
    %v528 = vld [vmem:[#allocation6 + $0x3a0] sm:$0xff]
    %v529 = vld [vmem:[#allocation6 + $0x3a8] sm:$0xff]
    %v530 = vld [vmem:[#allocation6 + $0x3b0] sm:$0xff]
    %v531 = vld [vmem:[#allocation6 + $0x3b8] sm:$0xff]
    %v532 = vld [vmem:[#allocation6 + $0x3c0] sm:$0xff]
    %v533 = vld [vmem:[#allocation6 + $0x3c8] sm:$0xff]
    %v534 = vld [vmem:[#allocation6 + $0x3d0] sm:$0xff]
    %v535 = vld [vmem:[#allocation6 + $0x3d8] sm:$0xff]
    %v536 = vld [vmem:[#allocation6 + $0x3e0] sm:$0xff]
    %v537 = vld [vmem:[#allocation6 + $0x3e8] sm:$0xff]
    %v538 = vld [vmem:[#allocation6 + $0x3f0] sm:$0xff]
    %v539 = vld [vmem:[#allocation6 + $0x3f8] sm:$0xff]
    %v540 = vld [vmem:[#allocation7] sm:$0xf]
    %v542 = vperm.slane %v540, 0
    %v543 = vperm.slane %v540, 1
    %v544 = vperm.slane %v540, 2
    %v545 = vperm.slane %v540, 3
    %v678 = vunpack.c.l.b16 %v412
    %v679 = vunpack.c.h.b16 %v412
    %v680 = vunpack.c.l.b16 %v413
    %v681 = vunpack.c.h.b16 %v413
    %v682 = vunpack.c.l.b16 %v414
    %v683 = vunpack.c.h.b16 %v414
    %v684 = vunpack.c.l.b16 %v415
    %v685 = vunpack.c.h.b16 %v415
    %v686 = vunpack.c.l.b16 %v416
    %v687 = vunpack.c.h.b16 %v416
    %v688 = vunpack.c.l.b16 %v417
    %v689 = vunpack.c.h.b16 %v417
    %v690 = vunpack.c.l.b16 %v418
    %v691 = vunpack.c.h.b16 %v418
    %v692 = vunpack.c.l.b16 %v419
    %v693 = vunpack.c.h.b16 %v419
    %v694 = vunpack.c.l.b16 %v420
    %v695 = vunpack.c.h.b16 %v420
    %v696 = vunpack.c.l.b16 %v421
    %v697 = vunpack.c.h.b16 %v421
    %v698 = vunpack.c.l.b16 %v422
    %v699 = vunpack.c.h.b16 %v422
    %v700 = vunpack.c.l.b16 %v423
    %v701 = vunpack.c.h.b16 %v423
    %v702 = vunpack.c.l.b16 %v424
    %v703 = vunpack.c.h.b16 %v424
    %v704 = vunpack.c.l.b16 %v425
    %v705 = vunpack.c.h.b16 %v425
    %v706 = vunpack.c.l.b16 %v426
    %v707 = vunpack.c.h.b16 %v426
    %v708 = vunpack.c.l.b16 %v427
    %v709 = vunpack.c.h.b16 %v427
    %v710 = vunpack.c.l.b16 %v428
    %v711 = vunpack.c.h.b16 %v428
    %v712 = vunpack.c.l.b16 %v429
    %v713 = vunpack.c.h.b16 %v429
    %v714 = vunpack.c.l.b16 %v430
    %v715 = vunpack.c.h.b16 %v430
    %v716 = vunpack.c.l.b16 %v431
    %v717 = vunpack.c.h.b16 %v431
    %v718 = vunpack.c.l.b16 %v432
    %v719 = vunpack.c.h.b16 %v432
    %v720 = vunpack.c.l.b16 %v433
    %v721 = vunpack.c.h.b16 %v433
    %v722 = vunpack.c.l.b16 %v434
    %v723 = vunpack.c.h.b16 %v434
    %v724 = vunpack.c.l.b16 %v435
    %v725 = vunpack.c.h.b16 %v435
    %v726 = vunpack.c.l.b16 %v436
    %v727 = vunpack.c.h.b16 %v436
    %v728 = vunpack.c.l.b16 %v437
    %v729 = vunpack.c.h.b16 %v437
    %v730 = vunpack.c.l.b16 %v438
    %v731 = vunpack.c.h.b16 %v438
    %v732 = vunpack.c.l.b16 %v439
    %v733 = vunpack.c.h.b16 %v439
    %v734 = vunpack.c.l.b16 %v440
    %v735 = vunpack.c.h.b16 %v440
    %v736 = vunpack.c.l.b16 %v441
    %v737 = vunpack.c.h.b16 %v441
    %v738 = vunpack.c.l.b16 %v442
    %v739 = vunpack.c.h.b16 %v442
    %v740 = vunpack.c.l.b16 %v443
    %v741 = vunpack.c.h.b16 %v443
    %v742 = vunpack.c.l.b16 %v444
    %v743 = vunpack.c.h.b16 %v444
    %v744 = vunpack.c.l.b16 %v445
    %v745 = vunpack.c.h.b16 %v445
    %v746 = vunpack.c.l.b16 %v446
    %v747 = vunpack.c.h.b16 %v446
    %v748 = vunpack.c.l.b16 %v447
    %v749 = vunpack.c.h.b16 %v447
    %v750 = vunpack.c.l.b16 %v448
    %v751 = vunpack.c.h.b16 %v448
    %v752 = vunpack.c.l.b16 %v449
    %v753 = vunpack.c.h.b16 %v449
    %v754 = vunpack.c.l.b16 %v450
    %v755 = vunpack.c.h.b16 %v450
    %v756 = vunpack.c.l.b16 %v451
    %v757 = vunpack.c.h.b16 %v451
    %v758 = vunpack.c.l.b16 %v452
    %v759 = vunpack.c.h.b16 %v452
    %v760 = vunpack.c.l.b16 %v453
    %v761 = vunpack.c.h.b16 %v453
    %v762 = vunpack.c.l.b16 %v454
    %v763 = vunpack.c.h.b16 %v454
    %v764 = vunpack.c.l.b16 %v455
    %v765 = vunpack.c.h.b16 %v455
    %v766 = vunpack.c.l.b16 %v456
    %v767 = vunpack.c.h.b16 %v456
    %v768 = vunpack.c.l.b16 %v457
    %v769 = vunpack.c.h.b16 %v457
    %v770 = vunpack.c.l.b16 %v458
    %v771 = vunpack.c.h.b16 %v458
    %v772 = vunpack.c.l.b16 %v459
    %v773 = vunpack.c.h.b16 %v459
    %v774 = vunpack.c.l.b16 %v460
    %v775 = vunpack.c.h.b16 %v460
    %v776 = vunpack.c.l.b16 %v461
    %v777 = vunpack.c.h.b16 %v461
    %v778 = vunpack.c.l.b16 %v462
    %v779 = vunpack.c.h.b16 %v462
    %v780 = vunpack.c.l.b16 %v463
    %v781 = vunpack.c.h.b16 %v463
    %v782 = vunpack.c.l.b16 %v464
    %v783 = vunpack.c.h.b16 %v464
    %v784 = vunpack.c.l.b16 %v465
    %v785 = vunpack.c.h.b16 %v465
    %v786 = vunpack.c.l.b16 %v466
    %v787 = vunpack.c.h.b16 %v466
    %v788 = vunpack.c.l.b16 %v467
    %v789 = vunpack.c.h.b16 %v467
    %v790 = vunpack.c.l.b16 %v468
    %v791 = vunpack.c.h.b16 %v468
    %v792 = vunpack.c.l.b16 %v469
    %v793 = vunpack.c.h.b16 %v469
    %v794 = vunpack.c.l.b16 %v470
    %v795 = vunpack.c.h.b16 %v470
    %v796 = vunpack.c.l.b16 %v471
    %v797 = vunpack.c.h.b16 %v471
    %v798 = vunpack.c.l.b16 %v472
    %v799 = vunpack.c.h.b16 %v472
    %v800 = vunpack.c.l.b16 %v473
    %v801 = vunpack.c.h.b16 %v473
    %v802 = vunpack.c.l.b16 %v474
    %v803 = vunpack.c.h.b16 %v474
    %v804 = vunpack.c.l.b16 %v475
    %v805 = vunpack.c.h.b16 %v475
    %v806 = vunpack.c.l.b16 %v476
    %v807 = vunpack.c.h.b16 %v476
    %v808 = vunpack.c.l.b16 %v477
    %v809 = vunpack.c.h.b16 %v477
    %v810 = vunpack.c.l.b16 %v478
    %v811 = vunpack.c.h.b16 %v478
    %v812 = vunpack.c.l.b16 %v479
    %v813 = vunpack.c.h.b16 %v479
    %v814 = vunpack.c.l.b16 %v480
    %v815 = vunpack.c.h.b16 %v480
    %v816 = vunpack.c.l.b16 %v481
    %v817 = vunpack.c.h.b16 %v481
    %v818 = vunpack.c.l.b16 %v482
    %v819 = vunpack.c.h.b16 %v482
    %v820 = vunpack.c.l.b16 %v483
    %v821 = vunpack.c.h.b16 %v483
    %v822 = vunpack.c.l.b16 %v484
    %v823 = vunpack.c.h.b16 %v484
    %v824 = vunpack.c.l.b16 %v485
    %v825 = vunpack.c.h.b16 %v485
    %v826 = vunpack.c.l.b16 %v486
    %v827 = vunpack.c.h.b16 %v486
    %v828 = vunpack.c.l.b16 %v487
    %v829 = vunpack.c.h.b16 %v487
    %v830 = vunpack.c.l.b16 %v488
    %v831 = vunpack.c.h.b16 %v488
    %v832 = vunpack.c.l.b16 %v489
    %v833 = vunpack.c.h.b16 %v489
    %v834 = vunpack.c.l.b16 %v490
    %v835 = vunpack.c.h.b16 %v490
    %v836 = vunpack.c.l.b16 %v491
    %v837 = vunpack.c.h.b16 %v491
    %v838 = vunpack.c.l.b16 %v492
    %v839 = vunpack.c.h.b16 %v492
    %v840 = vunpack.c.l.b16 %v493
    %v841 = vunpack.c.h.b16 %v493
    %v842 = vunpack.c.l.b16 %v494
    %v843 = vunpack.c.h.b16 %v494
    %v844 = vunpack.c.l.b16 %v495
    %v845 = vunpack.c.h.b16 %v495
    %v846 = vunpack.c.l.b16 %v496
    %v847 = vunpack.c.h.b16 %v496
    %v848 = vunpack.c.l.b16 %v497
    %v849 = vunpack.c.h.b16 %v497
    %v850 = vunpack.c.l.b16 %v498
    %v851 = vunpack.c.h.b16 %v498
    %v852 = vunpack.c.l.b16 %v499
    %v853 = vunpack.c.h.b16 %v499
    %v854 = vunpack.c.l.b16 %v500
    %v855 = vunpack.c.h.b16 %v500
    %v856 = vunpack.c.l.b16 %v501
    %v857 = vunpack.c.h.b16 %v501
    %v858 = vunpack.c.l.b16 %v502
    %v859 = vunpack.c.h.b16 %v502
    %v860 = vunpack.c.l.b16 %v503
    %v861 = vunpack.c.h.b16 %v503
    %v862 = vunpack.c.l.b16 %v504
    %v863 = vunpack.c.h.b16 %v504
    %v864 = vunpack.c.l.b16 %v505
    %v865 = vunpack.c.h.b16 %v505
    %v866 = vunpack.c.l.b16 %v506
    %v867 = vunpack.c.h.b16 %v506
    %v868 = vunpack.c.l.b16 %v507
    %v869 = vunpack.c.h.b16 %v507
    %v870 = vunpack.c.l.b16 %v508
    %v871 = vunpack.c.h.b16 %v508
    %v872 = vunpack.c.l.b16 %v509
    %v873 = vunpack.c.h.b16 %v509
    %v874 = vunpack.c.l.b16 %v510
    %v875 = vunpack.c.h.b16 %v510
    %v876 = vunpack.c.l.b16 %v511
    %v877 = vunpack.c.h.b16 %v511
    %v878 = vunpack.c.l.b16 %v512
    %v879 = vunpack.c.h.b16 %v512
    %v880 = vunpack.c.l.b16 %v513
    %v881 = vunpack.c.h.b16 %v513
    %v882 = vunpack.c.l.b16 %v514
    %v883 = vunpack.c.h.b16 %v514
    %v884 = vunpack.c.l.b16 %v515
    %v885 = vunpack.c.h.b16 %v515
    %v886 = vunpack.c.l.b16 %v516
    %v887 = vunpack.c.h.b16 %v516
    %v888 = vunpack.c.l.b16 %v517
    %v889 = vunpack.c.h.b16 %v517
    %v890 = vunpack.c.l.b16 %v518
    %v891 = vunpack.c.h.b16 %v518
    %v892 = vunpack.c.l.b16 %v519
    %v893 = vunpack.c.h.b16 %v519
    %v894 = vunpack.c.l.b16 %v520
    %v895 = vunpack.c.h.b16 %v520
    %v896 = vunpack.c.l.b16 %v521
    %v897 = vunpack.c.h.b16 %v521
    %v898 = vunpack.c.l.b16 %v522
    %v899 = vunpack.c.h.b16 %v522
    %v900 = vunpack.c.l.b16 %v523
    %v901 = vunpack.c.h.b16 %v523
    %v902 = vunpack.c.l.b16 %v524
    %v903 = vunpack.c.h.b16 %v524
    %v904 = vunpack.c.l.b16 %v525
    %v905 = vunpack.c.h.b16 %v525
    %v906 = vunpack.c.l.b16 %v526
    %v907 = vunpack.c.h.b16 %v526
    %v908 = vunpack.c.l.b16 %v527
    %v909 = vunpack.c.h.b16 %v527
    %v910 = vunpack.c.l.b16 %v528
    %v911 = vunpack.c.h.b16 %v528
    %v912 = vunpack.c.l.b16 %v529
    %v913 = vunpack.c.h.b16 %v529
    %v914 = vunpack.c.l.b16 %v530
    %v915 = vunpack.c.h.b16 %v530
    %v916 = vunpack.c.l.b16 %v531
    %v917 = vunpack.c.h.b16 %v531
    %v918 = vunpack.c.l.b16 %v532
    %v919 = vunpack.c.h.b16 %v532
    %v920 = vunpack.c.l.b16 %v533
    %v921 = vunpack.c.h.b16 %v533
    %v922 = vunpack.c.l.b16 %v534
    %v923 = vunpack.c.h.b16 %v534
    %v924 = vunpack.c.l.b16 %v535
    %v925 = vunpack.c.h.b16 %v535
    %v926 = vunpack.c.l.b16 %v536
    %v927 = vunpack.c.h.b16 %v536
    %v928 = vunpack.c.l.b16 %v537
    %v929 = vunpack.c.h.b16 %v537
    %v930 = vunpack.c.l.b16 %v538
    %v931 = vunpack.c.h.b16 %v538
    %v932 = vunpack.c.l.b16 %v539
    %v933 = vunpack.c.h.b16 %v539
    %v934 = vpack.c.b16 %v682, %v678
    %v935 = vpack.c.b16 %v683, %v679
    %v936 = vpack.c.b16 %v684, %v680
    %v937 = vpack.c.b16 %v685, %v681
    %v938 = vpack.c.b16 %v690, %v686
    %v939 = vpack.c.b16 %v691, %v687
    %v940 = vpack.c.b16 %v692, %v688
    %v941 = vpack.c.b16 %v693, %v689
    %v942 = vpack.c.b16 %v698, %v694
    %v943 = vpack.c.b16 %v699, %v695
    %v944 = vpack.c.b16 %v700, %v696
    %v945 = vpack.c.b16 %v701, %v697
    %v946 = vpack.c.b16 %v706, %v702
    %v947 = vpack.c.b16 %v707, %v703
    %v948 = vpack.c.b16 %v708, %v704
    %v949 = vpack.c.b16 %v709, %v705
    %v950 = vpack.c.b16 %v714, %v710
    %v951 = vpack.c.b16 %v715, %v711
    %v952 = vpack.c.b16 %v716, %v712
    %v953 = vpack.c.b16 %v717, %v713
    %v954 = vpack.c.b16 %v722, %v718
    %v955 = vpack.c.b16 %v723, %v719
    %v956 = vpack.c.b16 %v724, %v720
    %v957 = vpack.c.b16 %v725, %v721
    %v958 = vpack.c.b16 %v730, %v726
    %v959 = vpack.c.b16 %v731, %v727
    %v960 = vpack.c.b16 %v732, %v728
    %v961 = vpack.c.b16 %v733, %v729
    %v962 = vpack.c.b16 %v738, %v734
    %v963 = vpack.c.b16 %v739, %v735
    %v964 = vpack.c.b16 %v740, %v736
    %v965 = vpack.c.b16 %v741, %v737
    %v966 = vpack.c.b16 %v746, %v742
    %v967 = vpack.c.b16 %v747, %v743
    %v968 = vpack.c.b16 %v748, %v744
    %v969 = vpack.c.b16 %v749, %v745
    %v970 = vpack.c.b16 %v754, %v750
    %v971 = vpack.c.b16 %v755, %v751
    %v972 = vpack.c.b16 %v756, %v752
    %v973 = vpack.c.b16 %v757, %v753
    %v974 = vpack.c.b16 %v762, %v758
    %v975 = vpack.c.b16 %v763, %v759
    %v976 = vpack.c.b16 %v764, %v760
    %v977 = vpack.c.b16 %v765, %v761
    %v978 = vpack.c.b16 %v770, %v766
    %v979 = vpack.c.b16 %v771, %v767
    %v980 = vpack.c.b16 %v772, %v768
    %v981 = vpack.c.b16 %v773, %v769
    %v982 = vpack.c.b16 %v778, %v774
    %v983 = vpack.c.b16 %v779, %v775
    %v984 = vpack.c.b16 %v780, %v776
    %v985 = vpack.c.b16 %v781, %v777
    %v986 = vpack.c.b16 %v786, %v782
    %v987 = vpack.c.b16 %v787, %v783
    %v988 = vpack.c.b16 %v788, %v784
    %v989 = vpack.c.b16 %v789, %v785
    %v990 = vpack.c.b16 %v794, %v790
    %v991 = vpack.c.b16 %v795, %v791
    %v992 = vpack.c.b16 %v796, %v792
    %v993 = vpack.c.b16 %v797, %v793
    %v994 = vpack.c.b16 %v802, %v798
    %v995 = vpack.c.b16 %v803, %v799
    %v996 = vpack.c.b16 %v804, %v800
    %v997 = vpack.c.b16 %v805, %v801
    %v998 = vpack.c.b16 %v810, %v806
    %v999 = vpack.c.b16 %v811, %v807
    %v1000 = vpack.c.b16 %v812, %v808
    %v1001 = vpack.c.b16 %v813, %v809
    %v1002 = vpack.c.b16 %v818, %v814
    %v1003 = vpack.c.b16 %v819, %v815
    %v1004 = vpack.c.b16 %v820, %v816
    %v1005 = vpack.c.b16 %v821, %v817
    %v1006 = vpack.c.b16 %v826, %v822
    %v1007 = vpack.c.b16 %v827, %v823
    %v1008 = vpack.c.b16 %v828, %v824
    %v1009 = vpack.c.b16 %v829, %v825
    %v1010 = vpack.c.b16 %v834, %v830
    %v1011 = vpack.c.b16 %v835, %v831
    %v1012 = vpack.c.b16 %v836, %v832
    %v1013 = vpack.c.b16 %v837, %v833
    %v1014 = vpack.c.b16 %v842, %v838
    %v1015 = vpack.c.b16 %v843, %v839
    %v1016 = vpack.c.b16 %v844, %v840
    %v1017 = vpack.c.b16 %v845, %v841
    %v1018 = vpack.c.b16 %v850, %v846
    %v1019 = vpack.c.b16 %v851, %v847
    %v1020 = vpack.c.b16 %v852, %v848
    %v1021 = vpack.c.b16 %v853, %v849
    %v1022 = vpack.c.b16 %v858, %v854
    %v1023 = vpack.c.b16 %v859, %v855
    %v1024 = vpack.c.b16 %v860, %v856
    %v1025 = vpack.c.b16 %v861, %v857
    %v1026 = vpack.c.b16 %v866, %v862
    %v1027 = vpack.c.b16 %v867, %v863
    %v1028 = vpack.c.b16 %v868, %v864
    %v1029 = vpack.c.b16 %v869, %v865
    %v1030 = vpack.c.b16 %v874, %v870
    %v1031 = vpack.c.b16 %v875, %v871
    %v1032 = vpack.c.b16 %v876, %v872
    %v1033 = vpack.c.b16 %v877, %v873
    %v1034 = vpack.c.b16 %v882, %v878
    %v1035 = vpack.c.b16 %v883, %v879
    %v1036 = vpack.c.b16 %v884, %v880
    %v1037 = vpack.c.b16 %v885, %v881
    %v1038 = vpack.c.b16 %v890, %v886
    %v1039 = vpack.c.b16 %v891, %v887
    %v1040 = vpack.c.b16 %v892, %v888
    %v1041 = vpack.c.b16 %v893, %v889
    %v1042 = vpack.c.b16 %v898, %v894
    %v1043 = vpack.c.b16 %v899, %v895
    %v1044 = vpack.c.b16 %v900, %v896
    %v1045 = vpack.c.b16 %v901, %v897
    %v1046 = vpack.c.b16 %v906, %v902
    %v1047 = vpack.c.b16 %v907, %v903
    %v1048 = vpack.c.b16 %v908, %v904
    %v1049 = vpack.c.b16 %v909, %v905
    %v1050 = vpack.c.b16 %v914, %v910
    %v1051 = vpack.c.b16 %v915, %v911
    %v1052 = vpack.c.b16 %v916, %v912
    %v1053 = vpack.c.b16 %v917, %v913
    %v1054 = vpack.c.b16 %v922, %v918
    %v1055 = vpack.c.b16 %v923, %v919
    %v1056 = vpack.c.b16 %v924, %v920
    %v1057 = vpack.c.b16 %v925, %v921
    %v1058 = vpack.c.b16 %v930, %v926
    %v1059 = vpack.c.b16 %v931, %v927
    %v1060 = vpack.c.b16 %v932, %v928
    %v1061 = vpack.c.b16 %v933, %v929
    %1190 = vmatpush.bf16.msra.mxu0 %v962
    %1191 = vmatpush.bf16.msra.mxu0 %v958
    %1192 = vmatpush.bf16.msra.mxu0 %v954
    %1193 = vmatpush.bf16.msra.mxu0 %v950
    %1194 = vmatpush.bf16.msra.mxu0 %v946
    %1195 = vmatpush.bf16.msra.mxu0 %v942
    %1196 = vmatpush.bf16.msra.mxu0 %v938
    %1197 = vmatpush.bf16.msra.mxu0 %v934
    %1198 = vmatmul.bf16.gmra.mxu0 %v408
    %v1199 = vpop.f32.mrf.mxu0
    %v1200 = vadd.f32 %v542, %v1199
    %v1201 = vpop.f32.mrf.mxu0
    %1202 = vdwg.mxu0
    %1203 = vmatpush.bf16.msra.mxu0 %v994
    %1204 = vmatpush.bf16.msra.mxu0 %v990
    %1205 = vmatpush.bf16.msra.mxu0 %v986
    %1206 = vmatpush.bf16.msra.mxu0 %v982
    %1207 = vmatpush.bf16.msra.mxu0 %v978
    %1208 = vmatpush.bf16.msra.mxu0 %v974
    %1209 = vmatpush.bf16.msra.mxu0 %v970
    %1210 = vmatpush.bf16.msra.mxu0 %v966
    %1211 = vmatmul.bf16.gmra.mxu0 %v409
    %v1212 = vpop.f32.mrf.mxu0
    %v1213 = vadd.f32 %v1200, %v1212
    %v1214 = vpop.f32.mrf.mxu0
    %1215 = vdwg.mxu0
    %1216 = vmatpush.bf16.msra.mxu0 %v1026
    %1217 = vmatpush.bf16.msra.mxu0 %v1022
    %1218 = vmatpush.bf16.msra.mxu0 %v1018
    %1219 = vmatpush.bf16.msra.mxu0 %v1014
    %1220 = vmatpush.bf16.msra.mxu0 %v1010
    %1221 = vmatpush.bf16.msra.mxu0 %v1006
    %1222 = vmatpush.bf16.msra.mxu0 %v1002
    %1223 = vmatpush.bf16.msra.mxu0 %v998
    %1224 = vmatmul.bf16.gmra.mxu0 %v410
    %v1225 = vpop.f32.mrf.mxu0
    %v1226 = vadd.f32 %v1213, %v1225
    %v1227 = vpop.f32.mrf.mxu0
    %1228 = vdwg.mxu0
    %1229 = vmatpush.bf16.msra.mxu0 %v1058
    %1230 = vmatpush.bf16.msra.mxu0 %v1054
    %1231 = vmatpush.bf16.msra.mxu0 %v1050
    %1232 = vmatpush.bf16.msra.mxu0 %v1046
    %1233 = vmatpush.bf16.msra.mxu0 %v1042
    %1234 = vmatpush.bf16.msra.mxu0 %v1038
    %1235 = vmatpush.bf16.msra.mxu0 %v1034
    %1236 = vmatpush.bf16.msra.mxu0 %v1030
    %1237 = vmatmul.bf16.gmra.mxu0 %v411
    %v1238 = vpop.f32.mrf.mxu0
    %v1239 = vadd.f32 %v1226, %v1238
    %v1240 = vpop.f32.mrf.mxu0
    %1241 = vdwg.mxu0
    %1242 = vmatpush.bf16.msra.mxu0 %v963
    %1243 = vmatpush.bf16.msra.mxu0 %v959
    %1244 = vmatpush.bf16.msra.mxu0 %v955
    %1245 = vmatpush.bf16.msra.mxu0 %v951
    %1246 = vmatpush.bf16.msra.mxu0 %v947
    %1247 = vmatpush.bf16.msra.mxu0 %v943
    %1248 = vmatpush.bf16.msra.mxu0 %v939
    %1249 = vmatpush.bf16.msra.mxu0 %v935
    %1250 = vmatmul.bf16.gmra.mxu0 %v408
    %v1251 = vpop.f32.mrf.mxu0
    %v1252 = vadd.f32 %v543, %v1251
    %v1253 = vpop.f32.mrf.mxu0
    %1254 = vdwg.mxu0
    %1255 = vmatpush.bf16.msra.mxu0 %v995
    %1256 = vmatpush.bf16.msra.mxu0 %v991
    %1257 = vmatpush.bf16.msra.mxu0 %v987
    %1258 = vmatpush.bf16.msra.mxu0 %v983
    %1259 = vmatpush.bf16.msra.mxu0 %v979
    %1260 = vmatpush.bf16.msra.mxu0 %v975
    %1261 = vmatpush.bf16.msra.mxu0 %v971
    %1262 = vmatpush.bf16.msra.mxu0 %v967
    %1263 = vmatmul.bf16.gmra.mxu0 %v409
    %v1264 = vpop.f32.mrf.mxu0
    %v1265 = vadd.f32 %v1252, %v1264
    %v1266 = vpop.f32.mrf.mxu0
    %1267 = vdwg.mxu0
    %1268 = vmatpush.bf16.msra.mxu0 %v1027
    %1269 = vmatpush.bf16.msra.mxu0 %v1023
    %1270 = vmatpush.bf16.msra.mxu0 %v1019
    %1271 = vmatpush.bf16.msra.mxu0 %v1015
    %1272 = vmatpush.bf16.msra.mxu0 %v1011
    %1273 = vmatpush.bf16.msra.mxu0 %v1007
    %1274 = vmatpush.bf16.msra.mxu0 %v1003
    %1275 = vmatpush.bf16.msra.mxu0 %v999
    %1276 = vmatmul.bf16.gmra.mxu0 %v410
    %v1277 = vpop.f32.mrf.mxu0
    %v1278 = vadd.f32 %v1265, %v1277
    %v1279 = vpop.f32.mrf.mxu0
    %1280 = vdwg.mxu0
    %1281 = vmatpush.bf16.msra.mxu0 %v1059
    %1282 = vmatpush.bf16.msra.mxu0 %v1055
    %1283 = vmatpush.bf16.msra.mxu0 %v1051
    %1284 = vmatpush.bf16.msra.mxu0 %v1047
    %1285 = vmatpush.bf16.msra.mxu0 %v1043
    %1286 = vmatpush.bf16.msra.mxu0 %v1039
    %1287 = vmatpush.bf16.msra.mxu0 %v1035
    %1288 = vmatpush.bf16.msra.mxu0 %v1031
    %1289 = vmatmul.bf16.gmra.mxu0 %v411
    %v1290 = vpop.f32.mrf.mxu0
    %v1291 = vadd.f32 %v1278, %v1290
    %v1292 = vpop.f32.mrf.mxu0
    %1293 = vdwg.mxu0
    %1294 = vmatpush.bf16.msra.mxu0 %v964
    %1295 = vmatpush.bf16.msra.mxu0 %v960
    %1296 = vmatpush.bf16.msra.mxu0 %v956
    %1297 = vmatpush.bf16.msra.mxu0 %v952
    %1298 = vmatpush.bf16.msra.mxu0 %v948
    %1299 = vmatpush.bf16.msra.mxu0 %v944
    %1300 = vmatpush.bf16.msra.mxu0 %v940
    %1301 = vmatpush.bf16.msra.mxu0 %v936
    %1302 = vmatmul.bf16.gmra.mxu0 %v408
    %v1303 = vpop.f32.mrf.mxu0
    %v1304 = vadd.f32 %v544, %v1303
    %v1305 = vpop.f32.mrf.mxu0
    %1306 = vdwg.mxu0
    %1307 = vmatpush.bf16.msra.mxu0 %v996
    %1308 = vmatpush.bf16.msra.mxu0 %v992
    %1309 = vmatpush.bf16.msra.mxu0 %v988
    %1310 = vmatpush.bf16.msra.mxu0 %v984
    %1311 = vmatpush.bf16.msra.mxu0 %v980
    %1312 = vmatpush.bf16.msra.mxu0 %v976
    %1313 = vmatpush.bf16.msra.mxu0 %v972
    %1314 = vmatpush.bf16.msra.mxu0 %v968
    %1315 = vmatmul.bf16.gmra.mxu0 %v409
    %v1316 = vpop.f32.mrf.mxu0
    %v1317 = vadd.f32 %v1304, %v1316
    %v1318 = vpop.f32.mrf.mxu0
    %1319 = vdwg.mxu0
    %1320 = vmatpush.bf16.msra.mxu0 %v1028
    %1321 = vmatpush.bf16.msra.mxu0 %v1024
    %1322 = vmatpush.bf16.msra.mxu0 %v1020
    %1323 = vmatpush.bf16.msra.mxu0 %v1016
    %1324 = vmatpush.bf16.msra.mxu0 %v1012
    %1325 = vmatpush.bf16.msra.mxu0 %v1008
    %1326 = vmatpush.bf16.msra.mxu0 %v1004
    %1327 = vmatpush.bf16.msra.mxu0 %v1000
    %1328 = vmatmul.bf16.gmra.mxu0 %v410
    %v1329 = vpop.f32.mrf.mxu0
    %v1330 = vadd.f32 %v1317, %v1329
    %v1331 = vpop.f32.mrf.mxu0
    %1332 = vdwg.mxu0
    %1333 = vmatpush.bf16.msra.mxu0 %v1060
    %1334 = vmatpush.bf16.msra.mxu0 %v1056
    %1335 = vmatpush.bf16.msra.mxu0 %v1052
    %1336 = vmatpush.bf16.msra.mxu0 %v1048
    %1337 = vmatpush.bf16.msra.mxu0 %v1044
    %1338 = vmatpush.bf16.msra.mxu0 %v1040
    %1339 = vmatpush.bf16.msra.mxu0 %v1036
    %1340 = vmatpush.bf16.msra.mxu0 %v1032
    %1341 = vmatmul.bf16.gmra.mxu0 %v411
    %v1342 = vpop.f32.mrf.mxu0
    %v1343 = vadd.f32 %v1330, %v1342
    %v1344 = vpop.f32.mrf.mxu0
    %1345 = vdwg.mxu0
    %1346 = vmatpush.bf16.msra.mxu0 %v965
    %1347 = vmatpush.bf16.msra.mxu0 %v961
    %1348 = vmatpush.bf16.msra.mxu0 %v957
    %1349 = vmatpush.bf16.msra.mxu0 %v953
    %1350 = vmatpush.bf16.msra.mxu0 %v949
    %1351 = vmatpush.bf16.msra.mxu0 %v945
    %1352 = vmatpush.bf16.msra.mxu0 %v941
    %1353 = vmatpush.bf16.msra.mxu0 %v937
    %1354 = vmatmul.bf16.gmra.mxu0 %v408
    %v1355 = vpop.f32.mrf.mxu0
    %v1356 = vadd.f32 %v545, %v1355
    %v1357 = vpop.f32.mrf.mxu0
    %1358 = vdwg.mxu0
    %1359 = vmatpush.bf16.msra.mxu0 %v997
    %1360 = vmatpush.bf16.msra.mxu0 %v993
    %1361 = vmatpush.bf16.msra.mxu0 %v989
    %1362 = vmatpush.bf16.msra.mxu0 %v985
    %1363 = vmatpush.bf16.msra.mxu0 %v981
    %1364 = vmatpush.bf16.msra.mxu0 %v977
    %1365 = vmatpush.bf16.msra.mxu0 %v973
    %1366 = vmatpush.bf16.msra.mxu0 %v969
    %1367 = vmatmul.bf16.gmra.mxu0 %v409
    %v1368 = vpop.f32.mrf.mxu0
    %v1369 = vadd.f32 %v1356, %v1368
    %v1370 = vpop.f32.mrf.mxu0
    %1371 = vdwg.mxu0
    %1372 = vmatpush.bf16.msra.mxu0 %v1029
    %1373 = vmatpush.bf16.msra.mxu0 %v1025
    %1374 = vmatpush.bf16.msra.mxu0 %v1021
    %1375 = vmatpush.bf16.msra.mxu0 %v1017
    %1376 = vmatpush.bf16.msra.mxu0 %v1013
    %1377 = vmatpush.bf16.msra.mxu0 %v1009
    %1378 = vmatpush.bf16.msra.mxu0 %v1005
    %1379 = vmatpush.bf16.msra.mxu0 %v1001
    %1380 = vmatmul.bf16.gmra.mxu0 %v410
    %v1381 = vpop.f32.mrf.mxu0
    %v1382 = vadd.f32 %v1369, %v1381
    %v1383 = vpop.f32.mrf.mxu0
    %1384 = vdwg.mxu0
    %1385 = vmatpush.bf16.msra.mxu0 %v1061
    %1386 = vmatpush.bf16.msra.mxu0 %v1057
    %1387 = vmatpush.bf16.msra.mxu0 %v1053
    %1388 = vmatpush.bf16.msra.mxu0 %v1049
    %1389 = vmatpush.bf16.msra.mxu0 %v1045
    %1390 = vmatpush.bf16.msra.mxu0 %v1041
    %1391 = vmatpush.bf16.msra.mxu0 %v1037
    %1392 = vmatpush.bf16.msra.mxu0 %v1033
    %1393 = vmatmul.bf16.gmra.mxu0 %v411
    %v1394 = vpop.f32.mrf.mxu0
    %v1395 = vadd.f32 %v1382, %v1394
    %v1396 = vpop.f32.mrf.mxu0
    %1397 = vdwg.mxu0
    %v1398 = vmax.f32 %v1239, 0.0
    %v1399 = vmax.f32 %v1291, 0.0
    %v1400 = vmax.f32 %v1343, 0.0
    %v1401 = vmax.f32 %v1395, 0.0
    %v1402 = vpack.c.bf16 %v1398, %v1398
    %v1403 = vpack.c.bf16 %v1399, %v1399
    %v1404 = vpack.c.bf16 %v1400, %v1400
    %v1405 = vpack.c.bf16 %v1401, %v1401
    %v1406 = vld [vmem:[#allocation9] sm:$0xff]
    %v1407 = vld [vmem:[#allocation9 + $0x8] sm:$0xff]
    %v1408 = vld [vmem:[#allocation9 + $0x10] sm:$0xff]
    %v1409 = vld [vmem:[#allocation9 + $0x18] sm:$0xff]
    %v1410 = vld [vmem:[#allocation9 + $0x20] sm:$0xff]
    %v1411 = vld [vmem:[#allocation9 + $0x28] sm:$0xff]
    %v1412 = vld [vmem:[#allocation9 + $0x30] sm:$0xff]
    %v1413 = vld [vmem:[#allocation9 + $0x38] sm:$0xff]
    %v1414 = vld [vmem:[#allocation9 + $0x40] sm:$0xff]
    %v1415 = vld [vmem:[#allocation9 + $0x48] sm:$0xff]
    %v1416 = vld [vmem:[#allocation9 + $0x50] sm:$0xff]
    %v1417 = vld [vmem:[#allocation9 + $0x58] sm:$0xff]
    %v1418 = vld [vmem:[#allocation9 + $0x60] sm:$0xff]
    %v1419 = vld [vmem:[#allocation9 + $0x68] sm:$0xff]
    %v1420 = vld [vmem:[#allocation9 + $0x70] sm:$0xff]
    %v1421 = vld [vmem:[#allocation9 + $0x78] sm:$0xff]
    %v1422 = vld [vmem:[#allocation9 + $0x80] sm:$0xff]
    %v1423 = vld [vmem:[#allocation9 + $0x88] sm:$0xff]
    %v1424 = vld [vmem:[#allocation9 + $0x90] sm:$0xff]
    %v1425 = vld [vmem:[#allocation9 + $0x98] sm:$0xff]
    %v1426 = vld [vmem:[#allocation9 + $0xa0] sm:$0xff]
    %v1427 = vld [vmem:[#allocation9 + $0xa8] sm:$0xff]
    %v1428 = vld [vmem:[#allocation9 + $0xb0] sm:$0xff]
    %v1429 = vld [vmem:[#allocation9 + $0xb8] sm:$0xff]
    %v1430 = vld [vmem:[#allocation9 + $0xc0] sm:$0xff]
    %v1431 = vld [vmem:[#allocation9 + $0xc8] sm:$0xff]
    %v1432 = vld [vmem:[#allocation9 + $0xd0] sm:$0xff]
    %v1433 = vld [vmem:[#allocation9 + $0xd8] sm:$0xff]
    %v1434 = vld [vmem:[#allocation9 + $0xe0] sm:$0xff]
    %v1435 = vld [vmem:[#allocation9 + $0xe8] sm:$0xff]
    %v1436 = vld [vmem:[#allocation9 + $0xf0] sm:$0xff]
    %v1437 = vld [vmem:[#allocation9 + $0xf8] sm:$0xff]
    %v1438 = vld [vmem:[#allocation9 + $0x100] sm:$0xff]
    %v1439 = vld [vmem:[#allocation9 + $0x108] sm:$0xff]
    %v1440 = vld [vmem:[#allocation9 + $0x110] sm:$0xff]
    %v1441 = vld [vmem:[#allocation9 + $0x118] sm:$0xff]
    %v1442 = vld [vmem:[#allocation9 + $0x120] sm:$0xff]
    %v1443 = vld [vmem:[#allocation9 + $0x128] sm:$0xff]
    %v1444 = vld [vmem:[#allocation9 + $0x130] sm:$0xff]
    %v1445 = vld [vmem:[#allocation9 + $0x138] sm:$0xff]
    %v1446 = vld [vmem:[#allocation9 + $0x140] sm:$0xff]
    %v1447 = vld [vmem:[#allocation9 + $0x148] sm:$0xff]
    %v1448 = vld [vmem:[#allocation9 + $0x150] sm:$0xff]
    %v1449 = vld [vmem:[#allocation9 + $0x158] sm:$0xff]
    %v1450 = vld [vmem:[#allocation9 + $0x160] sm:$0xff]
    %v1451 = vld [vmem:[#allocation9 + $0x168] sm:$0xff]
    %v1452 = vld [vmem:[#allocation9 + $0x170] sm:$0xff]
    %v1453 = vld [vmem:[#allocation9 + $0x178] sm:$0xff]
    %v1454 = vld [vmem:[#allocation9 + $0x180] sm:$0xff]
    %v1455 = vld [vmem:[#allocation9 + $0x188] sm:$0xff]
    %v1456 = vld [vmem:[#allocation9 + $0x190] sm:$0xff]
    %v1457 = vld [vmem:[#allocation9 + $0x198] sm:$0xff]
    %v1458 = vld [vmem:[#allocation9 + $0x1a0] sm:$0xff]
    %v1459 = vld [vmem:[#allocation9 + $0x1a8] sm:$0xff]
    %v1460 = vld [vmem:[#allocation9 + $0x1b0] sm:$0xff]
    %v1461 = vld [vmem:[#allocation9 + $0x1b8] sm:$0xff]
    %v1462 = vld [vmem:[#allocation9 + $0x1c0] sm:$0xff]
    %v1463 = vld [vmem:[#allocation9 + $0x1c8] sm:$0xff]
    %v1464 = vld [vmem:[#allocation9 + $0x1d0] sm:$0xff]
    %v1465 = vld [vmem:[#allocation9 + $0x1d8] sm:$0xff]
    %v1466 = vld [vmem:[#allocation9 + $0x1e0] sm:$0xff]
    %v1467 = vld [vmem:[#allocation9 + $0x1e8] sm:$0xff]
    %v1468 = vld [vmem:[#allocation9 + $0x1f0] sm:$0xff]
    %v1469 = vld [vmem:[#allocation9 + $0x1f8] sm:$0xff]
    %v1470 = vld [vmem:[#allocation9 + $0x200] sm:$0xff]
    %v1471 = vld [vmem:[#allocation9 + $0x208] sm:$0xff]
    %v1472 = vld [vmem:[#allocation9 + $0x210] sm:$0xff]
    %v1473 = vld [vmem:[#allocation9 + $0x218] sm:$0xff]
    %v1474 = vld [vmem:[#allocation9 + $0x220] sm:$0xff]
    %v1475 = vld [vmem:[#allocation9 + $0x228] sm:$0xff]
    %v1476 = vld [vmem:[#allocation9 + $0x230] sm:$0xff]
    %v1477 = vld [vmem:[#allocation9 + $0x238] sm:$0xff]
    %v1478 = vld [vmem:[#allocation9 + $0x240] sm:$0xff]
    %v1479 = vld [vmem:[#allocation9 + $0x248] sm:$0xff]
    %v1480 = vld [vmem:[#allocation9 + $0x250] sm:$0xff]
    %v1481 = vld [vmem:[#allocation9 + $0x258] sm:$0xff]
    %v1482 = vld [vmem:[#allocation9 + $0x260] sm:$0xff]
    %v1483 = vld [vmem:[#allocation9 + $0x268] sm:$0xff]
    %v1484 = vld [vmem:[#allocation9 + $0x270] sm:$0xff]
    %v1485 = vld [vmem:[#allocation9 + $0x278] sm:$0xff]
    %v1486 = vld [vmem:[#allocation9 + $0x280] sm:$0xff]
    %v1487 = vld [vmem:[#allocation9 + $0x288] sm:$0xff]
    %v1488 = vld [vmem:[#allocation9 + $0x290] sm:$0xff]
    %v1489 = vld [vmem:[#allocation9 + $0x298] sm:$0xff]
    %v1490 = vld [vmem:[#allocation9 + $0x2a0] sm:$0xff]
    %v1491 = vld [vmem:[#allocation9 + $0x2a8] sm:$0xff]
    %v1492 = vld [vmem:[#allocation9 + $0x2b0] sm:$0xff]
    %v1493 = vld [vmem:[#allocation9 + $0x2b8] sm:$0xff]
    %v1494 = vld [vmem:[#allocation9 + $0x2c0] sm:$0xff]
    %v1495 = vld [vmem:[#allocation9 + $0x2c8] sm:$0xff]
    %v1496 = vld [vmem:[#allocation9 + $0x2d0] sm:$0xff]
    %v1497 = vld [vmem:[#allocation9 + $0x2d8] sm:$0xff]
    %v1498 = vld [vmem:[#allocation9 + $0x2e0] sm:$0xff]
    %v1499 = vld [vmem:[#allocation9 + $0x2e8] sm:$0xff]
    %v1500 = vld [vmem:[#allocation9 + $0x2f0] sm:$0xff]
    %v1501 = vld [vmem:[#allocation9 + $0x2f8] sm:$0xff]
    %v1502 = vld [vmem:[#allocation9 + $0x300] sm:$0xff]
    %v1503 = vld [vmem:[#allocation9 + $0x308] sm:$0xff]
    %v1504 = vld [vmem:[#allocation9 + $0x310] sm:$0xff]
    %v1505 = vld [vmem:[#allocation9 + $0x318] sm:$0xff]
    %v1506 = vld [vmem:[#allocation9 + $0x320] sm:$0xff]
    %v1507 = vld [vmem:[#allocation9 + $0x328] sm:$0xff]
    %v1508 = vld [vmem:[#allocation9 + $0x330] sm:$0xff]
    %v1509 = vld [vmem:[#allocation9 + $0x338] sm:$0xff]
    %v1510 = vld [vmem:[#allocation9 + $0x340] sm:$0xff]
    %v1511 = vld [vmem:[#allocation9 + $0x348] sm:$0xff]
    %v1512 = vld [vmem:[#allocation9 + $0x350] sm:$0xff]
    %v1513 = vld [vmem:[#allocation9 + $0x358] sm:$0xff]
    %v1514 = vld [vmem:[#allocation9 + $0x360] sm:$0xff]
    %v1515 = vld [vmem:[#allocation9 + $0x368] sm:$0xff]
    %v1516 = vld [vmem:[#allocation9 + $0x370] sm:$0xff]
    %v1517 = vld [vmem:[#allocation9 + $0x378] sm:$0xff]
    %v1518 = vld [vmem:[#allocation9 + $0x380] sm:$0xff]
    %v1519 = vld [vmem:[#allocation9 + $0x388] sm:$0xff]
    %v1520 = vld [vmem:[#allocation9 + $0x390] sm:$0xff]
    %v1521 = vld [vmem:[#allocation9 + $0x398] sm:$0xff]
    %v1522 = vld [vmem:[#allocation9 + $0x3a0] sm:$0xff]
    %v1523 = vld [vmem:[#allocation9 + $0x3a8] sm:$0xff]
    %v1524 = vld [vmem:[#allocation9 + $0x3b0] sm:$0xff]
    %v1525 = vld [vmem:[#allocation9 + $0x3b8] sm:$0xff]
    %v1526 = vld [vmem:[#allocation9 + $0x3c0] sm:$0xff]
    %v1527 = vld [vmem:[#allocation9 + $0x3c8] sm:$0xff]
    %v1528 = vld [vmem:[#allocation9 + $0x3d0] sm:$0xff]
    %v1529 = vld [vmem:[#allocation9 + $0x3d8] sm:$0xff]
    %v1530 = vld [vmem:[#allocation9 + $0x3e0] sm:$0xff]
    %v1531 = vld [vmem:[#allocation9 + $0x3e8] sm:$0xff]
    %v1532 = vld [vmem:[#allocation9 + $0x3f0] sm:$0xff]
    %v1533 = vld [vmem:[#allocation9 + $0x3f8] sm:$0xff]
    %v1534 = vld [vmem:[#allocation9 + $0x400] sm:$0xff]
    %v1535 = vld [vmem:[#allocation9 + $0x408] sm:$0xff]
    %v1536 = vld [vmem:[#allocation9 + $0x410] sm:$0xff]
    %v1537 = vld [vmem:[#allocation9 + $0x418] sm:$0xff]
    %v1538 = vld [vmem:[#allocation9 + $0x420] sm:$0xff]
    %v1539 = vld [vmem:[#allocation9 + $0x428] sm:$0xff]
    %v1540 = vld [vmem:[#allocation9 + $0x430] sm:$0xff]
    %v1541 = vld [vmem:[#allocation9 + $0x438] sm:$0xff]
    %v1542 = vld [vmem:[#allocation9 + $0x440] sm:$0xff]
    %v1543 = vld [vmem:[#allocation9 + $0x448] sm:$0xff]
    %v1544 = vld [vmem:[#allocation9 + $0x450] sm:$0xff]
    %v1545 = vld [vmem:[#allocation9 + $0x458] sm:$0xff]
    %v1546 = vld [vmem:[#allocation9 + $0x460] sm:$0xff]
    %v1547 = vld [vmem:[#allocation9 + $0x468] sm:$0xff]
    %v1548 = vld [vmem:[#allocation9 + $0x470] sm:$0xff]
    %v1549 = vld [vmem:[#allocation9 + $0x478] sm:$0xff]
    %v1550 = vld [vmem:[#allocation9 + $0x480] sm:$0xff]
    %v1551 = vld [vmem:[#allocation9 + $0x488] sm:$0xff]
    %v1552 = vld [vmem:[#allocation9 + $0x490] sm:$0xff]
    %v1553 = vld [vmem:[#allocation9 + $0x498] sm:$0xff]
    %v1554 = vld [vmem:[#allocation9 + $0x4a0] sm:$0xff]
    %v1555 = vld [vmem:[#allocation9 + $0x4a8] sm:$0xff]
    %v1556 = vld [vmem:[#allocation9 + $0x4b0] sm:$0xff]
    %v1557 = vld [vmem:[#allocation9 + $0x4b8] sm:$0xff]
    %v1558 = vld [vmem:[#allocation9 + $0x4c0] sm:$0xff]
    %v1559 = vld [vmem:[#allocation9 + $0x4c8] sm:$0xff]
    %v1560 = vld [vmem:[#allocation9 + $0x4d0] sm:$0xff]
    %v1561 = vld [vmem:[#allocation9 + $0x4d8] sm:$0xff]
    %v1562 = vld [vmem:[#allocation9 + $0x4e0] sm:$0xff]
    %v1563 = vld [vmem:[#allocation9 + $0x4e8] sm:$0xff]
    %v1564 = vld [vmem:[#allocation9 + $0x4f0] sm:$0xff]
    %v1565 = vld [vmem:[#allocation9 + $0x4f8] sm:$0xff]
    %v1566 = vld [vmem:[#allocation9 + $0x500] sm:$0xff]
    %v1567 = vld [vmem:[#allocation9 + $0x508] sm:$0xff]
    %v1568 = vld [vmem:[#allocation9 + $0x510] sm:$0xff]
    %v1569 = vld [vmem:[#allocation9 + $0x518] sm:$0xff]
    %v1570 = vld [vmem:[#allocation9 + $0x520] sm:$0xff]
    %v1571 = vld [vmem:[#allocation9 + $0x528] sm:$0xff]
    %v1572 = vld [vmem:[#allocation9 + $0x530] sm:$0xff]
    %v1573 = vld [vmem:[#allocation9 + $0x538] sm:$0xff]
    %v1574 = vld [vmem:[#allocation9 + $0x540] sm:$0xff]
    %v1575 = vld [vmem:[#allocation9 + $0x548] sm:$0xff]
    %v1576 = vld [vmem:[#allocation9 + $0x550] sm:$0xff]
    %v1577 = vld [vmem:[#allocation9 + $0x558] sm:$0xff]
    %v1578 = vld [vmem:[#allocation9 + $0x560] sm:$0xff]
    %v1579 = vld [vmem:[#allocation9 + $0x568] sm:$0xff]
    %v1580 = vld [vmem:[#allocation9 + $0x570] sm:$0xff]
    %v1581 = vld [vmem:[#allocation9 + $0x578] sm:$0xff]
    %v1582 = vld [vmem:[#allocation9 + $0x580] sm:$0xff]
    %v1583 = vld [vmem:[#allocation9 + $0x588] sm:$0xff]
    %v1584 = vld [vmem:[#allocation9 + $0x590] sm:$0xff]
    %v1585 = vld [vmem:[#allocation9 + $0x598] sm:$0xff]
    %v1586 = vld [vmem:[#allocation9 + $0x5a0] sm:$0xff]
    %v1587 = vld [vmem:[#allocation9 + $0x5a8] sm:$0xff]
    %v1588 = vld [vmem:[#allocation9 + $0x5b0] sm:$0xff]
    %v1589 = vld [vmem:[#allocation9 + $0x5b8] sm:$0xff]
    %v1590 = vld [vmem:[#allocation9 + $0x5c0] sm:$0xff]
    %v1591 = vld [vmem:[#allocation9 + $0x5c8] sm:$0xff]
    %v1592 = vld [vmem:[#allocation9 + $0x5d0] sm:$0xff]
    %v1593 = vld [vmem:[#allocation9 + $0x5d8] sm:$0xff]
    %v1594 = vld [vmem:[#allocation9 + $0x5e0] sm:$0xff]
    %v1595 = vld [vmem:[#allocation9 + $0x5e8] sm:$0xff]
    %v1596 = vld [vmem:[#allocation9 + $0x5f0] sm:$0xff]
    %v1597 = vld [vmem:[#allocation9 + $0x5f8] sm:$0xff]
    %v1598 = vld [vmem:[#allocation9 + $0x600] sm:$0xff]
    %v1599 = vld [vmem:[#allocation9 + $0x608] sm:$0xff]
    %v1600 = vld [vmem:[#allocation9 + $0x610] sm:$0xff]
    %v1601 = vld [vmem:[#allocation9 + $0x618] sm:$0xff]
    %v1602 = vld [vmem:[#allocation9 + $0x620] sm:$0xff]
    %v1603 = vld [vmem:[#allocation9 + $0x628] sm:$0xff]
    %v1604 = vld [vmem:[#allocation9 + $0x630] sm:$0xff]
    %v1605 = vld [vmem:[#allocation9 + $0x638] sm:$0xff]
    %v1606 = vld [vmem:[#allocation9 + $0x640] sm:$0xff]
    %v1607 = vld [vmem:[#allocation9 + $0x648] sm:$0xff]
    %v1608 = vld [vmem:[#allocation9 + $0x650] sm:$0xff]
    %v1609 = vld [vmem:[#allocation9 + $0x658] sm:$0xff]
    %v1610 = vld [vmem:[#allocation9 + $0x660] sm:$0xff]
    %v1611 = vld [vmem:[#allocation9 + $0x668] sm:$0xff]
    %v1612 = vld [vmem:[#allocation9 + $0x670] sm:$0xff]
    %v1613 = vld [vmem:[#allocation9 + $0x678] sm:$0xff]
    %v1614 = vld [vmem:[#allocation9 + $0x680] sm:$0xff]
    %v1615 = vld [vmem:[#allocation9 + $0x688] sm:$0xff]
    %v1616 = vld [vmem:[#allocation9 + $0x690] sm:$0xff]
    %v1617 = vld [vmem:[#allocation9 + $0x698] sm:$0xff]
    %v1618 = vld [vmem:[#allocation9 + $0x6a0] sm:$0xff]
    %v1619 = vld [vmem:[#allocation9 + $0x6a8] sm:$0xff]
    %v1620 = vld [vmem:[#allocation9 + $0x6b0] sm:$0xff]
    %v1621 = vld [vmem:[#allocation9 + $0x6b8] sm:$0xff]
    %v1622 = vld [vmem:[#allocation9 + $0x6c0] sm:$0xff]
    %v1623 = vld [vmem:[#allocation9 + $0x6c8] sm:$0xff]
    %v1624 = vld [vmem:[#allocation9 + $0x6d0] sm:$0xff]
    %v1625 = vld [vmem:[#allocation9 + $0x6d8] sm:$0xff]
    %v1626 = vld [vmem:[#allocation9 + $0x6e0] sm:$0xff]
    %v1627 = vld [vmem:[#allocation9 + $0x6e8] sm:$0xff]
    %v1628 = vld [vmem:[#allocation9 + $0x6f0] sm:$0xff]
    %v1629 = vld [vmem:[#allocation9 + $0x6f8] sm:$0xff]
    %v1630 = vld [vmem:[#allocation9 + $0x700] sm:$0xff]
    %v1631 = vld [vmem:[#allocation9 + $0x708] sm:$0xff]
    %v1632 = vld [vmem:[#allocation9 + $0x710] sm:$0xff]
    %v1633 = vld [vmem:[#allocation9 + $0x718] sm:$0xff]
    %v1634 = vld [vmem:[#allocation9 + $0x720] sm:$0xff]
    %v1635 = vld [vmem:[#allocation9 + $0x728] sm:$0xff]
    %v1636 = vld [vmem:[#allocation9 + $0x730] sm:$0xff]
    %v1637 = vld [vmem:[#allocation9 + $0x738] sm:$0xff]
    %v1638 = vld [vmem:[#allocation9 + $0x740] sm:$0xff]
    %v1639 = vld [vmem:[#allocation9 + $0x748] sm:$0xff]
    %v1640 = vld [vmem:[#allocation9 + $0x750] sm:$0xff]
    %v1641 = vld [vmem:[#allocation9 + $0x758] sm:$0xff]
    %v1642 = vld [vmem:[#allocation9 + $0x760] sm:$0xff]
    %v1643 = vld [vmem:[#allocation9 + $0x768] sm:$0xff]
    %v1644 = vld [vmem:[#allocation9 + $0x770] sm:$0xff]
    %v1645 = vld [vmem:[#allocation9 + $0x778] sm:$0xff]
    %v1646 = vld [vmem:[#allocation9 + $0x780] sm:$0xff]
    %v1647 = vld [vmem:[#allocation9 + $0x788] sm:$0xff]
    %v1648 = vld [vmem:[#allocation9 + $0x790] sm:$0xff]
    %v1649 = vld [vmem:[#allocation9 + $0x798] sm:$0xff]
    %v1650 = vld [vmem:[#allocation9 + $0x7a0] sm:$0xff]
    %v1651 = vld [vmem:[#allocation9 + $0x7a8] sm:$0xff]
    %v1652 = vld [vmem:[#allocation9 + $0x7b0] sm:$0xff]
    %v1653 = vld [vmem:[#allocation9 + $0x7b8] sm:$0xff]
    %v1654 = vld [vmem:[#allocation9 + $0x7c0] sm:$0xff]
    %v1655 = vld [vmem:[#allocation9 + $0x7c8] sm:$0xff]
    %v1656 = vld [vmem:[#allocation9 + $0x7d0] sm:$0xff]
    %v1657 = vld [vmem:[#allocation9 + $0x7d8] sm:$0xff]
    %v1658 = vld [vmem:[#allocation9 + $0x7e0] sm:$0xff]
    %v1659 = vld [vmem:[#allocation9 + $0x7e8] sm:$0xff]
    %v1660 = vld [vmem:[#allocation9 + $0x7f0] sm:$0xff]
    %v1661 = vld [vmem:[#allocation9 + $0x7f8] sm:$0xff]
    %v1662 = vld [vmem:[#allocation9 + $0x800] sm:$0xff]
    %v1663 = vld [vmem:[#allocation9 + $0x808] sm:$0xff]
    %v1664 = vld [vmem:[#allocation9 + $0x810] sm:$0xff]
    %v1665 = vld [vmem:[#allocation9 + $0x818] sm:$0xff]
    %v1666 = vld [vmem:[#allocation9 + $0x820] sm:$0xff]
    %v1667 = vld [vmem:[#allocation9 + $0x828] sm:$0xff]
    %v1668 = vld [vmem:[#allocation9 + $0x830] sm:$0xff]
    %v1669 = vld [vmem:[#allocation9 + $0x838] sm:$0xff]
    %v1670 = vld [vmem:[#allocation9 + $0x840] sm:$0xff]
    %v1671 = vld [vmem:[#allocation9 + $0x848] sm:$0xff]
    %v1672 = vld [vmem:[#allocation9 + $0x850] sm:$0xff]
    %v1673 = vld [vmem:[#allocation9 + $0x858] sm:$0xff]
    %v1674 = vld [vmem:[#allocation9 + $0x860] sm:$0xff]
    %v1675 = vld [vmem:[#allocation9 + $0x868] sm:$0xff]
    %v1676 = vld [vmem:[#allocation9 + $0x870] sm:$0xff]
    %v1677 = vld [vmem:[#allocation9 + $0x878] sm:$0xff]
    %v1678 = vld [vmem:[#allocation9 + $0x880] sm:$0xff]
    %v1679 = vld [vmem:[#allocation9 + $0x888] sm:$0xff]
    %v1680 = vld [vmem:[#allocation9 + $0x890] sm:$0xff]
    %v1681 = vld [vmem:[#allocation9 + $0x898] sm:$0xff]
    %v1682 = vld [vmem:[#allocation9 + $0x8a0] sm:$0xff]
    %v1683 = vld [vmem:[#allocation9 + $0x8a8] sm:$0xff]
    %v1684 = vld [vmem:[#allocation9 + $0x8b0] sm:$0xff]
    %v1685 = vld [vmem:[#allocation9 + $0x8b8] sm:$0xff]
    %v1686 = vld [vmem:[#allocation9 + $0x8c0] sm:$0xff]
    %v1687 = vld [vmem:[#allocation9 + $0x8c8] sm:$0xff]
    %v1688 = vld [vmem:[#allocation9 + $0x8d0] sm:$0xff]
    %v1689 = vld [vmem:[#allocation9 + $0x8d8] sm:$0xff]
    %v1690 = vld [vmem:[#allocation9 + $0x8e0] sm:$0xff]
    %v1691 = vld [vmem:[#allocation9 + $0x8e8] sm:$0xff]
    %v1692 = vld [vmem:[#allocation9 + $0x8f0] sm:$0xff]
    %v1693 = vld [vmem:[#allocation9 + $0x8f8] sm:$0xff]
    %v1694 = vld [vmem:[#allocation9 + $0x900] sm:$0xff]
    %v1695 = vld [vmem:[#allocation9 + $0x908] sm:$0xff]
    %v1696 = vld [vmem:[#allocation9 + $0x910] sm:$0xff]
    %v1697 = vld [vmem:[#allocation9 + $0x918] sm:$0xff]
    %v1698 = vld [vmem:[#allocation9 + $0x920] sm:$0xff]
    %v1699 = vld [vmem:[#allocation9 + $0x928] sm:$0xff]
    %v1700 = vld [vmem:[#allocation9 + $0x930] sm:$0xff]
    %v1701 = vld [vmem:[#allocation9 + $0x938] sm:$0xff]
    %v1702 = vld [vmem:[#allocation9 + $0x940] sm:$0xff]
    %v1703 = vld [vmem:[#allocation9 + $0x948] sm:$0xff]
    %v1704 = vld [vmem:[#allocation9 + $0x950] sm:$0xff]
    %v1705 = vld [vmem:[#allocation9 + $0x958] sm:$0xff]
    %v1706 = vld [vmem:[#allocation9 + $0x960] sm:$0xff]
    %v1707 = vld [vmem:[#allocation9 + $0x968] sm:$0xff]
    %v1708 = vld [vmem:[#allocation9 + $0x970] sm:$0xff]
    %v1709 = vld [vmem:[#allocation9 + $0x978] sm:$0xff]
    %v1710 = vld [vmem:[#allocation9 + $0x980] sm:$0xff]
    %v1711 = vld [vmem:[#allocation9 + $0x988] sm:$0xff]
    %v1712 = vld [vmem:[#allocation9 + $0x990] sm:$0xff]
    %v1713 = vld [vmem:[#allocation9 + $0x998] sm:$0xff]
    %v1714 = vld [vmem:[#allocation9 + $0x9a0] sm:$0xff]
    %v1715 = vld [vmem:[#allocation9 + $0x9a8] sm:$0xff]
    %v1716 = vld [vmem:[#allocation9 + $0x9b0] sm:$0xff]
    %v1717 = vld [vmem:[#allocation9 + $0x9b8] sm:$0xff]
    %v1718 = vld [vmem:[#allocation9 + $0x9c0] sm:$0xff]
    %v1719 = vld [vmem:[#allocation9 + $0x9c8] sm:$0xff]
    %v1720 = vld [vmem:[#allocation9 + $0x9d0] sm:$0xff]
    %v1721 = vld [vmem:[#allocation9 + $0x9d8] sm:$0xff]
    %v1722 = vld [vmem:[#allocation9 + $0x9e0] sm:$0xff]
    %v1723 = vld [vmem:[#allocation9 + $0x9e8] sm:$0xff]
    %v1724 = vld [vmem:[#allocation9 + $0x9f0] sm:$0xff]
    %v1725 = vld [vmem:[#allocation9 + $0x9f8] sm:$0xff]
    %v1726 = vld [vmem:[#allocation9 + $0xa00] sm:$0xff]
    %v1727 = vld [vmem:[#allocation9 + $0xa08] sm:$0xff]
    %v1728 = vld [vmem:[#allocation9 + $0xa10] sm:$0xff]
    %v1729 = vld [vmem:[#allocation9 + $0xa18] sm:$0xff]
    %v1730 = vld [vmem:[#allocation9 + $0xa20] sm:$0xff]
    %v1731 = vld [vmem:[#allocation9 + $0xa28] sm:$0xff]
    %v1732 = vld [vmem:[#allocation9 + $0xa30] sm:$0xff]
    %v1733 = vld [vmem:[#allocation9 + $0xa38] sm:$0xff]
    %v1734 = vld [vmem:[#allocation9 + $0xa40] sm:$0xff]
    %v1735 = vld [vmem:[#allocation9 + $0xa48] sm:$0xff]
    %v1736 = vld [vmem:[#allocation9 + $0xa50] sm:$0xff]
    %v1737 = vld [vmem:[#allocation9 + $0xa58] sm:$0xff]
    %v1738 = vld [vmem:[#allocation9 + $0xa60] sm:$0xff]
    %v1739 = vld [vmem:[#allocation9 + $0xa68] sm:$0xff]
    %v1740 = vld [vmem:[#allocation9 + $0xa70] sm:$0xff]
    %v1741 = vld [vmem:[#allocation9 + $0xa78] sm:$0xff]
    %v1742 = vld [vmem:[#allocation9 + $0xa80] sm:$0xff]
    %v1743 = vld [vmem:[#allocation9 + $0xa88] sm:$0xff]
    %v1744 = vld [vmem:[#allocation9 + $0xa90] sm:$0xff]
    %v1745 = vld [vmem:[#allocation9 + $0xa98] sm:$0xff]
    %v1746 = vld [vmem:[#allocation9 + $0xaa0] sm:$0xff]
    %v1747 = vld [vmem:[#allocation9 + $0xaa8] sm:$0xff]
    %v1748 = vld [vmem:[#allocation9 + $0xab0] sm:$0xff]
    %v1749 = vld [vmem:[#allocation9 + $0xab8] sm:$0xff]
    %v1750 = vld [vmem:[#allocation9 + $0xac0] sm:$0xff]
    %v1751 = vld [vmem:[#allocation9 + $0xac8] sm:$0xff]
    %v1752 = vld [vmem:[#allocation9 + $0xad0] sm:$0xff]
    %v1753 = vld [vmem:[#allocation9 + $0xad8] sm:$0xff]
    %v1754 = vld [vmem:[#allocation9 + $0xae0] sm:$0xff]
    %v1755 = vld [vmem:[#allocation9 + $0xae8] sm:$0xff]
    %v1756 = vld [vmem:[#allocation9 + $0xaf0] sm:$0xff]
    %v1757 = vld [vmem:[#allocation9 + $0xaf8] sm:$0xff]
    %v1758 = vld [vmem:[#allocation9 + $0xb00] sm:$0xff]
    %v1759 = vld [vmem:[#allocation9 + $0xb08] sm:$0xff]
    %v1760 = vld [vmem:[#allocation9 + $0xb10] sm:$0xff]
    %v1761 = vld [vmem:[#allocation9 + $0xb18] sm:$0xff]
    %v1762 = vld [vmem:[#allocation9 + $0xb20] sm:$0xff]
    %v1763 = vld [vmem:[#allocation9 + $0xb28] sm:$0xff]
    %v1764 = vld [vmem:[#allocation9 + $0xb30] sm:$0xff]
    %v1765 = vld [vmem:[#allocation9 + $0xb38] sm:$0xff]
    %v1766 = vld [vmem:[#allocation9 + $0xb40] sm:$0xff]
    %v1767 = vld [vmem:[#allocation9 + $0xb48] sm:$0xff]
    %v1768 = vld [vmem:[#allocation9 + $0xb50] sm:$0xff]
    %v1769 = vld [vmem:[#allocation9 + $0xb58] sm:$0xff]
    %v1770 = vld [vmem:[#allocation9 + $0xb60] sm:$0xff]
    %v1771 = vld [vmem:[#allocation9 + $0xb68] sm:$0xff]
    %v1772 = vld [vmem:[#allocation9 + $0xb70] sm:$0xff]
    %v1773 = vld [vmem:[#allocation9 + $0xb78] sm:$0xff]
    %v1774 = vld [vmem:[#allocation9 + $0xb80] sm:$0xff]
    %v1775 = vld [vmem:[#allocation9 + $0xb88] sm:$0xff]
    %v1776 = vld [vmem:[#allocation9 + $0xb90] sm:$0xff]
    %v1777 = vld [vmem:[#allocation9 + $0xb98] sm:$0xff]
    %v1778 = vld [vmem:[#allocation9 + $0xba0] sm:$0xff]
    %v1779 = vld [vmem:[#allocation9 + $0xba8] sm:$0xff]
    %v1780 = vld [vmem:[#allocation9 + $0xbb0] sm:$0xff]
    %v1781 = vld [vmem:[#allocation9 + $0xbb8] sm:$0xff]
    %v1782 = vld [vmem:[#allocation9 + $0xbc0] sm:$0xff]
    %v1783 = vld [vmem:[#allocation9 + $0xbc8] sm:$0xff]
    %v1784 = vld [vmem:[#allocation9 + $0xbd0] sm:$0xff]
    %v1785 = vld [vmem:[#allocation9 + $0xbd8] sm:$0xff]
    %v1786 = vld [vmem:[#allocation9 + $0xbe0] sm:$0xff]
    %v1787 = vld [vmem:[#allocation9 + $0xbe8] sm:$0xff]
    %v1788 = vld [vmem:[#allocation9 + $0xbf0] sm:$0xff]
    %v1789 = vld [vmem:[#allocation9 + $0xbf8] sm:$0xff]
    %v1790 = vld [vmem:[#allocation9 + $0xc00] sm:$0xff]
    %v1791 = vld [vmem:[#allocation9 + $0xc08] sm:$0xff]
    %v1792 = vld [vmem:[#allocation9 + $0xc10] sm:$0xff]
    %v1793 = vld [vmem:[#allocation9 + $0xc18] sm:$0xff]
    %v1794 = vld [vmem:[#allocation9 + $0xc20] sm:$0xff]
    %v1795 = vld [vmem:[#allocation9 + $0xc28] sm:$0xff]
    %v1796 = vld [vmem:[#allocation9 + $0xc30] sm:$0xff]
    %v1797 = vld [vmem:[#allocation9 + $0xc38] sm:$0xff]
    %v1798 = vld [vmem:[#allocation9 + $0xc40] sm:$0xff]
    %v1799 = vld [vmem:[#allocation9 + $0xc48] sm:$0xff]
    %v1800 = vld [vmem:[#allocation9 + $0xc50] sm:$0xff]
    %v1801 = vld [vmem:[#allocation9 + $0xc58] sm:$0xff]
    %v1802 = vld [vmem:[#allocation9 + $0xc60] sm:$0xff]
    %v1803 = vld [vmem:[#allocation9 + $0xc68] sm:$0xff]
    %v1804 = vld [vmem:[#allocation9 + $0xc70] sm:$0xff]
    %v1805 = vld [vmem:[#allocation9 + $0xc78] sm:$0xff]
    %v1806 = vld [vmem:[#allocation9 + $0xc80] sm:$0xff]
    %v1807 = vld [vmem:[#allocation9 + $0xc88] sm:$0xff]
    %v1808 = vld [vmem:[#allocation9 + $0xc90] sm:$0xff]
    %v1809 = vld [vmem:[#allocation9 + $0xc98] sm:$0xff]
    %v1810 = vld [vmem:[#allocation9 + $0xca0] sm:$0xff]
    %v1811 = vld [vmem:[#allocation9 + $0xca8] sm:$0xff]
    %v1812 = vld [vmem:[#allocation9 + $0xcb0] sm:$0xff]
    %v1813 = vld [vmem:[#allocation9 + $0xcb8] sm:$0xff]
    %v1814 = vld [vmem:[#allocation9 + $0xcc0] sm:$0xff]
    %v1815 = vld [vmem:[#allocation9 + $0xcc8] sm:$0xff]
    %v1816 = vld [vmem:[#allocation9 + $0xcd0] sm:$0xff]
    %v1817 = vld [vmem:[#allocation9 + $0xcd8] sm:$0xff]
    %v1818 = vld [vmem:[#allocation9 + $0xce0] sm:$0xff]
    %v1819 = vld [vmem:[#allocation9 + $0xce8] sm:$0xff]
    %v1820 = vld [vmem:[#allocation9 + $0xcf0] sm:$0xff]
    %v1821 = vld [vmem:[#allocation9 + $0xcf8] sm:$0xff]
    %v1822 = vld [vmem:[#allocation9 + $0xd00] sm:$0xff]
    %v1823 = vld [vmem:[#allocation9 + $0xd08] sm:$0xff]
    %v1824 = vld [vmem:[#allocation9 + $0xd10] sm:$0xff]
    %v1825 = vld [vmem:[#allocation9 + $0xd18] sm:$0xff]
    %v1826 = vld [vmem:[#allocation9 + $0xd20] sm:$0xff]
    %v1827 = vld [vmem:[#allocation9 + $0xd28] sm:$0xff]
    %v1828 = vld [vmem:[#allocation9 + $0xd30] sm:$0xff]
    %v1829 = vld [vmem:[#allocation9 + $0xd38] sm:$0xff]
    %v1830 = vld [vmem:[#allocation9 + $0xd40] sm:$0xff]
    %v1831 = vld [vmem:[#allocation9 + $0xd48] sm:$0xff]
    %v1832 = vld [vmem:[#allocation9 + $0xd50] sm:$0xff]
    %v1833 = vld [vmem:[#allocation9 + $0xd58] sm:$0xff]
    %v1834 = vld [vmem:[#allocation9 + $0xd60] sm:$0xff]
    %v1835 = vld [vmem:[#allocation9 + $0xd68] sm:$0xff]
    %v1836 = vld [vmem:[#allocation9 + $0xd70] sm:$0xff]
    %v1837 = vld [vmem:[#allocation9 + $0xd78] sm:$0xff]
    %v1838 = vld [vmem:[#allocation9 + $0xd80] sm:$0xff]
    %v1839 = vld [vmem:[#allocation9 + $0xd88] sm:$0xff]
    %v1840 = vld [vmem:[#allocation9 + $0xd90] sm:$0xff]
    %v1841 = vld [vmem:[#allocation9 + $0xd98] sm:$0xff]
    %v1842 = vld [vmem:[#allocation9 + $0xda0] sm:$0xff]
    %v1843 = vld [vmem:[#allocation9 + $0xda8] sm:$0xff]
    %v1844 = vld [vmem:[#allocation9 + $0xdb0] sm:$0xff]
    %v1845 = vld [vmem:[#allocation9 + $0xdb8] sm:$0xff]
    %v1846 = vld [vmem:[#allocation9 + $0xdc0] sm:$0xff]
    %v1847 = vld [vmem:[#allocation9 + $0xdc8] sm:$0xff]
    %v1848 = vld [vmem:[#allocation9 + $0xdd0] sm:$0xff]
    %v1849 = vld [vmem:[#allocation9 + $0xdd8] sm:$0xff]
    %v1850 = vld [vmem:[#allocation9 + $0xde0] sm:$0xff]
    %v1851 = vld [vmem:[#allocation9 + $0xde8] sm:$0xff]
    %v1852 = vld [vmem:[#allocation9 + $0xdf0] sm:$0xff]
    %v1853 = vld [vmem:[#allocation9 + $0xdf8] sm:$0xff]
    %v1854 = vld [vmem:[#allocation9 + $0xe00] sm:$0xff]
    %v1855 = vld [vmem:[#allocation9 + $0xe08] sm:$0xff]
    %v1856 = vld [vmem:[#allocation9 + $0xe10] sm:$0xff]
    %v1857 = vld [vmem:[#allocation9 + $0xe18] sm:$0xff]
    %v1858 = vld [vmem:[#allocation9 + $0xe20] sm:$0xff]
    %v1859 = vld [vmem:[#allocation9 + $0xe28] sm:$0xff]
    %v1860 = vld [vmem:[#allocation9 + $0xe30] sm:$0xff]
    %v1861 = vld [vmem:[#allocation9 + $0xe38] sm:$0xff]
    %v1862 = vld [vmem:[#allocation9 + $0xe40] sm:$0xff]
    %v1863 = vld [vmem:[#allocation9 + $0xe48] sm:$0xff]
    %v1864 = vld [vmem:[#allocation9 + $0xe50] sm:$0xff]
    %v1865 = vld [vmem:[#allocation9 + $0xe58] sm:$0xff]
    %v1866 = vld [vmem:[#allocation9 + $0xe60] sm:$0xff]
    %v1867 = vld [vmem:[#allocation9 + $0xe68] sm:$0xff]
    %v1868 = vld [vmem:[#allocation9 + $0xe70] sm:$0xff]
    %v1869 = vld [vmem:[#allocation9 + $0xe78] sm:$0xff]
    %v1870 = vld [vmem:[#allocation9 + $0xe80] sm:$0xff]
    %v1871 = vld [vmem:[#allocation9 + $0xe88] sm:$0xff]
    %v1872 = vld [vmem:[#allocation9 + $0xe90] sm:$0xff]
    %v1873 = vld [vmem:[#allocation9 + $0xe98] sm:$0xff]
    %v1874 = vld [vmem:[#allocation9 + $0xea0] sm:$0xff]
    %v1875 = vld [vmem:[#allocation9 + $0xea8] sm:$0xff]
    %v1876 = vld [vmem:[#allocation9 + $0xeb0] sm:$0xff]
    %v1877 = vld [vmem:[#allocation9 + $0xeb8] sm:$0xff]
    %v1878 = vld [vmem:[#allocation9 + $0xec0] sm:$0xff]
    %v1879 = vld [vmem:[#allocation9 + $0xec8] sm:$0xff]
    %v1880 = vld [vmem:[#allocation9 + $0xed0] sm:$0xff]
    %v1881 = vld [vmem:[#allocation9 + $0xed8] sm:$0xff]
    %v1882 = vld [vmem:[#allocation9 + $0xee0] sm:$0xff]
    %v1883 = vld [vmem:[#allocation9 + $0xee8] sm:$0xff]
    %v1884 = vld [vmem:[#allocation9 + $0xef0] sm:$0xff]
    %v1885 = vld [vmem:[#allocation9 + $0xef8] sm:$0xff]
    %v1886 = vld [vmem:[#allocation9 + $0xf00] sm:$0xff]
    %v1887 = vld [vmem:[#allocation9 + $0xf08] sm:$0xff]
    %v1888 = vld [vmem:[#allocation9 + $0xf10] sm:$0xff]
    %v1889 = vld [vmem:[#allocation9 + $0xf18] sm:$0xff]
    %v1890 = vld [vmem:[#allocation9 + $0xf20] sm:$0xff]
    %v1891 = vld [vmem:[#allocation9 + $0xf28] sm:$0xff]
    %v1892 = vld [vmem:[#allocation9 + $0xf30] sm:$0xff]
    %v1893 = vld [vmem:[#allocation9 + $0xf38] sm:$0xff]
    %v1894 = vld [vmem:[#allocation9 + $0xf40] sm:$0xff]
    %v1895 = vld [vmem:[#allocation9 + $0xf48] sm:$0xff]
    %v1896 = vld [vmem:[#allocation9 + $0xf50] sm:$0xff]
    %v1897 = vld [vmem:[#allocation9 + $0xf58] sm:$0xff]
    %v1898 = vld [vmem:[#allocation9 + $0xf60] sm:$0xff]
    %v1899 = vld [vmem:[#allocation9 + $0xf68] sm:$0xff]
    %v1900 = vld [vmem:[#allocation9 + $0xf70] sm:$0xff]
    %v1901 = vld [vmem:[#allocation9 + $0xf78] sm:$0xff]
    %v1902 = vld [vmem:[#allocation9 + $0xf80] sm:$0xff]
    %v1903 = vld [vmem:[#allocation9 + $0xf88] sm:$0xff]
    %v1904 = vld [vmem:[#allocation9 + $0xf90] sm:$0xff]
    %v1905 = vld [vmem:[#allocation9 + $0xf98] sm:$0xff]
    %v1906 = vld [vmem:[#allocation9 + $0xfa0] sm:$0xff]
    %v1907 = vld [vmem:[#allocation9 + $0xfa8] sm:$0xff]
    %v1908 = vld [vmem:[#allocation9 + $0xfb0] sm:$0xff]
    %v1909 = vld [vmem:[#allocation9 + $0xfb8] sm:$0xff]
    %v1910 = vld [vmem:[#allocation9 + $0xfc0] sm:$0xff]
    %v1911 = vld [vmem:[#allocation9 + $0xfc8] sm:$0xff]
    %v1912 = vld [vmem:[#allocation9 + $0xfd0] sm:$0xff]
    %v1913 = vld [vmem:[#allocation9 + $0xfd8] sm:$0xff]
    %v1914 = vld [vmem:[#allocation9 + $0xfe0] sm:$0xff]
    %v1915 = vld [vmem:[#allocation9 + $0xfe8] sm:$0xff]
    %v1916 = vld [vmem:[#allocation9 + $0xff0] sm:$0xff]
    %v1917 = vld [vmem:[#allocation9 + $0xff8] sm:$0xff]
    %v1918 = vld [vmem:[#allocation10] sm:$0xff]
    %v1919 = vld [vmem:[#allocation10 + $0x8] sm:$0xff]
    %v1922 = vperm.slane %v1918, 0
    %v1923 = vperm.slane %v1918, 1
    %v1924 = vperm.slane %v1918, 2
    %v1925 = vperm.slane %v1918, 3
    %v1926 = vperm.slane %v1918, 4
    %v1927 = vperm.slane %v1918, 5
    %v1928 = vperm.slane %v1918, 6
    %v1929 = vperm.slane %v1918, 7
    %v1930 = vperm.slane %v1919, 0
    %v1931 = vperm.slane %v1919, 1
    %v1932 = vperm.slane %v1919, 2
    %v1933 = vperm.slane %v1919, 3
    %v1934 = vperm.slane %v1919, 4
    %v1935 = vperm.slane %v1919, 5
    %v1936 = vperm.slane %v1919, 6
    %v1937 = vperm.slane %v1919, 7
    %v2466 = vunpack.c.l.b16 %v1406
    %v2467 = vunpack.c.h.b16 %v1406
    %v2468 = vunpack.c.l.b16 %v1407
    %v2469 = vunpack.c.h.b16 %v1407
    %v2470 = vunpack.c.l.b16 %v1408
    %v2471 = vunpack.c.h.b16 %v1408
    %v2472 = vunpack.c.l.b16 %v1409
    %v2473 = vunpack.c.h.b16 %v1409
    %v2474 = vunpack.c.l.b16 %v1410
    %v2475 = vunpack.c.h.b16 %v1410
    %v2476 = vunpack.c.l.b16 %v1411
    %v2477 = vunpack.c.h.b16 %v1411
    %v2478 = vunpack.c.l.b16 %v1412
    %v2479 = vunpack.c.h.b16 %v1412
    %v2480 = vunpack.c.l.b16 %v1413
    %v2481 = vunpack.c.h.b16 %v1413
    %v2482 = vunpack.c.l.b16 %v1414
    %v2483 = vunpack.c.h.b16 %v1414
    %v2484 = vunpack.c.l.b16 %v1415
    %v2485 = vunpack.c.h.b16 %v1415
    %v2486 = vunpack.c.l.b16 %v1416
    %v2487 = vunpack.c.h.b16 %v1416
    %v2488 = vunpack.c.l.b16 %v1417
    %v2489 = vunpack.c.h.b16 %v1417
    %v2490 = vunpack.c.l.b16 %v1418
    %v2491 = vunpack.c.h.b16 %v1418
    %v2492 = vunpack.c.l.b16 %v1419
    %v2493 = vunpack.c.h.b16 %v1419
    %v2494 = vunpack.c.l.b16 %v1420
    %v2495 = vunpack.c.h.b16 %v1420
    %v2496 = vunpack.c.l.b16 %v1421
    %v2497 = vunpack.c.h.b16 %v1421
    %v2498 = vunpack.c.l.b16 %v1422
    %v2499 = vunpack.c.h.b16 %v1422
    %v2500 = vunpack.c.l.b16 %v1423
    %v2501 = vunpack.c.h.b16 %v1423
    %v2502 = vunpack.c.l.b16 %v1424
    %v2503 = vunpack.c.h.b16 %v1424
    %v2504 = vunpack.c.l.b16 %v1425
    %v2505 = vunpack.c.h.b16 %v1425
    %v2506 = vunpack.c.l.b16 %v1426
    %v2507 = vunpack.c.h.b16 %v1426
    %v2508 = vunpack.c.l.b16 %v1427
    %v2509 = vunpack.c.h.b16 %v1427
    %v2510 = vunpack.c.l.b16 %v1428
    %v2511 = vunpack.c.h.b16 %v1428
    %v2512 = vunpack.c.l.b16 %v1429
    %v2513 = vunpack.c.h.b16 %v1429
    %v2514 = vunpack.c.l.b16 %v1430
    %v2515 = vunpack.c.h.b16 %v1430
    %v2516 = vunpack.c.l.b16 %v1431
    %v2517 = vunpack.c.h.b16 %v1431
    %v2518 = vunpack.c.l.b16 %v1432
    %v2519 = vunpack.c.h.b16 %v1432
    %v2520 = vunpack.c.l.b16 %v1433
    %v2521 = vunpack.c.h.b16 %v1433
    %v2522 = vunpack.c.l.b16 %v1434
    %v2523 = vunpack.c.h.b16 %v1434
    %v2524 = vunpack.c.l.b16 %v1435
    %v2525 = vunpack.c.h.b16 %v1435
    %v2526 = vunpack.c.l.b16 %v1436
    %v2527 = vunpack.c.h.b16 %v1436
    %v2528 = vunpack.c.l.b16 %v1437
    %v2529 = vunpack.c.h.b16 %v1437
    %v2530 = vunpack.c.l.b16 %v1438
    %v2531 = vunpack.c.h.b16 %v1438
    %v2532 = vunpack.c.l.b16 %v1439
    %v2533 = vunpack.c.h.b16 %v1439
    %v2534 = vunpack.c.l.b16 %v1440
    %v2535 = vunpack.c.h.b16 %v1440
    %v2536 = vunpack.c.l.b16 %v1441
    %v2537 = vunpack.c.h.b16 %v1441
    %v2538 = vunpack.c.l.b16 %v1442
    %v2539 = vunpack.c.h.b16 %v1442
    %v2540 = vunpack.c.l.b16 %v1443
    %v2541 = vunpack.c.h.b16 %v1443
    %v2542 = vunpack.c.l.b16 %v1444
    %v2543 = vunpack.c.h.b16 %v1444
    %v2544 = vunpack.c.l.b16 %v1445
    %v2545 = vunpack.c.h.b16 %v1445
    %v2546 = vunpack.c.l.b16 %v1446
    %v2547 = vunpack.c.h.b16 %v1446
    %v2548 = vunpack.c.l.b16 %v1447
    %v2549 = vunpack.c.h.b16 %v1447
    %v2550 = vunpack.c.l.b16 %v1448
    %v2551 = vunpack.c.h.b16 %v1448
    %v2552 = vunpack.c.l.b16 %v1449
    %v2553 = vunpack.c.h.b16 %v1449
    %v2554 = vunpack.c.l.b16 %v1450
    %v2555 = vunpack.c.h.b16 %v1450
    %v2556 = vunpack.c.l.b16 %v1451
    %v2557 = vunpack.c.h.b16 %v1451
    %v2558 = vunpack.c.l.b16 %v1452
    %v2559 = vunpack.c.h.b16 %v1452
    %v2560 = vunpack.c.l.b16 %v1453
    %v2561 = vunpack.c.h.b16 %v1453
    %v2562 = vunpack.c.l.b16 %v1454
    %v2563 = vunpack.c.h.b16 %v1454
    %v2564 = vunpack.c.l.b16 %v1455
    %v2565 = vunpack.c.h.b16 %v1455
    %v2566 = vunpack.c.l.b16 %v1456
    %v2567 = vunpack.c.h.b16 %v1456
    %v2568 = vunpack.c.l.b16 %v1457
    %v2569 = vunpack.c.h.b16 %v1457
    %v2570 = vunpack.c.l.b16 %v1458
    %v2571 = vunpack.c.h.b16 %v1458
    %v2572 = vunpack.c.l.b16 %v1459
    %v2573 = vunpack.c.h.b16 %v1459
    %v2574 = vunpack.c.l.b16 %v1460
    %v2575 = vunpack.c.h.b16 %v1460
    %v2576 = vunpack.c.l.b16 %v1461
    %v2577 = vunpack.c.h.b16 %v1461
    %v2578 = vunpack.c.l.b16 %v1462
    %v2579 = vunpack.c.h.b16 %v1462
    %v2580 = vunpack.c.l.b16 %v1463
    %v2581 = vunpack.c.h.b16 %v1463
    %v2582 = vunpack.c.l.b16 %v1464
    %v2583 = vunpack.c.h.b16 %v1464
    %v2584 = vunpack.c.l.b16 %v1465
    %v2585 = vunpack.c.h.b16 %v1465
    %v2586 = vunpack.c.l.b16 %v1466
    %v2587 = vunpack.c.h.b16 %v1466
    %v2588 = vunpack.c.l.b16 %v1467
    %v2589 = vunpack.c.h.b16 %v1467
    %v2590 = vunpack.c.l.b16 %v1468
    %v2591 = vunpack.c.h.b16 %v1468
    %v2592 = vunpack.c.l.b16 %v1469
    %v2593 = vunpack.c.h.b16 %v1469
    %v2594 = vunpack.c.l.b16 %v1470
    %v2595 = vunpack.c.h.b16 %v1470
    %v2596 = vunpack.c.l.b16 %v1471
    %v2597 = vunpack.c.h.b16 %v1471
    %v2598 = vunpack.c.l.b16 %v1472
    %v2599 = vunpack.c.h.b16 %v1472
    %v2600 = vunpack.c.l.b16 %v1473
    %v2601 = vunpack.c.h.b16 %v1473
    %v2602 = vunpack.c.l.b16 %v1474
    %v2603 = vunpack.c.h.b16 %v1474
    %v2604 = vunpack.c.l.b16 %v1475
    %v2605 = vunpack.c.h.b16 %v1475
    %v2606 = vunpack.c.l.b16 %v1476
    %v2607 = vunpack.c.h.b16 %v1476
    %v2608 = vunpack.c.l.b16 %v1477
    %v2609 = vunpack.c.h.b16 %v1477
    %v2610 = vunpack.c.l.b16 %v1478
    %v2611 = vunpack.c.h.b16 %v1478
    %v2612 = vunpack.c.l.b16 %v1479
    %v2613 = vunpack.c.h.b16 %v1479
    %v2614 = vunpack.c.l.b16 %v1480
    %v2615 = vunpack.c.h.b16 %v1480
    %v2616 = vunpack.c.l.b16 %v1481
    %v2617 = vunpack.c.h.b16 %v1481
    %v2618 = vunpack.c.l.b16 %v1482
    %v2619 = vunpack.c.h.b16 %v1482
    %v2620 = vunpack.c.l.b16 %v1483
    %v2621 = vunpack.c.h.b16 %v1483
    %v2622 = vunpack.c.l.b16 %v1484
    %v2623 = vunpack.c.h.b16 %v1484
    %v2624 = vunpack.c.l.b16 %v1485
    %v2625 = vunpack.c.h.b16 %v1485
    %v2626 = vunpack.c.l.b16 %v1486
    %v2627 = vunpack.c.h.b16 %v1486
    %v2628 = vunpack.c.l.b16 %v1487
    %v2629 = vunpack.c.h.b16 %v1487
    %v2630 = vunpack.c.l.b16 %v1488
    %v2631 = vunpack.c.h.b16 %v1488
    %v2632 = vunpack.c.l.b16 %v1489
    %v2633 = vunpack.c.h.b16 %v1489
    %v2634 = vunpack.c.l.b16 %v1490
    %v2635 = vunpack.c.h.b16 %v1490
    %v2636 = vunpack.c.l.b16 %v1491
    %v2637 = vunpack.c.h.b16 %v1491
    %v2638 = vunpack.c.l.b16 %v1492
    %v2639 = vunpack.c.h.b16 %v1492
    %v2640 = vunpack.c.l.b16 %v1493
    %v2641 = vunpack.c.h.b16 %v1493
    %v2642 = vunpack.c.l.b16 %v1494
    %v2643 = vunpack.c.h.b16 %v1494
    %v2644 = vunpack.c.l.b16 %v1495
    %v2645 = vunpack.c.h.b16 %v1495
    %v2646 = vunpack.c.l.b16 %v1496
    %v2647 = vunpack.c.h.b16 %v1496
    %v2648 = vunpack.c.l.b16 %v1497
    %v2649 = vunpack.c.h.b16 %v1497
    %v2650 = vunpack.c.l.b16 %v1498
    %v2651 = vunpack.c.h.b16 %v1498
    %v2652 = vunpack.c.l.b16 %v1499
    %v2653 = vunpack.c.h.b16 %v1499
    %v2654 = vunpack.c.l.b16 %v1500
    %v2655 = vunpack.c.h.b16 %v1500
    %v2656 = vunpack.c.l.b16 %v1501
    %v2657 = vunpack.c.h.b16 %v1501
    %v2658 = vunpack.c.l.b16 %v1502
    %v2659 = vunpack.c.h.b16 %v1502
    %v2660 = vunpack.c.l.b16 %v1503
    %v2661 = vunpack.c.h.b16 %v1503
    %v2662 = vunpack.c.l.b16 %v1504
    %v2663 = vunpack.c.h.b16 %v1504
    %v2664 = vunpack.c.l.b16 %v1505
    %v2665 = vunpack.c.h.b16 %v1505
    %v2666 = vunpack.c.l.b16 %v1506
    %v2667 = vunpack.c.h.b16 %v1506
    %v2668 = vunpack.c.l.b16 %v1507
    %v2669 = vunpack.c.h.b16 %v1507
    %v2670 = vunpack.c.l.b16 %v1508
    %v2671 = vunpack.c.h.b16 %v1508
    %v2672 = vunpack.c.l.b16 %v1509
    %v2673 = vunpack.c.h.b16 %v1509
    %v2674 = vunpack.c.l.b16 %v1510
    %v2675 = vunpack.c.h.b16 %v1510
    %v2676 = vunpack.c.l.b16 %v1511
    %v2677 = vunpack.c.h.b16 %v1511
    %v2678 = vunpack.c.l.b16 %v1512
    %v2679 = vunpack.c.h.b16 %v1512
    %v2680 = vunpack.c.l.b16 %v1513
    %v2681 = vunpack.c.h.b16 %v1513
    %v2682 = vunpack.c.l.b16 %v1514
    %v2683 = vunpack.c.h.b16 %v1514
    %v2684 = vunpack.c.l.b16 %v1515
    %v2685 = vunpack.c.h.b16 %v1515
    %v2686 = vunpack.c.l.b16 %v1516
    %v2687 = vunpack.c.h.b16 %v1516
    %v2688 = vunpack.c.l.b16 %v1517
    %v2689 = vunpack.c.h.b16 %v1517
    %v2690 = vunpack.c.l.b16 %v1518
    %v2691 = vunpack.c.h.b16 %v1518
    %v2692 = vunpack.c.l.b16 %v1519
    %v2693 = vunpack.c.h.b16 %v1519
    %v2694 = vunpack.c.l.b16 %v1520
    %v2695 = vunpack.c.h.b16 %v1520
    %v2696 = vunpack.c.l.b16 %v1521
    %v2697 = vunpack.c.h.b16 %v1521
    %v2698 = vunpack.c.l.b16 %v1522
    %v2699 = vunpack.c.h.b16 %v1522
    %v2700 = vunpack.c.l.b16 %v1523
    %v2701 = vunpack.c.h.b16 %v1523
    %v2702 = vunpack.c.l.b16 %v1524
    %v2703 = vunpack.c.h.b16 %v1524
    %v2704 = vunpack.c.l.b16 %v1525
    %v2705 = vunpack.c.h.b16 %v1525
    %v2706 = vunpack.c.l.b16 %v1526
    %v2707 = vunpack.c.h.b16 %v1526
    %v2708 = vunpack.c.l.b16 %v1527
    %v2709 = vunpack.c.h.b16 %v1527
    %v2710 = vunpack.c.l.b16 %v1528
    %v2711 = vunpack.c.h.b16 %v1528
    %v2712 = vunpack.c.l.b16 %v1529
    %v2713 = vunpack.c.h.b16 %v1529
    %v2714 = vunpack.c.l.b16 %v1530
    %v2715 = vunpack.c.h.b16 %v1530
    %v2716 = vunpack.c.l.b16 %v1531
    %v2717 = vunpack.c.h.b16 %v1531
    %v2718 = vunpack.c.l.b16 %v1532
    %v2719 = vunpack.c.h.b16 %v1532
    %v2720 = vunpack.c.l.b16 %v1533
    %v2721 = vunpack.c.h.b16 %v1533
    %v2722 = vunpack.c.l.b16 %v1534
    %v2723 = vunpack.c.h.b16 %v1534
    %v2724 = vunpack.c.l.b16 %v1535
    %v2725 = vunpack.c.h.b16 %v1535
    %v2726 = vunpack.c.l.b16 %v1536
    %v2727 = vunpack.c.h.b16 %v1536
    %v2728 = vunpack.c.l.b16 %v1537
    %v2729 = vunpack.c.h.b16 %v1537
    %v2730 = vunpack.c.l.b16 %v1538
    %v2731 = vunpack.c.h.b16 %v1538
    %v2732 = vunpack.c.l.b16 %v1539
    %v2733 = vunpack.c.h.b16 %v1539
    %v2734 = vunpack.c.l.b16 %v1540
    %v2735 = vunpack.c.h.b16 %v1540
    %v2736 = vunpack.c.l.b16 %v1541
    %v2737 = vunpack.c.h.b16 %v1541
    %v2738 = vunpack.c.l.b16 %v1542
    %v2739 = vunpack.c.h.b16 %v1542
    %v2740 = vunpack.c.l.b16 %v1543
    %v2741 = vunpack.c.h.b16 %v1543
    %v2742 = vunpack.c.l.b16 %v1544
    %v2743 = vunpack.c.h.b16 %v1544
    %v2744 = vunpack.c.l.b16 %v1545
    %v2745 = vunpack.c.h.b16 %v1545
    %v2746 = vunpack.c.l.b16 %v1546
    %v2747 = vunpack.c.h.b16 %v1546
    %v2748 = vunpack.c.l.b16 %v1547
    %v2749 = vunpack.c.h.b16 %v1547
    %v2750 = vunpack.c.l.b16 %v1548
    %v2751 = vunpack.c.h.b16 %v1548
    %v2752 = vunpack.c.l.b16 %v1549
    %v2753 = vunpack.c.h.b16 %v1549
    %v2754 = vunpack.c.l.b16 %v1550
    %v2755 = vunpack.c.h.b16 %v1550
    %v2756 = vunpack.c.l.b16 %v1551
    %v2757 = vunpack.c.h.b16 %v1551
    %v2758 = vunpack.c.l.b16 %v1552
    %v2759 = vunpack.c.h.b16 %v1552
    %v2760 = vunpack.c.l.b16 %v1553
    %v2761 = vunpack.c.h.b16 %v1553
    %v2762 = vunpack.c.l.b16 %v1554
    %v2763 = vunpack.c.h.b16 %v1554
    %v2764 = vunpack.c.l.b16 %v1555
    %v2765 = vunpack.c.h.b16 %v1555
    %v2766 = vunpack.c.l.b16 %v1556
    %v2767 = vunpack.c.h.b16 %v1556
    %v2768 = vunpack.c.l.b16 %v1557
    %v2769 = vunpack.c.h.b16 %v1557
    %v2770 = vunpack.c.l.b16 %v1558
    %v2771 = vunpack.c.h.b16 %v1558
    %v2772 = vunpack.c.l.b16 %v1559
    %v2773 = vunpack.c.h.b16 %v1559
    %v2774 = vunpack.c.l.b16 %v1560
    %v2775 = vunpack.c.h.b16 %v1560
    %v2776 = vunpack.c.l.b16 %v1561
    %v2777 = vunpack.c.h.b16 %v1561
    %v2778 = vunpack.c.l.b16 %v1562
    %v2779 = vunpack.c.h.b16 %v1562
    %v2780 = vunpack.c.l.b16 %v1563
    %v2781 = vunpack.c.h.b16 %v1563
    %v2782 = vunpack.c.l.b16 %v1564
    %v2783 = vunpack.c.h.b16 %v1564
    %v2784 = vunpack.c.l.b16 %v1565
    %v2785 = vunpack.c.h.b16 %v1565
    %v2786 = vunpack.c.l.b16 %v1566
    %v2787 = vunpack.c.h.b16 %v1566
    %v2788 = vunpack.c.l.b16 %v1567
    %v2789 = vunpack.c.h.b16 %v1567
    %v2790 = vunpack.c.l.b16 %v1568
    %v2791 = vunpack.c.h.b16 %v1568
    %v2792 = vunpack.c.l.b16 %v1569
    %v2793 = vunpack.c.h.b16 %v1569
    %v2794 = vunpack.c.l.b16 %v1570
    %v2795 = vunpack.c.h.b16 %v1570
    %v2796 = vunpack.c.l.b16 %v1571
    %v2797 = vunpack.c.h.b16 %v1571
    %v2798 = vunpack.c.l.b16 %v1572
    %v2799 = vunpack.c.h.b16 %v1572
    %v2800 = vunpack.c.l.b16 %v1573
    %v2801 = vunpack.c.h.b16 %v1573
    %v2802 = vunpack.c.l.b16 %v1574
    %v2803 = vunpack.c.h.b16 %v1574
    %v2804 = vunpack.c.l.b16 %v1575
    %v2805 = vunpack.c.h.b16 %v1575
    %v2806 = vunpack.c.l.b16 %v1576
    %v2807 = vunpack.c.h.b16 %v1576
    %v2808 = vunpack.c.l.b16 %v1577
    %v2809 = vunpack.c.h.b16 %v1577
    %v2810 = vunpack.c.l.b16 %v1578
    %v2811 = vunpack.c.h.b16 %v1578
    %v2812 = vunpack.c.l.b16 %v1579
    %v2813 = vunpack.c.h.b16 %v1579
    %v2814 = vunpack.c.l.b16 %v1580
    %v2815 = vunpack.c.h.b16 %v1580
    %v2816 = vunpack.c.l.b16 %v1581
    %v2817 = vunpack.c.h.b16 %v1581
    %v2818 = vunpack.c.l.b16 %v1582
    %v2819 = vunpack.c.h.b16 %v1582
    %v2820 = vunpack.c.l.b16 %v1583
    %v2821 = vunpack.c.h.b16 %v1583
    %v2822 = vunpack.c.l.b16 %v1584
    %v2823 = vunpack.c.h.b16 %v1584
    %v2824 = vunpack.c.l.b16 %v1585
    %v2825 = vunpack.c.h.b16 %v1585
    %v2826 = vunpack.c.l.b16 %v1586
    %v2827 = vunpack.c.h.b16 %v1586
    %v2828 = vunpack.c.l.b16 %v1587
    %v2829 = vunpack.c.h.b16 %v1587
    %v2830 = vunpack.c.l.b16 %v1588
    %v2831 = vunpack.c.h.b16 %v1588
    %v2832 = vunpack.c.l.b16 %v1589
    %v2833 = vunpack.c.h.b16 %v1589
    %v2834 = vunpack.c.l.b16 %v1590
    %v2835 = vunpack.c.h.b16 %v1590
    %v2836 = vunpack.c.l.b16 %v1591
    %v2837 = vunpack.c.h.b16 %v1591
    %v2838 = vunpack.c.l.b16 %v1592
    %v2839 = vunpack.c.h.b16 %v1592
    %v2840 = vunpack.c.l.b16 %v1593
    %v2841 = vunpack.c.h.b16 %v1593
    %v2842 = vunpack.c.l.b16 %v1594
    %v2843 = vunpack.c.h.b16 %v1594
    %v2844 = vunpack.c.l.b16 %v1595
    %v2845 = vunpack.c.h.b16 %v1595
    %v2846 = vunpack.c.l.b16 %v1596
    %v2847 = vunpack.c.h.b16 %v1596
    %v2848 = vunpack.c.l.b16 %v1597
    %v2849 = vunpack.c.h.b16 %v1597
    %v2850 = vunpack.c.l.b16 %v1598
    %v2851 = vunpack.c.h.b16 %v1598
    %v2852 = vunpack.c.l.b16 %v1599
    %v2853 = vunpack.c.h.b16 %v1599
    %v2854 = vunpack.c.l.b16 %v1600
    %v2855 = vunpack.c.h.b16 %v1600
    %v2856 = vunpack.c.l.b16 %v1601
    %v2857 = vunpack.c.h.b16 %v1601
    %v2858 = vunpack.c.l.b16 %v1602
    %v2859 = vunpack.c.h.b16 %v1602
    %v2860 = vunpack.c.l.b16 %v1603
    %v2861 = vunpack.c.h.b16 %v1603
    %v2862 = vunpack.c.l.b16 %v1604
    %v2863 = vunpack.c.h.b16 %v1604
    %v2864 = vunpack.c.l.b16 %v1605
    %v2865 = vunpack.c.h.b16 %v1605
    %v2866 = vunpack.c.l.b16 %v1606
    %v2867 = vunpack.c.h.b16 %v1606
    %v2868 = vunpack.c.l.b16 %v1607
    %v2869 = vunpack.c.h.b16 %v1607
    %v2870 = vunpack.c.l.b16 %v1608
    %v2871 = vunpack.c.h.b16 %v1608
    %v2872 = vunpack.c.l.b16 %v1609
    %v2873 = vunpack.c.h.b16 %v1609
    %v2874 = vunpack.c.l.b16 %v1610
    %v2875 = vunpack.c.h.b16 %v1610
    %v2876 = vunpack.c.l.b16 %v1611
    %v2877 = vunpack.c.h.b16 %v1611
    %v2878 = vunpack.c.l.b16 %v1612
    %v2879 = vunpack.c.h.b16 %v1612
    %v2880 = vunpack.c.l.b16 %v1613
    %v2881 = vunpack.c.h.b16 %v1613
    %v2882 = vunpack.c.l.b16 %v1614
    %v2883 = vunpack.c.h.b16 %v1614
    %v2884 = vunpack.c.l.b16 %v1615
    %v2885 = vunpack.c.h.b16 %v1615
    %v2886 = vunpack.c.l.b16 %v1616
    %v2887 = vunpack.c.h.b16 %v1616
    %v2888 = vunpack.c.l.b16 %v1617
    %v2889 = vunpack.c.h.b16 %v1617
    %v2890 = vunpack.c.l.b16 %v1618
    %v2891 = vunpack.c.h.b16 %v1618
    %v2892 = vunpack.c.l.b16 %v1619
    %v2893 = vunpack.c.h.b16 %v1619
    %v2894 = vunpack.c.l.b16 %v1620
    %v2895 = vunpack.c.h.b16 %v1620
    %v2896 = vunpack.c.l.b16 %v1621
    %v2897 = vunpack.c.h.b16 %v1621
    %v2898 = vunpack.c.l.b16 %v1622
    %v2899 = vunpack.c.h.b16 %v1622
    %v2900 = vunpack.c.l.b16 %v1623
    %v2901 = vunpack.c.h.b16 %v1623
    %v2902 = vunpack.c.l.b16 %v1624
    %v2903 = vunpack.c.h.b16 %v1624
    %v2904 = vunpack.c.l.b16 %v1625
    %v2905 = vunpack.c.h.b16 %v1625
    %v2906 = vunpack.c.l.b16 %v1626
    %v2907 = vunpack.c.h.b16 %v1626
    %v2908 = vunpack.c.l.b16 %v1627
    %v2909 = vunpack.c.h.b16 %v1627
    %v2910 = vunpack.c.l.b16 %v1628
    %v2911 = vunpack.c.h.b16 %v1628
    %v2912 = vunpack.c.l.b16 %v1629
    %v2913 = vunpack.c.h.b16 %v1629
    %v2914 = vunpack.c.l.b16 %v1630
    %v2915 = vunpack.c.h.b16 %v1630
    %v2916 = vunpack.c.l.b16 %v1631
    %v2917 = vunpack.c.h.b16 %v1631
    %v2918 = vunpack.c.l.b16 %v1632
    %v2919 = vunpack.c.h.b16 %v1632
    %v2920 = vunpack.c.l.b16 %v1633
    %v2921 = vunpack.c.h.b16 %v1633
    %v2922 = vunpack.c.l.b16 %v1634
    %v2923 = vunpack.c.h.b16 %v1634
    %v2924 = vunpack.c.l.b16 %v1635
    %v2925 = vunpack.c.h.b16 %v1635
    %v2926 = vunpack.c.l.b16 %v1636
    %v2927 = vunpack.c.h.b16 %v1636
    %v2928 = vunpack.c.l.b16 %v1637
    %v2929 = vunpack.c.h.b16 %v1637
    %v2930 = vunpack.c.l.b16 %v1638
    %v2931 = vunpack.c.h.b16 %v1638
    %v2932 = vunpack.c.l.b16 %v1639
    %v2933 = vunpack.c.h.b16 %v1639
    %v2934 = vunpack.c.l.b16 %v1640
    %v2935 = vunpack.c.h.b16 %v1640
    %v2936 = vunpack.c.l.b16 %v1641
    %v2937 = vunpack.c.h.b16 %v1641
    %v2938 = vunpack.c.l.b16 %v1642
    %v2939 = vunpack.c.h.b16 %v1642
    %v2940 = vunpack.c.l.b16 %v1643
    %v2941 = vunpack.c.h.b16 %v1643
    %v2942 = vunpack.c.l.b16 %v1644
    %v2943 = vunpack.c.h.b16 %v1644
    %v2944 = vunpack.c.l.b16 %v1645
    %v2945 = vunpack.c.h.b16 %v1645
    %v2946 = vunpack.c.l.b16 %v1646
    %v2947 = vunpack.c.h.b16 %v1646
    %v2948 = vunpack.c.l.b16 %v1647
    %v2949 = vunpack.c.h.b16 %v1647
    %v2950 = vunpack.c.l.b16 %v1648
    %v2951 = vunpack.c.h.b16 %v1648
    %v2952 = vunpack.c.l.b16 %v1649
    %v2953 = vunpack.c.h.b16 %v1649
    %v2954 = vunpack.c.l.b16 %v1650
    %v2955 = vunpack.c.h.b16 %v1650
    %v2956 = vunpack.c.l.b16 %v1651
    %v2957 = vunpack.c.h.b16 %v1651
    %v2958 = vunpack.c.l.b16 %v1652
    %v2959 = vunpack.c.h.b16 %v1652
    %v2960 = vunpack.c.l.b16 %v1653
    %v2961 = vunpack.c.h.b16 %v1653
    %v2962 = vunpack.c.l.b16 %v1654
    %v2963 = vunpack.c.h.b16 %v1654
    %v2964 = vunpack.c.l.b16 %v1655
    %v2965 = vunpack.c.h.b16 %v1655
    %v2966 = vunpack.c.l.b16 %v1656
    %v2967 = vunpack.c.h.b16 %v1656
    %v2968 = vunpack.c.l.b16 %v1657
    %v2969 = vunpack.c.h.b16 %v1657
    %v2970 = vunpack.c.l.b16 %v1658
    %v2971 = vunpack.c.h.b16 %v1658
    %v2972 = vunpack.c.l.b16 %v1659
    %v2973 = vunpack.c.h.b16 %v1659
    %v2974 = vunpack.c.l.b16 %v1660
    %v2975 = vunpack.c.h.b16 %v1660
    %v2976 = vunpack.c.l.b16 %v1661
    %v2977 = vunpack.c.h.b16 %v1661
    %v2978 = vunpack.c.l.b16 %v1662
    %v2979 = vunpack.c.h.b16 %v1662
    %v2980 = vunpack.c.l.b16 %v1663
    %v2981 = vunpack.c.h.b16 %v1663
    %v2982 = vunpack.c.l.b16 %v1664
    %v2983 = vunpack.c.h.b16 %v1664
    %v2984 = vunpack.c.l.b16 %v1665
    %v2985 = vunpack.c.h.b16 %v1665
    %v2986 = vunpack.c.l.b16 %v1666
    %v2987 = vunpack.c.h.b16 %v1666
    %v2988 = vunpack.c.l.b16 %v1667
    %v2989 = vunpack.c.h.b16 %v1667
    %v2990 = vunpack.c.l.b16 %v1668
    %v2991 = vunpack.c.h.b16 %v1668
    %v2992 = vunpack.c.l.b16 %v1669
    %v2993 = vunpack.c.h.b16 %v1669
    %v2994 = vunpack.c.l.b16 %v1670
    %v2995 = vunpack.c.h.b16 %v1670
    %v2996 = vunpack.c.l.b16 %v1671
    %v2997 = vunpack.c.h.b16 %v1671
    %v2998 = vunpack.c.l.b16 %v1672
    %v2999 = vunpack.c.h.b16 %v1672
    %v3000 = vunpack.c.l.b16 %v1673
    %v3001 = vunpack.c.h.b16 %v1673
    %v3002 = vunpack.c.l.b16 %v1674
    %v3003 = vunpack.c.h.b16 %v1674
    %v3004 = vunpack.c.l.b16 %v1675
    %v3005 = vunpack.c.h.b16 %v1675
    %v3006 = vunpack.c.l.b16 %v1676
    %v3007 = vunpack.c.h.b16 %v1676
    %v3008 = vunpack.c.l.b16 %v1677
    %v3009 = vunpack.c.h.b16 %v1677
    %v3010 = vunpack.c.l.b16 %v1678
    %v3011 = vunpack.c.h.b16 %v1678
    %v3012 = vunpack.c.l.b16 %v1679
    %v3013 = vunpack.c.h.b16 %v1679
    %v3014 = vunpack.c.l.b16 %v1680
    %v3015 = vunpack.c.h.b16 %v1680
    %v3016 = vunpack.c.l.b16 %v1681
    %v3017 = vunpack.c.h.b16 %v1681
    %v3018 = vunpack.c.l.b16 %v1682
    %v3019 = vunpack.c.h.b16 %v1682
    %v3020 = vunpack.c.l.b16 %v1683
    %v3021 = vunpack.c.h.b16 %v1683
    %v3022 = vunpack.c.l.b16 %v1684
    %v3023 = vunpack.c.h.b16 %v1684
    %v3024 = vunpack.c.l.b16 %v1685
    %v3025 = vunpack.c.h.b16 %v1685
    %v3026 = vunpack.c.l.b16 %v1686
    %v3027 = vunpack.c.h.b16 %v1686
    %v3028 = vunpack.c.l.b16 %v1687
    %v3029 = vunpack.c.h.b16 %v1687
    %v3030 = vunpack.c.l.b16 %v1688
    %v3031 = vunpack.c.h.b16 %v1688
    %v3032 = vunpack.c.l.b16 %v1689
    %v3033 = vunpack.c.h.b16 %v1689
    %v3034 = vunpack.c.l.b16 %v1690
    %v3035 = vunpack.c.h.b16 %v1690
    %v3036 = vunpack.c.l.b16 %v1691
    %v3037 = vunpack.c.h.b16 %v1691
    %v3038 = vunpack.c.l.b16 %v1692
    %v3039 = vunpack.c.h.b16 %v1692
    %v3040 = vunpack.c.l.b16 %v1693
    %v3041 = vunpack.c.h.b16 %v1693
    %v3042 = vunpack.c.l.b16 %v1694
    %v3043 = vunpack.c.h.b16 %v1694
    %v3044 = vunpack.c.l.b16 %v1695
    %v3045 = vunpack.c.h.b16 %v1695
    %v3046 = vunpack.c.l.b16 %v1696
    %v3047 = vunpack.c.h.b16 %v1696
    %v3048 = vunpack.c.l.b16 %v1697
    %v3049 = vunpack.c.h.b16 %v1697
    %v3050 = vunpack.c.l.b16 %v1698
    %v3051 = vunpack.c.h.b16 %v1698
    %v3052 = vunpack.c.l.b16 %v1699
    %v3053 = vunpack.c.h.b16 %v1699
    %v3054 = vunpack.c.l.b16 %v1700
    %v3055 = vunpack.c.h.b16 %v1700
    %v3056 = vunpack.c.l.b16 %v1701
    %v3057 = vunpack.c.h.b16 %v1701
    %v3058 = vunpack.c.l.b16 %v1702
    %v3059 = vunpack.c.h.b16 %v1702
    %v3060 = vunpack.c.l.b16 %v1703
    %v3061 = vunpack.c.h.b16 %v1703
    %v3062 = vunpack.c.l.b16 %v1704
    %v3063 = vunpack.c.h.b16 %v1704
    %v3064 = vunpack.c.l.b16 %v1705
    %v3065 = vunpack.c.h.b16 %v1705
    %v3066 = vunpack.c.l.b16 %v1706
    %v3067 = vunpack.c.h.b16 %v1706
    %v3068 = vunpack.c.l.b16 %v1707
    %v3069 = vunpack.c.h.b16 %v1707
    %v3070 = vunpack.c.l.b16 %v1708
    %v3071 = vunpack.c.h.b16 %v1708
    %v3072 = vunpack.c.l.b16 %v1709
    %v3073 = vunpack.c.h.b16 %v1709
    %v3074 = vunpack.c.l.b16 %v1710
    %v3075 = vunpack.c.h.b16 %v1710
    %v3076 = vunpack.c.l.b16 %v1711
    %v3077 = vunpack.c.h.b16 %v1711
    %v3078 = vunpack.c.l.b16 %v1712
    %v3079 = vunpack.c.h.b16 %v1712
    %v3080 = vunpack.c.l.b16 %v1713
    %v3081 = vunpack.c.h.b16 %v1713
    %v3082 = vunpack.c.l.b16 %v1714
    %v3083 = vunpack.c.h.b16 %v1714
    %v3084 = vunpack.c.l.b16 %v1715
    %v3085 = vunpack.c.h.b16 %v1715
    %v3086 = vunpack.c.l.b16 %v1716
    %v3087 = vunpack.c.h.b16 %v1716
    %v3088 = vunpack.c.l.b16 %v1717
    %v3089 = vunpack.c.h.b16 %v1717
    %v3090 = vunpack.c.l.b16 %v1718
    %v3091 = vunpack.c.h.b16 %v1718
    %v3092 = vunpack.c.l.b16 %v1719
    %v3093 = vunpack.c.h.b16 %v1719
    %v3094 = vunpack.c.l.b16 %v1720
    %v3095 = vunpack.c.h.b16 %v1720
    %v3096 = vunpack.c.l.b16 %v1721
    %v3097 = vunpack.c.h.b16 %v1721
    %v3098 = vunpack.c.l.b16 %v1722
    %v3099 = vunpack.c.h.b16 %v1722
    %v3100 = vunpack.c.l.b16 %v1723
    %v3101 = vunpack.c.h.b16 %v1723
    %v3102 = vunpack.c.l.b16 %v1724
    %v3103 = vunpack.c.h.b16 %v1724
    %v3104 = vunpack.c.l.b16 %v1725
    %v3105 = vunpack.c.h.b16 %v1725
    %v3106 = vunpack.c.l.b16 %v1726
    %v3107 = vunpack.c.h.b16 %v1726
    %v3108 = vunpack.c.l.b16 %v1727
    %v3109 = vunpack.c.h.b16 %v1727
    %v3110 = vunpack.c.l.b16 %v1728
    %v3111 = vunpack.c.h.b16 %v1728
    %v3112 = vunpack.c.l.b16 %v1729
    %v3113 = vunpack.c.h.b16 %v1729
    %v3114 = vunpack.c.l.b16 %v1730
    %v3115 = vunpack.c.h.b16 %v1730
    %v3116 = vunpack.c.l.b16 %v1731
    %v3117 = vunpack.c.h.b16 %v1731
    %v3118 = vunpack.c.l.b16 %v1732
    %v3119 = vunpack.c.h.b16 %v1732
    %v3120 = vunpack.c.l.b16 %v1733
    %v3121 = vunpack.c.h.b16 %v1733
    %v3122 = vunpack.c.l.b16 %v1734
    %v3123 = vunpack.c.h.b16 %v1734
    %v3124 = vunpack.c.l.b16 %v1735
    %v3125 = vunpack.c.h.b16 %v1735
    %v3126 = vunpack.c.l.b16 %v1736
    %v3127 = vunpack.c.h.b16 %v1736
    %v3128 = vunpack.c.l.b16 %v1737
    %v3129 = vunpack.c.h.b16 %v1737
    %v3130 = vunpack.c.l.b16 %v1738
    %v3131 = vunpack.c.h.b16 %v1738
    %v3132 = vunpack.c.l.b16 %v1739
    %v3133 = vunpack.c.h.b16 %v1739
    %v3134 = vunpack.c.l.b16 %v1740
    %v3135 = vunpack.c.h.b16 %v1740
    %v3136 = vunpack.c.l.b16 %v1741
    %v3137 = vunpack.c.h.b16 %v1741
    %v3138 = vunpack.c.l.b16 %v1742
    %v3139 = vunpack.c.h.b16 %v1742
    %v3140 = vunpack.c.l.b16 %v1743
    %v3141 = vunpack.c.h.b16 %v1743
    %v3142 = vunpack.c.l.b16 %v1744
    %v3143 = vunpack.c.h.b16 %v1744
    %v3144 = vunpack.c.l.b16 %v1745
    %v3145 = vunpack.c.h.b16 %v1745
    %v3146 = vunpack.c.l.b16 %v1746
    %v3147 = vunpack.c.h.b16 %v1746
    %v3148 = vunpack.c.l.b16 %v1747
    %v3149 = vunpack.c.h.b16 %v1747
    %v3150 = vunpack.c.l.b16 %v1748
    %v3151 = vunpack.c.h.b16 %v1748
    %v3152 = vunpack.c.l.b16 %v1749
    %v3153 = vunpack.c.h.b16 %v1749
    %v3154 = vunpack.c.l.b16 %v1750
    %v3155 = vunpack.c.h.b16 %v1750
    %v3156 = vunpack.c.l.b16 %v1751
    %v3157 = vunpack.c.h.b16 %v1751
    %v3158 = vunpack.c.l.b16 %v1752
    %v3159 = vunpack.c.h.b16 %v1752
    %v3160 = vunpack.c.l.b16 %v1753
    %v3161 = vunpack.c.h.b16 %v1753
    %v3162 = vunpack.c.l.b16 %v1754
    %v3163 = vunpack.c.h.b16 %v1754
    %v3164 = vunpack.c.l.b16 %v1755
    %v3165 = vunpack.c.h.b16 %v1755
    %v3166 = vunpack.c.l.b16 %v1756
    %v3167 = vunpack.c.h.b16 %v1756
    %v3168 = vunpack.c.l.b16 %v1757
    %v3169 = vunpack.c.h.b16 %v1757
    %v3170 = vunpack.c.l.b16 %v1758
    %v3171 = vunpack.c.h.b16 %v1758
    %v3172 = vunpack.c.l.b16 %v1759
    %v3173 = vunpack.c.h.b16 %v1759
    %v3174 = vunpack.c.l.b16 %v1760
    %v3175 = vunpack.c.h.b16 %v1760
    %v3176 = vunpack.c.l.b16 %v1761
    %v3177 = vunpack.c.h.b16 %v1761
    %v3178 = vunpack.c.l.b16 %v1762
    %v3179 = vunpack.c.h.b16 %v1762
    %v3180 = vunpack.c.l.b16 %v1763
    %v3181 = vunpack.c.h.b16 %v1763
    %v3182 = vunpack.c.l.b16 %v1764
    %v3183 = vunpack.c.h.b16 %v1764
    %v3184 = vunpack.c.l.b16 %v1765
    %v3185 = vunpack.c.h.b16 %v1765
    %v3186 = vunpack.c.l.b16 %v1766
    %v3187 = vunpack.c.h.b16 %v1766
    %v3188 = vunpack.c.l.b16 %v1767
    %v3189 = vunpack.c.h.b16 %v1767
    %v3190 = vunpack.c.l.b16 %v1768
    %v3191 = vunpack.c.h.b16 %v1768
    %v3192 = vunpack.c.l.b16 %v1769
    %v3193 = vunpack.c.h.b16 %v1769
    %v3194 = vunpack.c.l.b16 %v1770
    %v3195 = vunpack.c.h.b16 %v1770
    %v3196 = vunpack.c.l.b16 %v1771
    %v3197 = vunpack.c.h.b16 %v1771
    %v3198 = vunpack.c.l.b16 %v1772
    %v3199 = vunpack.c.h.b16 %v1772
    %v3200 = vunpack.c.l.b16 %v1773
    %v3201 = vunpack.c.h.b16 %v1773
    %v3202 = vunpack.c.l.b16 %v1774
    %v3203 = vunpack.c.h.b16 %v1774
    %v3204 = vunpack.c.l.b16 %v1775
    %v3205 = vunpack.c.h.b16 %v1775
    %v3206 = vunpack.c.l.b16 %v1776
    %v3207 = vunpack.c.h.b16 %v1776
    %v3208 = vunpack.c.l.b16 %v1777
    %v3209 = vunpack.c.h.b16 %v1777
    %v3210 = vunpack.c.l.b16 %v1778
    %v3211 = vunpack.c.h.b16 %v1778
    %v3212 = vunpack.c.l.b16 %v1779
    %v3213 = vunpack.c.h.b16 %v1779
    %v3214 = vunpack.c.l.b16 %v1780
    %v3215 = vunpack.c.h.b16 %v1780
    %v3216 = vunpack.c.l.b16 %v1781
    %v3217 = vunpack.c.h.b16 %v1781
    %v3218 = vunpack.c.l.b16 %v1782
    %v3219 = vunpack.c.h.b16 %v1782
    %v3220 = vunpack.c.l.b16 %v1783
    %v3221 = vunpack.c.h.b16 %v1783
    %v3222 = vunpack.c.l.b16 %v1784
    %v3223 = vunpack.c.h.b16 %v1784
    %v3224 = vunpack.c.l.b16 %v1785
    %v3225 = vunpack.c.h.b16 %v1785
    %v3226 = vunpack.c.l.b16 %v1786
    %v3227 = vunpack.c.h.b16 %v1786
    %v3228 = vunpack.c.l.b16 %v1787
    %v3229 = vunpack.c.h.b16 %v1787
    %v3230 = vunpack.c.l.b16 %v1788
    %v3231 = vunpack.c.h.b16 %v1788
    %v3232 = vunpack.c.l.b16 %v1789
    %v3233 = vunpack.c.h.b16 %v1789
    %v3234 = vunpack.c.l.b16 %v1790
    %v3235 = vunpack.c.h.b16 %v1790
    %v3236 = vunpack.c.l.b16 %v1791
    %v3237 = vunpack.c.h.b16 %v1791
    %v3238 = vunpack.c.l.b16 %v1792
    %v3239 = vunpack.c.h.b16 %v1792
    %v3240 = vunpack.c.l.b16 %v1793
    %v3241 = vunpack.c.h.b16 %v1793
    %v3242 = vunpack.c.l.b16 %v1794
    %v3243 = vunpack.c.h.b16 %v1794
    %v3244 = vunpack.c.l.b16 %v1795
    %v3245 = vunpack.c.h.b16 %v1795
    %v3246 = vunpack.c.l.b16 %v1796
    %v3247 = vunpack.c.h.b16 %v1796
    %v3248 = vunpack.c.l.b16 %v1797
    %v3249 = vunpack.c.h.b16 %v1797
    %v3250 = vunpack.c.l.b16 %v1798
    %v3251 = vunpack.c.h.b16 %v1798
    %v3252 = vunpack.c.l.b16 %v1799
    %v3253 = vunpack.c.h.b16 %v1799
    %v3254 = vunpack.c.l.b16 %v1800
    %v3255 = vunpack.c.h.b16 %v1800
    %v3256 = vunpack.c.l.b16 %v1801
    %v3257 = vunpack.c.h.b16 %v1801
    %v3258 = vunpack.c.l.b16 %v1802
    %v3259 = vunpack.c.h.b16 %v1802
    %v3260 = vunpack.c.l.b16 %v1803
    %v3261 = vunpack.c.h.b16 %v1803
    %v3262 = vunpack.c.l.b16 %v1804
    %v3263 = vunpack.c.h.b16 %v1804
    %v3264 = vunpack.c.l.b16 %v1805
    %v3265 = vunpack.c.h.b16 %v1805
    %v3266 = vunpack.c.l.b16 %v1806
    %v3267 = vunpack.c.h.b16 %v1806
    %v3268 = vunpack.c.l.b16 %v1807
    %v3269 = vunpack.c.h.b16 %v1807
    %v3270 = vunpack.c.l.b16 %v1808
    %v3271 = vunpack.c.h.b16 %v1808
    %v3272 = vunpack.c.l.b16 %v1809
    %v3273 = vunpack.c.h.b16 %v1809
    %v3274 = vunpack.c.l.b16 %v1810
    %v3275 = vunpack.c.h.b16 %v1810
    %v3276 = vunpack.c.l.b16 %v1811
    %v3277 = vunpack.c.h.b16 %v1811
    %v3278 = vunpack.c.l.b16 %v1812
    %v3279 = vunpack.c.h.b16 %v1812
    %v3280 = vunpack.c.l.b16 %v1813
    %v3281 = vunpack.c.h.b16 %v1813
    %v3282 = vunpack.c.l.b16 %v1814
    %v3283 = vunpack.c.h.b16 %v1814
    %v3284 = vunpack.c.l.b16 %v1815
    %v3285 = vunpack.c.h.b16 %v1815
    %v3286 = vunpack.c.l.b16 %v1816
    %v3287 = vunpack.c.h.b16 %v1816
    %v3288 = vunpack.c.l.b16 %v1817
    %v3289 = vunpack.c.h.b16 %v1817
    %v3290 = vunpack.c.l.b16 %v1818
    %v3291 = vunpack.c.h.b16 %v1818
    %v3292 = vunpack.c.l.b16 %v1819
    %v3293 = vunpack.c.h.b16 %v1819
    %v3294 = vunpack.c.l.b16 %v1820
    %v3295 = vunpack.c.h.b16 %v1820
    %v3296 = vunpack.c.l.b16 %v1821
    %v3297 = vunpack.c.h.b16 %v1821
    %v3298 = vunpack.c.l.b16 %v1822
    %v3299 = vunpack.c.h.b16 %v1822
    %v3300 = vunpack.c.l.b16 %v1823
    %v3301 = vunpack.c.h.b16 %v1823
    %v3302 = vunpack.c.l.b16 %v1824
    %v3303 = vunpack.c.h.b16 %v1824
    %v3304 = vunpack.c.l.b16 %v1825
    %v3305 = vunpack.c.h.b16 %v1825
    %v3306 = vunpack.c.l.b16 %v1826
    %v3307 = vunpack.c.h.b16 %v1826
    %v3308 = vunpack.c.l.b16 %v1827
    %v3309 = vunpack.c.h.b16 %v1827
    %v3310 = vunpack.c.l.b16 %v1828
    %v3311 = vunpack.c.h.b16 %v1828
    %v3312 = vunpack.c.l.b16 %v1829
    %v3313 = vunpack.c.h.b16 %v1829
    %v3314 = vunpack.c.l.b16 %v1830
    %v3315 = vunpack.c.h.b16 %v1830
    %v3316 = vunpack.c.l.b16 %v1831
    %v3317 = vunpack.c.h.b16 %v1831
    %v3318 = vunpack.c.l.b16 %v1832
    %v3319 = vunpack.c.h.b16 %v1832
    %v3320 = vunpack.c.l.b16 %v1833
    %v3321 = vunpack.c.h.b16 %v1833
    %v3322 = vunpack.c.l.b16 %v1834
    %v3323 = vunpack.c.h.b16 %v1834
    %v3324 = vunpack.c.l.b16 %v1835
    %v3325 = vunpack.c.h.b16 %v1835
    %v3326 = vunpack.c.l.b16 %v1836
    %v3327 = vunpack.c.h.b16 %v1836
    %v3328 = vunpack.c.l.b16 %v1837
    %v3329 = vunpack.c.h.b16 %v1837
    %v3330 = vunpack.c.l.b16 %v1838
    %v3331 = vunpack.c.h.b16 %v1838
    %v3332 = vunpack.c.l.b16 %v1839
    %v3333 = vunpack.c.h.b16 %v1839
    %v3334 = vunpack.c.l.b16 %v1840
    %v3335 = vunpack.c.h.b16 %v1840
    %v3336 = vunpack.c.l.b16 %v1841
    %v3337 = vunpack.c.h.b16 %v1841
    %v3338 = vunpack.c.l.b16 %v1842
    %v3339 = vunpack.c.h.b16 %v1842
    %v3340 = vunpack.c.l.b16 %v1843
    %v3341 = vunpack.c.h.b16 %v1843
    %v3342 = vunpack.c.l.b16 %v1844
    %v3343 = vunpack.c.h.b16 %v1844
    %v3344 = vunpack.c.l.b16 %v1845
    %v3345 = vunpack.c.h.b16 %v1845
    %v3346 = vunpack.c.l.b16 %v1846
    %v3347 = vunpack.c.h.b16 %v1846
    %v3348 = vunpack.c.l.b16 %v1847
    %v3349 = vunpack.c.h.b16 %v1847
    %v3350 = vunpack.c.l.b16 %v1848
    %v3351 = vunpack.c.h.b16 %v1848
    %v3352 = vunpack.c.l.b16 %v1849
    %v3353 = vunpack.c.h.b16 %v1849
    %v3354 = vunpack.c.l.b16 %v1850
    %v3355 = vunpack.c.h.b16 %v1850
    %v3356 = vunpack.c.l.b16 %v1851
    %v3357 = vunpack.c.h.b16 %v1851
    %v3358 = vunpack.c.l.b16 %v1852
    %v3359 = vunpack.c.h.b16 %v1852
    %v3360 = vunpack.c.l.b16 %v1853
    %v3361 = vunpack.c.h.b16 %v1853
    %v3362 = vunpack.c.l.b16 %v1854
    %v3363 = vunpack.c.h.b16 %v1854
    %v3364 = vunpack.c.l.b16 %v1855
    %v3365 = vunpack.c.h.b16 %v1855
    %v3366 = vunpack.c.l.b16 %v1856
    %v3367 = vunpack.c.h.b16 %v1856
    %v3368 = vunpack.c.l.b16 %v1857
    %v3369 = vunpack.c.h.b16 %v1857
    %v3370 = vunpack.c.l.b16 %v1858
    %v3371 = vunpack.c.h.b16 %v1858
    %v3372 = vunpack.c.l.b16 %v1859
    %v3373 = vunpack.c.h.b16 %v1859
    %v3374 = vunpack.c.l.b16 %v1860
    %v3375 = vunpack.c.h.b16 %v1860
    %v3376 = vunpack.c.l.b16 %v1861
    %v3377 = vunpack.c.h.b16 %v1861
    %v3378 = vunpack.c.l.b16 %v1862
    %v3379 = vunpack.c.h.b16 %v1862
    %v3380 = vunpack.c.l.b16 %v1863
    %v3381 = vunpack.c.h.b16 %v1863
    %v3382 = vunpack.c.l.b16 %v1864
    %v3383 = vunpack.c.h.b16 %v1864
    %v3384 = vunpack.c.l.b16 %v1865
    %v3385 = vunpack.c.h.b16 %v1865
    %v3386 = vunpack.c.l.b16 %v1866
    %v3387 = vunpack.c.h.b16 %v1866
    %v3388 = vunpack.c.l.b16 %v1867
    %v3389 = vunpack.c.h.b16 %v1867
    %v3390 = vunpack.c.l.b16 %v1868
    %v3391 = vunpack.c.h.b16 %v1868
    %v3392 = vunpack.c.l.b16 %v1869
    %v3393 = vunpack.c.h.b16 %v1869
    %v3394 = vunpack.c.l.b16 %v1870
    %v3395 = vunpack.c.h.b16 %v1870
    %v3396 = vunpack.c.l.b16 %v1871
    %v3397 = vunpack.c.h.b16 %v1871
    %v3398 = vunpack.c.l.b16 %v1872
    %v3399 = vunpack.c.h.b16 %v1872
    %v3400 = vunpack.c.l.b16 %v1873
    %v3401 = vunpack.c.h.b16 %v1873
    %v3402 = vunpack.c.l.b16 %v1874
    %v3403 = vunpack.c.h.b16 %v1874
    %v3404 = vunpack.c.l.b16 %v1875
    %v3405 = vunpack.c.h.b16 %v1875
    %v3406 = vunpack.c.l.b16 %v1876
    %v3407 = vunpack.c.h.b16 %v1876
    %v3408 = vunpack.c.l.b16 %v1877
    %v3409 = vunpack.c.h.b16 %v1877
    %v3410 = vunpack.c.l.b16 %v1878
    %v3411 = vunpack.c.h.b16 %v1878
    %v3412 = vunpack.c.l.b16 %v1879
    %v3413 = vunpack.c.h.b16 %v1879
    %v3414 = vunpack.c.l.b16 %v1880
    %v3415 = vunpack.c.h.b16 %v1880
    %v3416 = vunpack.c.l.b16 %v1881
    %v3417 = vunpack.c.h.b16 %v1881
    %v3418 = vunpack.c.l.b16 %v1882
    %v3419 = vunpack.c.h.b16 %v1882
    %v3420 = vunpack.c.l.b16 %v1883
    %v3421 = vunpack.c.h.b16 %v1883
    %v3422 = vunpack.c.l.b16 %v1884
    %v3423 = vunpack.c.h.b16 %v1884
    %v3424 = vunpack.c.l.b16 %v1885
    %v3425 = vunpack.c.h.b16 %v1885
    %v3426 = vunpack.c.l.b16 %v1886
    %v3427 = vunpack.c.h.b16 %v1886
    %v3428 = vunpack.c.l.b16 %v1887
    %v3429 = vunpack.c.h.b16 %v1887
    %v3430 = vunpack.c.l.b16 %v1888
    %v3431 = vunpack.c.h.b16 %v1888
    %v3432 = vunpack.c.l.b16 %v1889
    %v3433 = vunpack.c.h.b16 %v1889
    %v3434 = vunpack.c.l.b16 %v1890
    %v3435 = vunpack.c.h.b16 %v1890
    %v3436 = vunpack.c.l.b16 %v1891
    %v3437 = vunpack.c.h.b16 %v1891
    %v3438 = vunpack.c.l.b16 %v1892
    %v3439 = vunpack.c.h.b16 %v1892
    %v3440 = vunpack.c.l.b16 %v1893
    %v3441 = vunpack.c.h.b16 %v1893
    %v3442 = vunpack.c.l.b16 %v1894
    %v3443 = vunpack.c.h.b16 %v1894
    %v3444 = vunpack.c.l.b16 %v1895
    %v3445 = vunpack.c.h.b16 %v1895
    %v3446 = vunpack.c.l.b16 %v1896
    %v3447 = vunpack.c.h.b16 %v1896
    %v3448 = vunpack.c.l.b16 %v1897
    %v3449 = vunpack.c.h.b16 %v1897
    %v3450 = vunpack.c.l.b16 %v1898
    %v3451 = vunpack.c.h.b16 %v1898
    %v3452 = vunpack.c.l.b16 %v1899
    %v3453 = vunpack.c.h.b16 %v1899
    %v3454 = vunpack.c.l.b16 %v1900
    %v3455 = vunpack.c.h.b16 %v1900
    %v3456 = vunpack.c.l.b16 %v1901
    %v3457 = vunpack.c.h.b16 %v1901
    %v3458 = vunpack.c.l.b16 %v1902
    %v3459 = vunpack.c.h.b16 %v1902
    %v3460 = vunpack.c.l.b16 %v1903
    %v3461 = vunpack.c.h.b16 %v1903
    %v3462 = vunpack.c.l.b16 %v1904
    %v3463 = vunpack.c.h.b16 %v1904
    %v3464 = vunpack.c.l.b16 %v1905
    %v3465 = vunpack.c.h.b16 %v1905
    %v3466 = vunpack.c.l.b16 %v1906
    %v3467 = vunpack.c.h.b16 %v1906
    %v3468 = vunpack.c.l.b16 %v1907
    %v3469 = vunpack.c.h.b16 %v1907
    %v3470 = vunpack.c.l.b16 %v1908
    %v3471 = vunpack.c.h.b16 %v1908
    %v3472 = vunpack.c.l.b16 %v1909
    %v3473 = vunpack.c.h.b16 %v1909
    %v3474 = vunpack.c.l.b16 %v1910
    %v3475 = vunpack.c.h.b16 %v1910
    %v3476 = vunpack.c.l.b16 %v1911
    %v3477 = vunpack.c.h.b16 %v1911
    %v3478 = vunpack.c.l.b16 %v1912
    %v3479 = vunpack.c.h.b16 %v1912
    %v3480 = vunpack.c.l.b16 %v1913
    %v3481 = vunpack.c.h.b16 %v1913
    %v3482 = vunpack.c.l.b16 %v1914
    %v3483 = vunpack.c.h.b16 %v1914
    %v3484 = vunpack.c.l.b16 %v1915
    %v3485 = vunpack.c.h.b16 %v1915
    %v3486 = vunpack.c.l.b16 %v1916
    %v3487 = vunpack.c.h.b16 %v1916
    %v3488 = vunpack.c.l.b16 %v1917
    %v3489 = vunpack.c.h.b16 %v1917
    %v3490 = vpack.c.b16 %v2482, %v2466
    %v3491 = vpack.c.b16 %v2483, %v2467
    %v3492 = vpack.c.b16 %v2484, %v2468
    %v3493 = vpack.c.b16 %v2485, %v2469
    %v3494 = vpack.c.b16 %v2486, %v2470
    %v3495 = vpack.c.b16 %v2487, %v2471
    %v3496 = vpack.c.b16 %v2488, %v2472
    %v3497 = vpack.c.b16 %v2489, %v2473
    %v3498 = vpack.c.b16 %v2490, %v2474
    %v3499 = vpack.c.b16 %v2491, %v2475
    %v3500 = vpack.c.b16 %v2492, %v2476
    %v3501 = vpack.c.b16 %v2493, %v2477
    %v3502 = vpack.c.b16 %v2494, %v2478
    %v3503 = vpack.c.b16 %v2495, %v2479
    %v3504 = vpack.c.b16 %v2496, %v2480
    %v3505 = vpack.c.b16 %v2497, %v2481
    %v3506 = vpack.c.b16 %v2514, %v2498
    %v3507 = vpack.c.b16 %v2515, %v2499
    %v3508 = vpack.c.b16 %v2516, %v2500
    %v3509 = vpack.c.b16 %v2517, %v2501
    %v3510 = vpack.c.b16 %v2518, %v2502
    %v3511 = vpack.c.b16 %v2519, %v2503
    %v3512 = vpack.c.b16 %v2520, %v2504
    %v3513 = vpack.c.b16 %v2521, %v2505
    %v3514 = vpack.c.b16 %v2522, %v2506
    %v3515 = vpack.c.b16 %v2523, %v2507
    %v3516 = vpack.c.b16 %v2524, %v2508
    %v3517 = vpack.c.b16 %v2525, %v2509
    %v3518 = vpack.c.b16 %v2526, %v2510
    %v3519 = vpack.c.b16 %v2527, %v2511
    %v3520 = vpack.c.b16 %v2528, %v2512
    %v3521 = vpack.c.b16 %v2529, %v2513
    %v3522 = vpack.c.b16 %v2546, %v2530
    %v3523 = vpack.c.b16 %v2547, %v2531
    %v3524 = vpack.c.b16 %v2548, %v2532
    %v3525 = vpack.c.b16 %v2549, %v2533
    %v3526 = vpack.c.b16 %v2550, %v2534
    %v3527 = vpack.c.b16 %v2551, %v2535
    %v3528 = vpack.c.b16 %v2552, %v2536
    %v3529 = vpack.c.b16 %v2553, %v2537
    %v3530 = vpack.c.b16 %v2554, %v2538
    %v3531 = vpack.c.b16 %v2555, %v2539
    %v3532 = vpack.c.b16 %v2556, %v2540
    %v3533 = vpack.c.b16 %v2557, %v2541
    %v3534 = vpack.c.b16 %v2558, %v2542
    %v3535 = vpack.c.b16 %v2559, %v2543
    %v3536 = vpack.c.b16 %v2560, %v2544
    %v3537 = vpack.c.b16 %v2561, %v2545
    %v3538 = vpack.c.b16 %v2578, %v2562
    %v3539 = vpack.c.b16 %v2579, %v2563
    %v3540 = vpack.c.b16 %v2580, %v2564
    %v3541 = vpack.c.b16 %v2581, %v2565
    %v3542 = vpack.c.b16 %v2582, %v2566
    %v3543 = vpack.c.b16 %v2583, %v2567
    %v3544 = vpack.c.b16 %v2584, %v2568
    %v3545 = vpack.c.b16 %v2585, %v2569
    %v3546 = vpack.c.b16 %v2586, %v2570
    %v3547 = vpack.c.b16 %v2587, %v2571
    %v3548 = vpack.c.b16 %v2588, %v2572
    %v3549 = vpack.c.b16 %v2589, %v2573
    %v3550 = vpack.c.b16 %v2590, %v2574
    %v3551 = vpack.c.b16 %v2591, %v2575
    %v3552 = vpack.c.b16 %v2592, %v2576
    %v3553 = vpack.c.b16 %v2593, %v2577
    %v3554 = vpack.c.b16 %v2610, %v2594
    %v3555 = vpack.c.b16 %v2611, %v2595
    %v3556 = vpack.c.b16 %v2612, %v2596
    %v3557 = vpack.c.b16 %v2613, %v2597
    %v3558 = vpack.c.b16 %v2614, %v2598
    %v3559 = vpack.c.b16 %v2615, %v2599
    %v3560 = vpack.c.b16 %v2616, %v2600
    %v3561 = vpack.c.b16 %v2617, %v2601
    %v3562 = vpack.c.b16 %v2618, %v2602
    %v3563 = vpack.c.b16 %v2619, %v2603
    %v3564 = vpack.c.b16 %v2620, %v2604
    %v3565 = vpack.c.b16 %v2621, %v2605
    %v3566 = vpack.c.b16 %v2622, %v2606
    %v3567 = vpack.c.b16 %v2623, %v2607
    %v3568 = vpack.c.b16 %v2624, %v2608
    %v3569 = vpack.c.b16 %v2625, %v2609
    %v3570 = vpack.c.b16 %v2642, %v2626
    %v3571 = vpack.c.b16 %v2643, %v2627
    %v3572 = vpack.c.b16 %v2644, %v2628
    %v3573 = vpack.c.b16 %v2645, %v2629
    %v3574 = vpack.c.b16 %v2646, %v2630
    %v3575 = vpack.c.b16 %v2647, %v2631
    %v3576 = vpack.c.b16 %v2648, %v2632
    %v3577 = vpack.c.b16 %v2649, %v2633
    %v3578 = vpack.c.b16 %v2650, %v2634
    %v3579 = vpack.c.b16 %v2651, %v2635
    %v3580 = vpack.c.b16 %v2652, %v2636
    %v3581 = vpack.c.b16 %v2653, %v2637
    %v3582 = vpack.c.b16 %v2654, %v2638
    %v3583 = vpack.c.b16 %v2655, %v2639
    %v3584 = vpack.c.b16 %v2656, %v2640
    %v3585 = vpack.c.b16 %v2657, %v2641
    %v3586 = vpack.c.b16 %v2674, %v2658
    %v3587 = vpack.c.b16 %v2675, %v2659
    %v3588 = vpack.c.b16 %v2676, %v2660
    %v3589 = vpack.c.b16 %v2677, %v2661
    %v3590 = vpack.c.b16 %v2678, %v2662
    %v3591 = vpack.c.b16 %v2679, %v2663
    %v3592 = vpack.c.b16 %v2680, %v2664
    %v3593 = vpack.c.b16 %v2681, %v2665
    %v3594 = vpack.c.b16 %v2682, %v2666
    %v3595 = vpack.c.b16 %v2683, %v2667
    %v3596 = vpack.c.b16 %v2684, %v2668
    %v3597 = vpack.c.b16 %v2685, %v2669
    %v3598 = vpack.c.b16 %v2686, %v2670
    %v3599 = vpack.c.b16 %v2687, %v2671
    %v3600 = vpack.c.b16 %v2688, %v2672
    %v3601 = vpack.c.b16 %v2689, %v2673
    %v3602 = vpack.c.b16 %v2706, %v2690
    %v3603 = vpack.c.b16 %v2707, %v2691
    %v3604 = vpack.c.b16 %v2708, %v2692
    %v3605 = vpack.c.b16 %v2709, %v2693
    %v3606 = vpack.c.b16 %v2710, %v2694
    %v3607 = vpack.c.b16 %v2711, %v2695
    %v3608 = vpack.c.b16 %v2712, %v2696
    %v3609 = vpack.c.b16 %v2713, %v2697
    %v3610 = vpack.c.b16 %v2714, %v2698
    %v3611 = vpack.c.b16 %v2715, %v2699
    %v3612 = vpack.c.b16 %v2716, %v2700
    %v3613 = vpack.c.b16 %v2717, %v2701
    %v3614 = vpack.c.b16 %v2718, %v2702
    %v3615 = vpack.c.b16 %v2719, %v2703
    %v3616 = vpack.c.b16 %v2720, %v2704
    %v3617 = vpack.c.b16 %v2721, %v2705
    %v3618 = vpack.c.b16 %v2738, %v2722
    %v3619 = vpack.c.b16 %v2739, %v2723
    %v3620 = vpack.c.b16 %v2740, %v2724
    %v3621 = vpack.c.b16 %v2741, %v2725
    %v3622 = vpack.c.b16 %v2742, %v2726
    %v3623 = vpack.c.b16 %v2743, %v2727
    %v3624 = vpack.c.b16 %v2744, %v2728
    %v3625 = vpack.c.b16 %v2745, %v2729
    %v3626 = vpack.c.b16 %v2746, %v2730
    %v3627 = vpack.c.b16 %v2747, %v2731
    %v3628 = vpack.c.b16 %v2748, %v2732
    %v3629 = vpack.c.b16 %v2749, %v2733
    %v3630 = vpack.c.b16 %v2750, %v2734
    %v3631 = vpack.c.b16 %v2751, %v2735
    %v3632 = vpack.c.b16 %v2752, %v2736
    %v3633 = vpack.c.b16 %v2753, %v2737
    %v3634 = vpack.c.b16 %v2770, %v2754
    %v3635 = vpack.c.b16 %v2771, %v2755
    %v3636 = vpack.c.b16 %v2772, %v2756
    %v3637 = vpack.c.b16 %v2773, %v2757
    %v3638 = vpack.c.b16 %v2774, %v2758
    %v3639 = vpack.c.b16 %v2775, %v2759
    %v3640 = vpack.c.b16 %v2776, %v2760
    %v3641 = vpack.c.b16 %v2777, %v2761
    %v3642 = vpack.c.b16 %v2778, %v2762
    %v3643 = vpack.c.b16 %v2779, %v2763
    %v3644 = vpack.c.b16 %v2780, %v2764
    %v3645 = vpack.c.b16 %v2781, %v2765
    %v3646 = vpack.c.b16 %v2782, %v2766
    %v3647 = vpack.c.b16 %v2783, %v2767
    %v3648 = vpack.c.b16 %v2784, %v2768
    %v3649 = vpack.c.b16 %v2785, %v2769
    %v3650 = vpack.c.b16 %v2802, %v2786
    %v3651 = vpack.c.b16 %v2803, %v2787
    %v3652 = vpack.c.b16 %v2804, %v2788
    %v3653 = vpack.c.b16 %v2805, %v2789
    %v3654 = vpack.c.b16 %v2806, %v2790
    %v3655 = vpack.c.b16 %v2807, %v2791
    %v3656 = vpack.c.b16 %v2808, %v2792
    %v3657 = vpack.c.b16 %v2809, %v2793
    %v3658 = vpack.c.b16 %v2810, %v2794
    %v3659 = vpack.c.b16 %v2811, %v2795
    %v3660 = vpack.c.b16 %v2812, %v2796
    %v3661 = vpack.c.b16 %v2813, %v2797
    %v3662 = vpack.c.b16 %v2814, %v2798
    %v3663 = vpack.c.b16 %v2815, %v2799
    %v3664 = vpack.c.b16 %v2816, %v2800
    %v3665 = vpack.c.b16 %v2817, %v2801
    %v3666 = vpack.c.b16 %v2834, %v2818
    %v3667 = vpack.c.b16 %v2835, %v2819
    %v3668 = vpack.c.b16 %v2836, %v2820
    %v3669 = vpack.c.b16 %v2837, %v2821
    %v3670 = vpack.c.b16 %v2838, %v2822
    %v3671 = vpack.c.b16 %v2839, %v2823
    %v3672 = vpack.c.b16 %v2840, %v2824
    %v3673 = vpack.c.b16 %v2841, %v2825
    %v3674 = vpack.c.b16 %v2842, %v2826
    %v3675 = vpack.c.b16 %v2843, %v2827
    %v3676 = vpack.c.b16 %v2844, %v2828
    %v3677 = vpack.c.b16 %v2845, %v2829
    %v3678 = vpack.c.b16 %v2846, %v2830
    %v3679 = vpack.c.b16 %v2847, %v2831
    %v3680 = vpack.c.b16 %v2848, %v2832
    %v3681 = vpack.c.b16 %v2849, %v2833
    %v3682 = vpack.c.b16 %v2866, %v2850
    %v3683 = vpack.c.b16 %v2867, %v2851
    %v3684 = vpack.c.b16 %v2868, %v2852
    %v3685 = vpack.c.b16 %v2869, %v2853
    %v3686 = vpack.c.b16 %v2870, %v2854
    %v3687 = vpack.c.b16 %v2871, %v2855
    %v3688 = vpack.c.b16 %v2872, %v2856
    %v3689 = vpack.c.b16 %v2873, %v2857
    %v3690 = vpack.c.b16 %v2874, %v2858
    %v3691 = vpack.c.b16 %v2875, %v2859
    %v3692 = vpack.c.b16 %v2876, %v2860
    %v3693 = vpack.c.b16 %v2877, %v2861
    %v3694 = vpack.c.b16 %v2878, %v2862
    %v3695 = vpack.c.b16 %v2879, %v2863
    %v3696 = vpack.c.b16 %v2880, %v2864
    %v3697 = vpack.c.b16 %v2881, %v2865
    %v3698 = vpack.c.b16 %v2898, %v2882
    %v3699 = vpack.c.b16 %v2899, %v2883
    %v3700 = vpack.c.b16 %v2900, %v2884
    %v3701 = vpack.c.b16 %v2901, %v2885
    %v3702 = vpack.c.b16 %v2902, %v2886
    %v3703 = vpack.c.b16 %v2903, %v2887
    %v3704 = vpack.c.b16 %v2904, %v2888
    %v3705 = vpack.c.b16 %v2905, %v2889
    %v3706 = vpack.c.b16 %v2906, %v2890
    %v3707 = vpack.c.b16 %v2907, %v2891
    %v3708 = vpack.c.b16 %v2908, %v2892
    %v3709 = vpack.c.b16 %v2909, %v2893
    %v3710 = vpack.c.b16 %v2910, %v2894
    %v3711 = vpack.c.b16 %v2911, %v2895
    %v3712 = vpack.c.b16 %v2912, %v2896
    %v3713 = vpack.c.b16 %v2913, %v2897
    %v3714 = vpack.c.b16 %v2930, %v2914
    %v3715 = vpack.c.b16 %v2931, %v2915
    %v3716 = vpack.c.b16 %v2932, %v2916
    %v3717 = vpack.c.b16 %v2933, %v2917
    %v3718 = vpack.c.b16 %v2934, %v2918
    %v3719 = vpack.c.b16 %v2935, %v2919
    %v3720 = vpack.c.b16 %v2936, %v2920
    %v3721 = vpack.c.b16 %v2937, %v2921
    %v3722 = vpack.c.b16 %v2938, %v2922
    %v3723 = vpack.c.b16 %v2939, %v2923
    %v3724 = vpack.c.b16 %v2940, %v2924
    %v3725 = vpack.c.b16 %v2941, %v2925
    %v3726 = vpack.c.b16 %v2942, %v2926
    %v3727 = vpack.c.b16 %v2943, %v2927
    %v3728 = vpack.c.b16 %v2944, %v2928
    %v3729 = vpack.c.b16 %v2945, %v2929
    %v3730 = vpack.c.b16 %v2962, %v2946
    %v3731 = vpack.c.b16 %v2963, %v2947
    %v3732 = vpack.c.b16 %v2964, %v2948
    %v3733 = vpack.c.b16 %v2965, %v2949
    %v3734 = vpack.c.b16 %v2966, %v2950
    %v3735 = vpack.c.b16 %v2967, %v2951
    %v3736 = vpack.c.b16 %v2968, %v2952
    %v3737 = vpack.c.b16 %v2969, %v2953
    %v3738 = vpack.c.b16 %v2970, %v2954
    %v3739 = vpack.c.b16 %v2971, %v2955
    %v3740 = vpack.c.b16 %v2972, %v2956
    %v3741 = vpack.c.b16 %v2973, %v2957
    %v3742 = vpack.c.b16 %v2974, %v2958
    %v3743 = vpack.c.b16 %v2975, %v2959
    %v3744 = vpack.c.b16 %v2976, %v2960
    %v3745 = vpack.c.b16 %v2977, %v2961
    %v3746 = vpack.c.b16 %v2994, %v2978
    %v3747 = vpack.c.b16 %v2995, %v2979
    %v3748 = vpack.c.b16 %v2996, %v2980
    %v3749 = vpack.c.b16 %v2997, %v2981
    %v3750 = vpack.c.b16 %v2998, %v2982
    %v3751 = vpack.c.b16 %v2999, %v2983
    %v3752 = vpack.c.b16 %v3000, %v2984
    %v3753 = vpack.c.b16 %v3001, %v2985
    %v3754 = vpack.c.b16 %v3002, %v2986
    %v3755 = vpack.c.b16 %v3003, %v2987
    %v3756 = vpack.c.b16 %v3004, %v2988
    %v3757 = vpack.c.b16 %v3005, %v2989
    %v3758 = vpack.c.b16 %v3006, %v2990
    %v3759 = vpack.c.b16 %v3007, %v2991
    %v3760 = vpack.c.b16 %v3008, %v2992
    %v3761 = vpack.c.b16 %v3009, %v2993
    %v3762 = vpack.c.b16 %v3026, %v3010
    %v3763 = vpack.c.b16 %v3027, %v3011
    %v3764 = vpack.c.b16 %v3028, %v3012
    %v3765 = vpack.c.b16 %v3029, %v3013
    %v3766 = vpack.c.b16 %v3030, %v3014
    %v3767 = vpack.c.b16 %v3031, %v3015
    %v3768 = vpack.c.b16 %v3032, %v3016
    %v3769 = vpack.c.b16 %v3033, %v3017
    %v3770 = vpack.c.b16 %v3034, %v3018
    %v3771 = vpack.c.b16 %v3035, %v3019
    %v3772 = vpack.c.b16 %v3036, %v3020
    %v3773 = vpack.c.b16 %v3037, %v3021
    %v3774 = vpack.c.b16 %v3038, %v3022
    %v3775 = vpack.c.b16 %v3039, %v3023
    %v3776 = vpack.c.b16 %v3040, %v3024
    %v3777 = vpack.c.b16 %v3041, %v3025
    %v3778 = vpack.c.b16 %v3058, %v3042
    %v3779 = vpack.c.b16 %v3059, %v3043
    %v3780 = vpack.c.b16 %v3060, %v3044
    %v3781 = vpack.c.b16 %v3061, %v3045
    %v3782 = vpack.c.b16 %v3062, %v3046
    %v3783 = vpack.c.b16 %v3063, %v3047
    %v3784 = vpack.c.b16 %v3064, %v3048
    %v3785 = vpack.c.b16 %v3065, %v3049
    %v3786 = vpack.c.b16 %v3066, %v3050
    %v3787 = vpack.c.b16 %v3067, %v3051
    %v3788 = vpack.c.b16 %v3068, %v3052
    %v3789 = vpack.c.b16 %v3069, %v3053
    %v3790 = vpack.c.b16 %v3070, %v3054
    %v3791 = vpack.c.b16 %v3071, %v3055
    %v3792 = vpack.c.b16 %v3072, %v3056
    %v3793 = vpack.c.b16 %v3073, %v3057
    %v3794 = vpack.c.b16 %v3090, %v3074
    %v3795 = vpack.c.b16 %v3091, %v3075
    %v3796 = vpack.c.b16 %v3092, %v3076
    %v3797 = vpack.c.b16 %v3093, %v3077
    %v3798 = vpack.c.b16 %v3094, %v3078
    %v3799 = vpack.c.b16 %v3095, %v3079
    %v3800 = vpack.c.b16 %v3096, %v3080
    %v3801 = vpack.c.b16 %v3097, %v3081
    %v3802 = vpack.c.b16 %v3098, %v3082
    %v3803 = vpack.c.b16 %v3099, %v3083
    %v3804 = vpack.c.b16 %v3100, %v3084
    %v3805 = vpack.c.b16 %v3101, %v3085
    %v3806 = vpack.c.b16 %v3102, %v3086
    %v3807 = vpack.c.b16 %v3103, %v3087
    %v3808 = vpack.c.b16 %v3104, %v3088
    %v3809 = vpack.c.b16 %v3105, %v3089
    %v3810 = vpack.c.b16 %v3122, %v3106
    %v3811 = vpack.c.b16 %v3123, %v3107
    %v3812 = vpack.c.b16 %v3124, %v3108
    %v3813 = vpack.c.b16 %v3125, %v3109
    %v3814 = vpack.c.b16 %v3126, %v3110
    %v3815 = vpack.c.b16 %v3127, %v3111
    %v3816 = vpack.c.b16 %v3128, %v3112
    %v3817 = vpack.c.b16 %v3129, %v3113
    %v3818 = vpack.c.b16 %v3130, %v3114
    %v3819 = vpack.c.b16 %v3131, %v3115
    %v3820 = vpack.c.b16 %v3132, %v3116
    %v3821 = vpack.c.b16 %v3133, %v3117
    %v3822 = vpack.c.b16 %v3134, %v3118
    %v3823 = vpack.c.b16 %v3135, %v3119
    %v3824 = vpack.c.b16 %v3136, %v3120
    %v3825 = vpack.c.b16 %v3137, %v3121
    %v3826 = vpack.c.b16 %v3154, %v3138
    %v3827 = vpack.c.b16 %v3155, %v3139
    %v3828 = vpack.c.b16 %v3156, %v3140
    %v3829 = vpack.c.b16 %v3157, %v3141
    %v3830 = vpack.c.b16 %v3158, %v3142
    %v3831 = vpack.c.b16 %v3159, %v3143
    %v3832 = vpack.c.b16 %v3160, %v3144
    %v3833 = vpack.c.b16 %v3161, %v3145
    %v3834 = vpack.c.b16 %v3162, %v3146
    %v3835 = vpack.c.b16 %v3163, %v3147
    %v3836 = vpack.c.b16 %v3164, %v3148
    %v3837 = vpack.c.b16 %v3165, %v3149
    %v3838 = vpack.c.b16 %v3166, %v3150
    %v3839 = vpack.c.b16 %v3167, %v3151
    %v3840 = vpack.c.b16 %v3168, %v3152
    %v3841 = vpack.c.b16 %v3169, %v3153
    %v3842 = vpack.c.b16 %v3186, %v3170
    %v3843 = vpack.c.b16 %v3187, %v3171
    %v3844 = vpack.c.b16 %v3188, %v3172
    %v3845 = vpack.c.b16 %v3189, %v3173
    %v3846 = vpack.c.b16 %v3190, %v3174
    %v3847 = vpack.c.b16 %v3191, %v3175
    %v3848 = vpack.c.b16 %v3192, %v3176
    %v3849 = vpack.c.b16 %v3193, %v3177
    %v3850 = vpack.c.b16 %v3194, %v3178
    %v3851 = vpack.c.b16 %v3195, %v3179
    %v3852 = vpack.c.b16 %v3196, %v3180
    %v3853 = vpack.c.b16 %v3197, %v3181
    %v3854 = vpack.c.b16 %v3198, %v3182
    %v3855 = vpack.c.b16 %v3199, %v3183
    %v3856 = vpack.c.b16 %v3200, %v3184
    %v3857 = vpack.c.b16 %v3201, %v3185
    %v3858 = vpack.c.b16 %v3218, %v3202
    %v3859 = vpack.c.b16 %v3219, %v3203
    %v3860 = vpack.c.b16 %v3220, %v3204
    %v3861 = vpack.c.b16 %v3221, %v3205
    %v3862 = vpack.c.b16 %v3222, %v3206
    %v3863 = vpack.c.b16 %v3223, %v3207
    %v3864 = vpack.c.b16 %v3224, %v3208
    %v3865 = vpack.c.b16 %v3225, %v3209
    %v3866 = vpack.c.b16 %v3226, %v3210
    %v3867 = vpack.c.b16 %v3227, %v3211
    %v3868 = vpack.c.b16 %v3228, %v3212
    %v3869 = vpack.c.b16 %v3229, %v3213
    %v3870 = vpack.c.b16 %v3230, %v3214
    %v3871 = vpack.c.b16 %v3231, %v3215
    %v3872 = vpack.c.b16 %v3232, %v3216
    %v3873 = vpack.c.b16 %v3233, %v3217
    %v3874 = vpack.c.b16 %v3250, %v3234
    %v3875 = vpack.c.b16 %v3251, %v3235
    %v3876 = vpack.c.b16 %v3252, %v3236
    %v3877 = vpack.c.b16 %v3253, %v3237
    %v3878 = vpack.c.b16 %v3254, %v3238
    %v3879 = vpack.c.b16 %v3255, %v3239
    %v3880 = vpack.c.b16 %v3256, %v3240
    %v3881 = vpack.c.b16 %v3257, %v3241
    %v3882 = vpack.c.b16 %v3258, %v3242
    %v3883 = vpack.c.b16 %v3259, %v3243
    %v3884 = vpack.c.b16 %v3260, %v3244
    %v3885 = vpack.c.b16 %v3261, %v3245
    %v3886 = vpack.c.b16 %v3262, %v3246
    %v3887 = vpack.c.b16 %v3263, %v3247
    %v3888 = vpack.c.b16 %v3264, %v3248
    %v3889 = vpack.c.b16 %v3265, %v3249
    %v3890 = vpack.c.b16 %v3282, %v3266
    %v3891 = vpack.c.b16 %v3283, %v3267
    %v3892 = vpack.c.b16 %v3284, %v3268
    %v3893 = vpack.c.b16 %v3285, %v3269
    %v3894 = vpack.c.b16 %v3286, %v3270
    %v3895 = vpack.c.b16 %v3287, %v3271
    %v3896 = vpack.c.b16 %v3288, %v3272
    %v3897 = vpack.c.b16 %v3289, %v3273
    %v3898 = vpack.c.b16 %v3290, %v3274
    %v3899 = vpack.c.b16 %v3291, %v3275
    %v3900 = vpack.c.b16 %v3292, %v3276
    %v3901 = vpack.c.b16 %v3293, %v3277
    %v3902 = vpack.c.b16 %v3294, %v3278
    %v3903 = vpack.c.b16 %v3295, %v3279
    %v3904 = vpack.c.b16 %v3296, %v3280
    %v3905 = vpack.c.b16 %v3297, %v3281
    %v3906 = vpack.c.b16 %v3314, %v3298
    %v3907 = vpack.c.b16 %v3315, %v3299
    %v3908 = vpack.c.b16 %v3316, %v3300
    %v3909 = vpack.c.b16 %v3317, %v3301
    %v3910 = vpack.c.b16 %v3318, %v3302
    %v3911 = vpack.c.b16 %v3319, %v3303
    %v3912 = vpack.c.b16 %v3320, %v3304
    %v3913 = vpack.c.b16 %v3321, %v3305
    %v3914 = vpack.c.b16 %v3322, %v3306
    %v3915 = vpack.c.b16 %v3323, %v3307
    %v3916 = vpack.c.b16 %v3324, %v3308
    %v3917 = vpack.c.b16 %v3325, %v3309
    %v3918 = vpack.c.b16 %v3326, %v3310
    %v3919 = vpack.c.b16 %v3327, %v3311
    %v3920 = vpack.c.b16 %v3328, %v3312
    %v3921 = vpack.c.b16 %v3329, %v3313
    %v3922 = vpack.c.b16 %v3346, %v3330
    %v3923 = vpack.c.b16 %v3347, %v3331
    %v3924 = vpack.c.b16 %v3348, %v3332
    %v3925 = vpack.c.b16 %v3349, %v3333
    %v3926 = vpack.c.b16 %v3350, %v3334
    %v3927 = vpack.c.b16 %v3351, %v3335
    %v3928 = vpack.c.b16 %v3352, %v3336
    %v3929 = vpack.c.b16 %v3353, %v3337
    %v3930 = vpack.c.b16 %v3354, %v3338
    %v3931 = vpack.c.b16 %v3355, %v3339
    %v3932 = vpack.c.b16 %v3356, %v3340
    %v3933 = vpack.c.b16 %v3357, %v3341
    %v3934 = vpack.c.b16 %v3358, %v3342
    %v3935 = vpack.c.b16 %v3359, %v3343
    %v3936 = vpack.c.b16 %v3360, %v3344
    %v3937 = vpack.c.b16 %v3361, %v3345
    %v3938 = vpack.c.b16 %v3378, %v3362
    %v3939 = vpack.c.b16 %v3379, %v3363
    %v3940 = vpack.c.b16 %v3380, %v3364
    %v3941 = vpack.c.b16 %v3381, %v3365
    %v3942 = vpack.c.b16 %v3382, %v3366
    %v3943 = vpack.c.b16 %v3383, %v3367
    %v3944 = vpack.c.b16 %v3384, %v3368
    %v3945 = vpack.c.b16 %v3385, %v3369
    %v3946 = vpack.c.b16 %v3386, %v3370
    %v3947 = vpack.c.b16 %v3387, %v3371
    %v3948 = vpack.c.b16 %v3388, %v3372
    %v3949 = vpack.c.b16 %v3389, %v3373
    %v3950 = vpack.c.b16 %v3390, %v3374
    %v3951 = vpack.c.b16 %v3391, %v3375
    %v3952 = vpack.c.b16 %v3392, %v3376
    %v3953 = vpack.c.b16 %v3393, %v3377
    %v3954 = vpack.c.b16 %v3410, %v3394
    %v3955 = vpack.c.b16 %v3411, %v3395
    %v3956 = vpack.c.b16 %v3412, %v3396
    %v3957 = vpack.c.b16 %v3413, %v3397
    %v3958 = vpack.c.b16 %v3414, %v3398
    %v3959 = vpack.c.b16 %v3415, %v3399
    %v3960 = vpack.c.b16 %v3416, %v3400
    %v3961 = vpack.c.b16 %v3417, %v3401
    %v3962 = vpack.c.b16 %v3418, %v3402
    %v3963 = vpack.c.b16 %v3419, %v3403
    %v3964 = vpack.c.b16 %v3420, %v3404
    %v3965 = vpack.c.b16 %v3421, %v3405
    %v3966 = vpack.c.b16 %v3422, %v3406
    %v3967 = vpack.c.b16 %v3423, %v3407
    %v3968 = vpack.c.b16 %v3424, %v3408
    %v3969 = vpack.c.b16 %v3425, %v3409
    %v3970 = vpack.c.b16 %v3442, %v3426
    %v3971 = vpack.c.b16 %v3443, %v3427
    %v3972 = vpack.c.b16 %v3444, %v3428
    %v3973 = vpack.c.b16 %v3445, %v3429
    %v3974 = vpack.c.b16 %v3446, %v3430
    %v3975 = vpack.c.b16 %v3447, %v3431
    %v3976 = vpack.c.b16 %v3448, %v3432
    %v3977 = vpack.c.b16 %v3449, %v3433
    %v3978 = vpack.c.b16 %v3450, %v3434
    %v3979 = vpack.c.b16 %v3451, %v3435
    %v3980 = vpack.c.b16 %v3452, %v3436
    %v3981 = vpack.c.b16 %v3453, %v3437
    %v3982 = vpack.c.b16 %v3454, %v3438
    %v3983 = vpack.c.b16 %v3455, %v3439
    %v3984 = vpack.c.b16 %v3456, %v3440
    %v3985 = vpack.c.b16 %v3457, %v3441
    %v3986 = vpack.c.b16 %v3474, %v3458
    %v3987 = vpack.c.b16 %v3475, %v3459
    %v3988 = vpack.c.b16 %v3476, %v3460
    %v3989 = vpack.c.b16 %v3477, %v3461
    %v3990 = vpack.c.b16 %v3478, %v3462
    %v3991 = vpack.c.b16 %v3479, %v3463
    %v3992 = vpack.c.b16 %v3480, %v3464
    %v3993 = vpack.c.b16 %v3481, %v3465
    %v3994 = vpack.c.b16 %v3482, %v3466
    %v3995 = vpack.c.b16 %v3483, %v3467
    %v3996 = vpack.c.b16 %v3484, %v3468
    %v3997 = vpack.c.b16 %v3485, %v3469
    %v3998 = vpack.c.b16 %v3486, %v3470
    %v3999 = vpack.c.b16 %v3487, %v3471
    %v4000 = vpack.c.b16 %v3488, %v3472
    %v4001 = vpack.c.b16 %v3489, %v3473
    %4514 = vmatpush.bf16.msra.mxu0 %v3602
    %4515 = vmatpush.bf16.msra.mxu0 %v3586
    %4516 = vmatpush.bf16.msra.mxu0 %v3570
    %4517 = vmatpush.bf16.msra.mxu0 %v3554
    %4518 = vmatpush.bf16.msra.mxu0 %v3538
    %4519 = vmatpush.bf16.msra.mxu0 %v3522
    %4520 = vmatpush.bf16.msra.mxu0 %v3506
    %4521 = vmatpush.bf16.msra.mxu0 %v3490
    %4522 = vmatmul.bf16.gmra.mxu0 %v1402
    %v4523 = vpop.f32.mrf.mxu0
    %v4524 = vadd.f32 %v1922, %v4523
    %v4525 = vpop.f32.mrf.mxu0
    %4526 = vdwg.mxu0
    %4527 = vmatpush.bf16.msra.mxu0 %v3730
    %4528 = vmatpush.bf16.msra.mxu0 %v3714
    %4529 = vmatpush.bf16.msra.mxu0 %v3698
    %4530 = vmatpush.bf16.msra.mxu0 %v3682
    %4531 = vmatpush.bf16.msra.mxu0 %v3666
    %4532 = vmatpush.bf16.msra.mxu0 %v3650
    %4533 = vmatpush.bf16.msra.mxu0 %v3634
    %4534 = vmatpush.bf16.msra.mxu0 %v3618
    %4535 = vmatmul.bf16.gmra.mxu0 %v1403
    %v4536 = vpop.f32.mrf.mxu0
    %v4537 = vadd.f32 %v4524, %v4536
    %v4538 = vpop.f32.mrf.mxu0
    %4539 = vdwg.mxu0
    %4540 = vmatpush.bf16.msra.mxu0 %v3858
    %4541 = vmatpush.bf16.msra.mxu0 %v3842
    %4542 = vmatpush.bf16.msra.mxu0 %v3826
    %4543 = vmatpush.bf16.msra.mxu0 %v3810
    %4544 = vmatpush.bf16.msra.mxu0 %v3794
    %4545 = vmatpush.bf16.msra.mxu0 %v3778
    %4546 = vmatpush.bf16.msra.mxu0 %v3762
    %4547 = vmatpush.bf16.msra.mxu0 %v3746
    %4548 = vmatmul.bf16.gmra.mxu0 %v1404
    %v4549 = vpop.f32.mrf.mxu0
    %v4550 = vadd.f32 %v4537, %v4549
    %v4551 = vpop.f32.mrf.mxu0
    %4552 = vdwg.mxu0
    %4553 = vmatpush.bf16.msra.mxu0 %v3986
    %4554 = vmatpush.bf16.msra.mxu0 %v3970
    %4555 = vmatpush.bf16.msra.mxu0 %v3954
    %4556 = vmatpush.bf16.msra.mxu0 %v3938
    %4557 = vmatpush.bf16.msra.mxu0 %v3922
    %4558 = vmatpush.bf16.msra.mxu0 %v3906
    %4559 = vmatpush.bf16.msra.mxu0 %v3890
    %4560 = vmatpush.bf16.msra.mxu0 %v3874
    %4561 = vmatmul.bf16.gmra.mxu0 %v1405
    %v4562 = vpop.f32.mrf.mxu0
    %v4563 = vadd.f32 %v4550, %v4562
    %v4564 = vpop.f32.mrf.mxu0
    %4565 = vdwg.mxu0
    %4566 = vmatpush.bf16.msra.mxu0 %v3603
    %4567 = vmatpush.bf16.msra.mxu0 %v3587
    %4568 = vmatpush.bf16.msra.mxu0 %v3571
    %4569 = vmatpush.bf16.msra.mxu0 %v3555
    %4570 = vmatpush.bf16.msra.mxu0 %v3539
    %4571 = vmatpush.bf16.msra.mxu0 %v3523
    %4572 = vmatpush.bf16.msra.mxu0 %v3507
    %4573 = vmatpush.bf16.msra.mxu0 %v3491
    %4574 = vmatmul.bf16.gmra.mxu0 %v1402
    %v4575 = vpop.f32.mrf.mxu0
    %v4576 = vadd.f32 %v1923, %v4575
    %v4577 = vpop.f32.mrf.mxu0
    %4578 = vdwg.mxu0
    %4579 = vmatpush.bf16.msra.mxu0 %v3731
    %4580 = vmatpush.bf16.msra.mxu0 %v3715
    %4581 = vmatpush.bf16.msra.mxu0 %v3699
    %4582 = vmatpush.bf16.msra.mxu0 %v3683
    %4583 = vmatpush.bf16.msra.mxu0 %v3667
    %4584 = vmatpush.bf16.msra.mxu0 %v3651
    %4585 = vmatpush.bf16.msra.mxu0 %v3635
    %4586 = vmatpush.bf16.msra.mxu0 %v3619
    %4587 = vmatmul.bf16.gmra.mxu0 %v1403
    %v4588 = vpop.f32.mrf.mxu0
    %v4589 = vadd.f32 %v4576, %v4588
    %v4590 = vpop.f32.mrf.mxu0
    %4591 = vdwg.mxu0
    %4592 = vmatpush.bf16.msra.mxu0 %v3859
    %4593 = vmatpush.bf16.msra.mxu0 %v3843
    %4594 = vmatpush.bf16.msra.mxu0 %v3827
    %4595 = vmatpush.bf16.msra.mxu0 %v3811
    %4596 = vmatpush.bf16.msra.mxu0 %v3795
    %4597 = vmatpush.bf16.msra.mxu0 %v3779
    %4598 = vmatpush.bf16.msra.mxu0 %v3763
    %4599 = vmatpush.bf16.msra.mxu0 %v3747
    %4600 = vmatmul.bf16.gmra.mxu0 %v1404
    %v4601 = vpop.f32.mrf.mxu0
    %v4602 = vadd.f32 %v4589, %v4601
    %v4603 = vpop.f32.mrf.mxu0
    %4604 = vdwg.mxu0
    %4605 = vmatpush.bf16.msra.mxu0 %v3987
    %4606 = vmatpush.bf16.msra.mxu0 %v3971
    %4607 = vmatpush.bf16.msra.mxu0 %v3955
    %4608 = vmatpush.bf16.msra.mxu0 %v3939
    %4609 = vmatpush.bf16.msra.mxu0 %v3923
    %4610 = vmatpush.bf16.msra.mxu0 %v3907
    %4611 = vmatpush.bf16.msra.mxu0 %v3891
    %4612 = vmatpush.bf16.msra.mxu0 %v3875
    %4613 = vmatmul.bf16.gmra.mxu0 %v1405
    %v4614 = vpop.f32.mrf.mxu0
    %v4615 = vadd.f32 %v4602, %v4614
    %v4616 = vpop.f32.mrf.mxu0
    %4617 = vdwg.mxu0
    %4618 = vmatpush.bf16.msra.mxu0 %v3604
    %4619 = vmatpush.bf16.msra.mxu0 %v3588
    %4620 = vmatpush.bf16.msra.mxu0 %v3572
    %4621 = vmatpush.bf16.msra.mxu0 %v3556
    %4622 = vmatpush.bf16.msra.mxu0 %v3540
    %4623 = vmatpush.bf16.msra.mxu0 %v3524
    %4624 = vmatpush.bf16.msra.mxu0 %v3508
    %4625 = vmatpush.bf16.msra.mxu0 %v3492
    %4626 = vmatmul.bf16.gmra.mxu0 %v1402
    %v4627 = vpop.f32.mrf.mxu0
    %v4628 = vadd.f32 %v1924, %v4627
    %v4629 = vpop.f32.mrf.mxu0
    %4630 = vdwg.mxu0
    %4631 = vmatpush.bf16.msra.mxu0 %v3732
    %4632 = vmatpush.bf16.msra.mxu0 %v3716
    %4633 = vmatpush.bf16.msra.mxu0 %v3700
    %4634 = vmatpush.bf16.msra.mxu0 %v3684
    %4635 = vmatpush.bf16.msra.mxu0 %v3668
    %4636 = vmatpush.bf16.msra.mxu0 %v3652
    %4637 = vmatpush.bf16.msra.mxu0 %v3636
    %4638 = vmatpush.bf16.msra.mxu0 %v3620
    %4639 = vmatmul.bf16.gmra.mxu0 %v1403
    %v4640 = vpop.f32.mrf.mxu0
    %v4641 = vadd.f32 %v4628, %v4640
    %v4642 = vpop.f32.mrf.mxu0
    %4643 = vdwg.mxu0
    %4644 = vmatpush.bf16.msra.mxu0 %v3860
    %4645 = vmatpush.bf16.msra.mxu0 %v3844
    %4646 = vmatpush.bf16.msra.mxu0 %v3828
    %4647 = vmatpush.bf16.msra.mxu0 %v3812
    %4648 = vmatpush.bf16.msra.mxu0 %v3796
    %4649 = vmatpush.bf16.msra.mxu0 %v3780
    %4650 = vmatpush.bf16.msra.mxu0 %v3764
    %4651 = vmatpush.bf16.msra.mxu0 %v3748
    %4652 = vmatmul.bf16.gmra.mxu0 %v1404
    %v4653 = vpop.f32.mrf.mxu0
    %v4654 = vadd.f32 %v4641, %v4653
    %v4655 = vpop.f32.mrf.mxu0
    %4656 = vdwg.mxu0
    %4657 = vmatpush.bf16.msra.mxu0 %v3988
    %4658 = vmatpush.bf16.msra.mxu0 %v3972
    %4659 = vmatpush.bf16.msra.mxu0 %v3956
    %4660 = vmatpush.bf16.msra.mxu0 %v3940
    %4661 = vmatpush.bf16.msra.mxu0 %v3924
    %4662 = vmatpush.bf16.msra.mxu0 %v3908
    %4663 = vmatpush.bf16.msra.mxu0 %v3892
    %4664 = vmatpush.bf16.msra.mxu0 %v3876
    %4665 = vmatmul.bf16.gmra.mxu0 %v1405
    %v4666 = vpop.f32.mrf.mxu0
    %v4667 = vadd.f32 %v4654, %v4666
    %v4668 = vpop.f32.mrf.mxu0
    %4669 = vdwg.mxu0
    %4670 = vmatpush.bf16.msra.mxu0 %v3605
    %4671 = vmatpush.bf16.msra.mxu0 %v3589
    %4672 = vmatpush.bf16.msra.mxu0 %v3573
    %4673 = vmatpush.bf16.msra.mxu0 %v3557
    %4674 = vmatpush.bf16.msra.mxu0 %v3541
    %4675 = vmatpush.bf16.msra.mxu0 %v3525
    %4676 = vmatpush.bf16.msra.mxu0 %v3509
    %4677 = vmatpush.bf16.msra.mxu0 %v3493
    %4678 = vmatmul.bf16.gmra.mxu0 %v1402
    %v4679 = vpop.f32.mrf.mxu0
    %v4680 = vadd.f32 %v1925, %v4679
    %v4681 = vpop.f32.mrf.mxu0
    %4682 = vdwg.mxu0
    %4683 = vmatpush.bf16.msra.mxu0 %v3733
    %4684 = vmatpush.bf16.msra.mxu0 %v3717
    %4685 = vmatpush.bf16.msra.mxu0 %v3701
    %4686 = vmatpush.bf16.msra.mxu0 %v3685
    %4687 = vmatpush.bf16.msra.mxu0 %v3669
    %4688 = vmatpush.bf16.msra.mxu0 %v3653
    %4689 = vmatpush.bf16.msra.mxu0 %v3637
    %4690 = vmatpush.bf16.msra.mxu0 %v3621
    %4691 = vmatmul.bf16.gmra.mxu0 %v1403
    %v4692 = vpop.f32.mrf.mxu0
    %v4693 = vadd.f32 %v4680, %v4692
    %v4694 = vpop.f32.mrf.mxu0
    %4695 = vdwg.mxu0
    %4696 = vmatpush.bf16.msra.mxu0 %v3861
    %4697 = vmatpush.bf16.msra.mxu0 %v3845
    %4698 = vmatpush.bf16.msra.mxu0 %v3829
    %4699 = vmatpush.bf16.msra.mxu0 %v3813
    %4700 = vmatpush.bf16.msra.mxu0 %v3797
    %4701 = vmatpush.bf16.msra.mxu0 %v3781
    %4702 = vmatpush.bf16.msra.mxu0 %v3765
    %4703 = vmatpush.bf16.msra.mxu0 %v3749
    %4704 = vmatmul.bf16.gmra.mxu0 %v1404
    %v4705 = vpop.f32.mrf.mxu0
    %v4706 = vadd.f32 %v4693, %v4705
    %v4707 = vpop.f32.mrf.mxu0
    %4708 = vdwg.mxu0
    %4709 = vmatpush.bf16.msra.mxu0 %v3989
    %4710 = vmatpush.bf16.msra.mxu0 %v3973
    %4711 = vmatpush.bf16.msra.mxu0 %v3957
    %4712 = vmatpush.bf16.msra.mxu0 %v3941
    %4713 = vmatpush.bf16.msra.mxu0 %v3925
    %4714 = vmatpush.bf16.msra.mxu0 %v3909
    %4715 = vmatpush.bf16.msra.mxu0 %v3893
    %4716 = vmatpush.bf16.msra.mxu0 %v3877
    %4717 = vmatmul.bf16.gmra.mxu0 %v1405
    %v4718 = vpop.f32.mrf.mxu0
    %v4719 = vadd.f32 %v4706, %v4718
    %v4720 = vpop.f32.mrf.mxu0
    %4721 = vdwg.mxu0
    %4722 = vmatpush.bf16.msra.mxu0 %v3606
    %4723 = vmatpush.bf16.msra.mxu0 %v3590
    %4724 = vmatpush.bf16.msra.mxu0 %v3574
    %4725 = vmatpush.bf16.msra.mxu0 %v3558
    %4726 = vmatpush.bf16.msra.mxu0 %v3542
    %4727 = vmatpush.bf16.msra.mxu0 %v3526
    %4728 = vmatpush.bf16.msra.mxu0 %v3510
    %4729 = vmatpush.bf16.msra.mxu0 %v3494
    %4730 = vmatmul.bf16.gmra.mxu0 %v1402
    %v4731 = vpop.f32.mrf.mxu0
    %v4732 = vadd.f32 %v1926, %v4731
    %v4733 = vpop.f32.mrf.mxu0
    %4734 = vdwg.mxu0
    %4735 = vmatpush.bf16.msra.mxu0 %v3734
    %4736 = vmatpush.bf16.msra.mxu0 %v3718
    %4737 = vmatpush.bf16.msra.mxu0 %v3702
    %4738 = vmatpush.bf16.msra.mxu0 %v3686
    %4739 = vmatpush.bf16.msra.mxu0 %v3670
    %4740 = vmatpush.bf16.msra.mxu0 %v3654
    %4741 = vmatpush.bf16.msra.mxu0 %v3638
    %4742 = vmatpush.bf16.msra.mxu0 %v3622
    %4743 = vmatmul.bf16.gmra.mxu0 %v1403
    %v4744 = vpop.f32.mrf.mxu0
    %v4745 = vadd.f32 %v4732, %v4744
    %v4746 = vpop.f32.mrf.mxu0
    %4747 = vdwg.mxu0
    %4748 = vmatpush.bf16.msra.mxu0 %v3862
    %4749 = vmatpush.bf16.msra.mxu0 %v3846
    %4750 = vmatpush.bf16.msra.mxu0 %v3830
    %4751 = vmatpush.bf16.msra.mxu0 %v3814
    %4752 = vmatpush.bf16.msra.mxu0 %v3798
    %4753 = vmatpush.bf16.msra.mxu0 %v3782
    %4754 = vmatpush.bf16.msra.mxu0 %v3766
    %4755 = vmatpush.bf16.msra.mxu0 %v3750
    %4756 = vmatmul.bf16.gmra.mxu0 %v1404
    %v4757 = vpop.f32.mrf.mxu0
    %v4758 = vadd.f32 %v4745, %v4757
    %v4759 = vpop.f32.mrf.mxu0
    %4760 = vdwg.mxu0
    %4761 = vmatpush.bf16.msra.mxu0 %v3990
    %4762 = vmatpush.bf16.msra.mxu0 %v3974
    %4763 = vmatpush.bf16.msra.mxu0 %v3958
    %4764 = vmatpush.bf16.msra.mxu0 %v3942
    %4765 = vmatpush.bf16.msra.mxu0 %v3926
    %4766 = vmatpush.bf16.msra.mxu0 %v3910
    %4767 = vmatpush.bf16.msra.mxu0 %v3894
    %4768 = vmatpush.bf16.msra.mxu0 %v3878
    %4769 = vmatmul.bf16.gmra.mxu0 %v1405
    %v4770 = vpop.f32.mrf.mxu0
    %v4771 = vadd.f32 %v4758, %v4770
    %v4772 = vpop.f32.mrf.mxu0
    %4773 = vdwg.mxu0
    %4774 = vmatpush.bf16.msra.mxu0 %v3607
    %4775 = vmatpush.bf16.msra.mxu0 %v3591
    %4776 = vmatpush.bf16.msra.mxu0 %v3575
    %4777 = vmatpush.bf16.msra.mxu0 %v3559
    %4778 = vmatpush.bf16.msra.mxu0 %v3543
    %4779 = vmatpush.bf16.msra.mxu0 %v3527
    %4780 = vmatpush.bf16.msra.mxu0 %v3511
    %4781 = vmatpush.bf16.msra.mxu0 %v3495
    %4782 = vmatmul.bf16.gmra.mxu0 %v1402
    %v4783 = vpop.f32.mrf.mxu0
    %v4784 = vadd.f32 %v1927, %v4783
    %v4785 = vpop.f32.mrf.mxu0
    %4786 = vdwg.mxu0
    %4787 = vmatpush.bf16.msra.mxu0 %v3735
    %4788 = vmatpush.bf16.msra.mxu0 %v3719
    %4789 = vmatpush.bf16.msra.mxu0 %v3703
    %4790 = vmatpush.bf16.msra.mxu0 %v3687
    %4791 = vmatpush.bf16.msra.mxu0 %v3671
    %4792 = vmatpush.bf16.msra.mxu0 %v3655
    %4793 = vmatpush.bf16.msra.mxu0 %v3639
    %4794 = vmatpush.bf16.msra.mxu0 %v3623
    %4795 = vmatmul.bf16.gmra.mxu0 %v1403
    %v4796 = vpop.f32.mrf.mxu0
    %v4797 = vadd.f32 %v4784, %v4796
    %v4798 = vpop.f32.mrf.mxu0
    %4799 = vdwg.mxu0
    %4800 = vmatpush.bf16.msra.mxu0 %v3863
    %4801 = vmatpush.bf16.msra.mxu0 %v3847
    %4802 = vmatpush.bf16.msra.mxu0 %v3831
    %4803 = vmatpush.bf16.msra.mxu0 %v3815
    %4804 = vmatpush.bf16.msra.mxu0 %v3799
    %4805 = vmatpush.bf16.msra.mxu0 %v3783
    %4806 = vmatpush.bf16.msra.mxu0 %v3767
    %4807 = vmatpush.bf16.msra.mxu0 %v3751
    %4808 = vmatmul.bf16.gmra.mxu0 %v1404
    %v4809 = vpop.f32.mrf.mxu0
    %v4810 = vadd.f32 %v4797, %v4809
    %v4811 = vpop.f32.mrf.mxu0
    %4812 = vdwg.mxu0
    %4813 = vmatpush.bf16.msra.mxu0 %v3991
    %4814 = vmatpush.bf16.msra.mxu0 %v3975
    %4815 = vmatpush.bf16.msra.mxu0 %v3959
    %4816 = vmatpush.bf16.msra.mxu0 %v3943
    %4817 = vmatpush.bf16.msra.mxu0 %v3927
    %4818 = vmatpush.bf16.msra.mxu0 %v3911
    %4819 = vmatpush.bf16.msra.mxu0 %v3895
    %4820 = vmatpush.bf16.msra.mxu0 %v3879
    %4821 = vmatmul.bf16.gmra.mxu0 %v1405
    %v4822 = vpop.f32.mrf.mxu0
    %v4823 = vadd.f32 %v4810, %v4822
    %v4824 = vpop.f32.mrf.mxu0
    %4825 = vdwg.mxu0
    %4826 = vmatpush.bf16.msra.mxu0 %v3608
    %4827 = vmatpush.bf16.msra.mxu0 %v3592
    %4828 = vmatpush.bf16.msra.mxu0 %v3576
    %4829 = vmatpush.bf16.msra.mxu0 %v3560
    %4830 = vmatpush.bf16.msra.mxu0 %v3544
    %4831 = vmatpush.bf16.msra.mxu0 %v3528
    %4832 = vmatpush.bf16.msra.mxu0 %v3512
    %4833 = vmatpush.bf16.msra.mxu0 %v3496
    %4834 = vmatmul.bf16.gmra.mxu0 %v1402
    %v4835 = vpop.f32.mrf.mxu0
    %v4836 = vadd.f32 %v1928, %v4835
    %v4837 = vpop.f32.mrf.mxu0
    %4838 = vdwg.mxu0
    %4839 = vmatpush.bf16.msra.mxu0 %v3736
    %4840 = vmatpush.bf16.msra.mxu0 %v3720
    %4841 = vmatpush.bf16.msra.mxu0 %v3704
    %4842 = vmatpush.bf16.msra.mxu0 %v3688
    %4843 = vmatpush.bf16.msra.mxu0 %v3672
    %4844 = vmatpush.bf16.msra.mxu0 %v3656
    %4845 = vmatpush.bf16.msra.mxu0 %v3640
    %4846 = vmatpush.bf16.msra.mxu0 %v3624
    %4847 = vmatmul.bf16.gmra.mxu0 %v1403
    %v4848 = vpop.f32.mrf.mxu0
    %v4849 = vadd.f32 %v4836, %v4848
    %v4850 = vpop.f32.mrf.mxu0
    %4851 = vdwg.mxu0
    %4852 = vmatpush.bf16.msra.mxu0 %v3864
    %4853 = vmatpush.bf16.msra.mxu0 %v3848
    %4854 = vmatpush.bf16.msra.mxu0 %v3832
    %4855 = vmatpush.bf16.msra.mxu0 %v3816
    %4856 = vmatpush.bf16.msra.mxu0 %v3800
    %4857 = vmatpush.bf16.msra.mxu0 %v3784
    %4858 = vmatpush.bf16.msra.mxu0 %v3768
    %4859 = vmatpush.bf16.msra.mxu0 %v3752
    %4860 = vmatmul.bf16.gmra.mxu0 %v1404
    %v4861 = vpop.f32.mrf.mxu0
    %v4862 = vadd.f32 %v4849, %v4861
    %v4863 = vpop.f32.mrf.mxu0
    %4864 = vdwg.mxu0
    %4865 = vmatpush.bf16.msra.mxu0 %v3992
    %4866 = vmatpush.bf16.msra.mxu0 %v3976
    %4867 = vmatpush.bf16.msra.mxu0 %v3960
    %4868 = vmatpush.bf16.msra.mxu0 %v3944
    %4869 = vmatpush.bf16.msra.mxu0 %v3928
    %4870 = vmatpush.bf16.msra.mxu0 %v3912
    %4871 = vmatpush.bf16.msra.mxu0 %v3896
    %4872 = vmatpush.bf16.msra.mxu0 %v3880
    %4873 = vmatmul.bf16.gmra.mxu0 %v1405
    %v4874 = vpop.f32.mrf.mxu0
    %v4875 = vadd.f32 %v4862, %v4874
    %v4876 = vpop.f32.mrf.mxu0
    %4877 = vdwg.mxu0
    %4878 = vmatpush.bf16.msra.mxu0 %v3609
    %4879 = vmatpush.bf16.msra.mxu0 %v3593
    %4880 = vmatpush.bf16.msra.mxu0 %v3577
    %4881 = vmatpush.bf16.msra.mxu0 %v3561
    %4882 = vmatpush.bf16.msra.mxu0 %v3545
    %4883 = vmatpush.bf16.msra.mxu0 %v3529
    %4884 = vmatpush.bf16.msra.mxu0 %v3513
    %4885 = vmatpush.bf16.msra.mxu0 %v3497
    %4886 = vmatmul.bf16.gmra.mxu0 %v1402
    %v4887 = vpop.f32.mrf.mxu0
    %v4888 = vadd.f32 %v1929, %v4887
    %v4889 = vpop.f32.mrf.mxu0
    %4890 = vdwg.mxu0
    %4891 = vmatpush.bf16.msra.mxu0 %v3737
    %4892 = vmatpush.bf16.msra.mxu0 %v3721
    %4893 = vmatpush.bf16.msra.mxu0 %v3705
    %4894 = vmatpush.bf16.msra.mxu0 %v3689
    %4895 = vmatpush.bf16.msra.mxu0 %v3673
    %4896 = vmatpush.bf16.msra.mxu0 %v3657
    %4897 = vmatpush.bf16.msra.mxu0 %v3641
    %4898 = vmatpush.bf16.msra.mxu0 %v3625
    %4899 = vmatmul.bf16.gmra.mxu0 %v1403
    %v4900 = vpop.f32.mrf.mxu0
    %v4901 = vadd.f32 %v4888, %v4900
    %v4902 = vpop.f32.mrf.mxu0
    %4903 = vdwg.mxu0
    %4904 = vmatpush.bf16.msra.mxu0 %v3865
    %4905 = vmatpush.bf16.msra.mxu0 %v3849
    %4906 = vmatpush.bf16.msra.mxu0 %v3833
    %4907 = vmatpush.bf16.msra.mxu0 %v3817
    %4908 = vmatpush.bf16.msra.mxu0 %v3801
    %4909 = vmatpush.bf16.msra.mxu0 %v3785
    %4910 = vmatpush.bf16.msra.mxu0 %v3769
    %4911 = vmatpush.bf16.msra.mxu0 %v3753
    %4912 = vmatmul.bf16.gmra.mxu0 %v1404
    %v4913 = vpop.f32.mrf.mxu0
    %v4914 = vadd.f32 %v4901, %v4913
    %v4915 = vpop.f32.mrf.mxu0
    %4916 = vdwg.mxu0
    %4917 = vmatpush.bf16.msra.mxu0 %v3993
    %4918 = vmatpush.bf16.msra.mxu0 %v3977
    %4919 = vmatpush.bf16.msra.mxu0 %v3961
    %4920 = vmatpush.bf16.msra.mxu0 %v3945
    %4921 = vmatpush.bf16.msra.mxu0 %v3929
    %4922 = vmatpush.bf16.msra.mxu0 %v3913
    %4923 = vmatpush.bf16.msra.mxu0 %v3897
    %4924 = vmatpush.bf16.msra.mxu0 %v3881
    %4925 = vmatmul.bf16.gmra.mxu0 %v1405
    %v4926 = vpop.f32.mrf.mxu0
    %v4927 = vadd.f32 %v4914, %v4926
    %v4928 = vpop.f32.mrf.mxu0
    %4929 = vdwg.mxu0
    %4930 = vmatpush.bf16.msra.mxu0 %v3610
    %4931 = vmatpush.bf16.msra.mxu0 %v3594
    %4932 = vmatpush.bf16.msra.mxu0 %v3578
    %4933 = vmatpush.bf16.msra.mxu0 %v3562
    %4934 = vmatpush.bf16.msra.mxu0 %v3546
    %4935 = vmatpush.bf16.msra.mxu0 %v3530
    %4936 = vmatpush.bf16.msra.mxu0 %v3514
    %4937 = vmatpush.bf16.msra.mxu0 %v3498
    %4938 = vmatmul.bf16.gmra.mxu0 %v1402
    %v4939 = vpop.f32.mrf.mxu0
    %v4940 = vadd.f32 %v1930, %v4939
    %v4941 = vpop.f32.mrf.mxu0
    %4942 = vdwg.mxu0
    %4943 = vmatpush.bf16.msra.mxu0 %v3738
    %4944 = vmatpush.bf16.msra.mxu0 %v3722
    %4945 = vmatpush.bf16.msra.mxu0 %v3706
    %4946 = vmatpush.bf16.msra.mxu0 %v3690
    %4947 = vmatpush.bf16.msra.mxu0 %v3674
    %4948 = vmatpush.bf16.msra.mxu0 %v3658
    %4949 = vmatpush.bf16.msra.mxu0 %v3642
    %4950 = vmatpush.bf16.msra.mxu0 %v3626
    %4951 = vmatmul.bf16.gmra.mxu0 %v1403
    %v4952 = vpop.f32.mrf.mxu0
    %v4953 = vadd.f32 %v4940, %v4952
    %v4954 = vpop.f32.mrf.mxu0
    %4955 = vdwg.mxu0
    %4956 = vmatpush.bf16.msra.mxu0 %v3866
    %4957 = vmatpush.bf16.msra.mxu0 %v3850
    %4958 = vmatpush.bf16.msra.mxu0 %v3834
    %4959 = vmatpush.bf16.msra.mxu0 %v3818
    %4960 = vmatpush.bf16.msra.mxu0 %v3802
    %4961 = vmatpush.bf16.msra.mxu0 %v3786
    %4962 = vmatpush.bf16.msra.mxu0 %v3770
    %4963 = vmatpush.bf16.msra.mxu0 %v3754
    %4964 = vmatmul.bf16.gmra.mxu0 %v1404
    %v4965 = vpop.f32.mrf.mxu0
    %v4966 = vadd.f32 %v4953, %v4965
    %v4967 = vpop.f32.mrf.mxu0
    %4968 = vdwg.mxu0
    %4969 = vmatpush.bf16.msra.mxu0 %v3994
    %4970 = vmatpush.bf16.msra.mxu0 %v3978
    %4971 = vmatpush.bf16.msra.mxu0 %v3962
    %4972 = vmatpush.bf16.msra.mxu0 %v3946
    %4973 = vmatpush.bf16.msra.mxu0 %v3930
    %4974 = vmatpush.bf16.msra.mxu0 %v3914
    %4975 = vmatpush.bf16.msra.mxu0 %v3898
    %4976 = vmatpush.bf16.msra.mxu0 %v3882
    %4977 = vmatmul.bf16.gmra.mxu0 %v1405
    %v4978 = vpop.f32.mrf.mxu0
    %v4979 = vadd.f32 %v4966, %v4978
    %v4980 = vpop.f32.mrf.mxu0
    %4981 = vdwg.mxu0
    %4982 = vmatpush.bf16.msra.mxu0 %v3611
    %4983 = vmatpush.bf16.msra.mxu0 %v3595
    %4984 = vmatpush.bf16.msra.mxu0 %v3579
    %4985 = vmatpush.bf16.msra.mxu0 %v3563
    %4986 = vmatpush.bf16.msra.mxu0 %v3547
    %4987 = vmatpush.bf16.msra.mxu0 %v3531
    %4988 = vmatpush.bf16.msra.mxu0 %v3515
    %4989 = vmatpush.bf16.msra.mxu0 %v3499
    %4990 = vmatmul.bf16.gmra.mxu0 %v1402
    %v4991 = vpop.f32.mrf.mxu0
    %v4992 = vadd.f32 %v1931, %v4991
    %v4993 = vpop.f32.mrf.mxu0
    %4994 = vdwg.mxu0
    %4995 = vmatpush.bf16.msra.mxu0 %v3739
    %4996 = vmatpush.bf16.msra.mxu0 %v3723
    %4997 = vmatpush.bf16.msra.mxu0 %v3707
    %4998 = vmatpush.bf16.msra.mxu0 %v3691
    %4999 = vmatpush.bf16.msra.mxu0 %v3675
    %5000 = vmatpush.bf16.msra.mxu0 %v3659
    %5001 = vmatpush.bf16.msra.mxu0 %v3643
    %5002 = vmatpush.bf16.msra.mxu0 %v3627
    %5003 = vmatmul.bf16.gmra.mxu0 %v1403
    %v5004 = vpop.f32.mrf.mxu0
    %v5005 = vadd.f32 %v4992, %v5004
    %v5006 = vpop.f32.mrf.mxu0
    %5007 = vdwg.mxu0
    %5008 = vmatpush.bf16.msra.mxu0 %v3867
    %5009 = vmatpush.bf16.msra.mxu0 %v3851
    %5010 = vmatpush.bf16.msra.mxu0 %v3835
    %5011 = vmatpush.bf16.msra.mxu0 %v3819
    %5012 = vmatpush.bf16.msra.mxu0 %v3803
    %5013 = vmatpush.bf16.msra.mxu0 %v3787
    %5014 = vmatpush.bf16.msra.mxu0 %v3771
    %5015 = vmatpush.bf16.msra.mxu0 %v3755
    %5016 = vmatmul.bf16.gmra.mxu0 %v1404
    %v5017 = vpop.f32.mrf.mxu0
    %v5018 = vadd.f32 %v5005, %v5017
    %v5019 = vpop.f32.mrf.mxu0
    %5020 = vdwg.mxu0
    %5021 = vmatpush.bf16.msra.mxu0 %v3995
    %5022 = vmatpush.bf16.msra.mxu0 %v3979
    %5023 = vmatpush.bf16.msra.mxu0 %v3963
    %5024 = vmatpush.bf16.msra.mxu0 %v3947
    %5025 = vmatpush.bf16.msra.mxu0 %v3931
    %5026 = vmatpush.bf16.msra.mxu0 %v3915
    %5027 = vmatpush.bf16.msra.mxu0 %v3899
    %5028 = vmatpush.bf16.msra.mxu0 %v3883
    %5029 = vmatmul.bf16.gmra.mxu0 %v1405
    %v5030 = vpop.f32.mrf.mxu0
    %v5031 = vadd.f32 %v5018, %v5030
    %v5032 = vpop.f32.mrf.mxu0
    %5033 = vdwg.mxu0
    %5034 = vmatpush.bf16.msra.mxu0 %v3612
    %5035 = vmatpush.bf16.msra.mxu0 %v3596
    %5036 = vmatpush.bf16.msra.mxu0 %v3580
    %5037 = vmatpush.bf16.msra.mxu0 %v3564
    %5038 = vmatpush.bf16.msra.mxu0 %v3548
    %5039 = vmatpush.bf16.msra.mxu0 %v3532
    %5040 = vmatpush.bf16.msra.mxu0 %v3516
    %5041 = vmatpush.bf16.msra.mxu0 %v3500
    %5042 = vmatmul.bf16.gmra.mxu0 %v1402
    %v5043 = vpop.f32.mrf.mxu0
    %v5044 = vadd.f32 %v1932, %v5043
    %v5045 = vpop.f32.mrf.mxu0
    %5046 = vdwg.mxu0
    %5047 = vmatpush.bf16.msra.mxu0 %v3740
    %5048 = vmatpush.bf16.msra.mxu0 %v3724
    %5049 = vmatpush.bf16.msra.mxu0 %v3708
    %5050 = vmatpush.bf16.msra.mxu0 %v3692
    %5051 = vmatpush.bf16.msra.mxu0 %v3676
    %5052 = vmatpush.bf16.msra.mxu0 %v3660
    %5053 = vmatpush.bf16.msra.mxu0 %v3644
    %5054 = vmatpush.bf16.msra.mxu0 %v3628
    %5055 = vmatmul.bf16.gmra.mxu0 %v1403
    %v5056 = vpop.f32.mrf.mxu0
    %v5057 = vadd.f32 %v5044, %v5056
    %v5058 = vpop.f32.mrf.mxu0
    %5059 = vdwg.mxu0
    %5060 = vmatpush.bf16.msra.mxu0 %v3868
    %5061 = vmatpush.bf16.msra.mxu0 %v3852
    %5062 = vmatpush.bf16.msra.mxu0 %v3836
    %5063 = vmatpush.bf16.msra.mxu0 %v3820
    %5064 = vmatpush.bf16.msra.mxu0 %v3804
    %5065 = vmatpush.bf16.msra.mxu0 %v3788
    %5066 = vmatpush.bf16.msra.mxu0 %v3772
    %5067 = vmatpush.bf16.msra.mxu0 %v3756
    %5068 = vmatmul.bf16.gmra.mxu0 %v1404
    %v5069 = vpop.f32.mrf.mxu0
    %v5070 = vadd.f32 %v5057, %v5069
    %v5071 = vpop.f32.mrf.mxu0
    %5072 = vdwg.mxu0
    %5073 = vmatpush.bf16.msra.mxu0 %v3996
    %5074 = vmatpush.bf16.msra.mxu0 %v3980
    %5075 = vmatpush.bf16.msra.mxu0 %v3964
    %5076 = vmatpush.bf16.msra.mxu0 %v3948
    %5077 = vmatpush.bf16.msra.mxu0 %v3932
    %5078 = vmatpush.bf16.msra.mxu0 %v3916
    %5079 = vmatpush.bf16.msra.mxu0 %v3900
    %5080 = vmatpush.bf16.msra.mxu0 %v3884
    %5081 = vmatmul.bf16.gmra.mxu0 %v1405
    %v5082 = vpop.f32.mrf.mxu0
    %v5083 = vadd.f32 %v5070, %v5082
    %v5084 = vpop.f32.mrf.mxu0
    %5085 = vdwg.mxu0
    %5086 = vmatpush.bf16.msra.mxu0 %v3613
    %5087 = vmatpush.bf16.msra.mxu0 %v3597
    %5088 = vmatpush.bf16.msra.mxu0 %v3581
    %5089 = vmatpush.bf16.msra.mxu0 %v3565
    %5090 = vmatpush.bf16.msra.mxu0 %v3549
    %5091 = vmatpush.bf16.msra.mxu0 %v3533
    %5092 = vmatpush.bf16.msra.mxu0 %v3517
    %5093 = vmatpush.bf16.msra.mxu0 %v3501
    %5094 = vmatmul.bf16.gmra.mxu0 %v1402
    %v5095 = vpop.f32.mrf.mxu0
    %v5096 = vadd.f32 %v1933, %v5095
    %v5097 = vpop.f32.mrf.mxu0
    %5098 = vdwg.mxu0
    %5099 = vmatpush.bf16.msra.mxu0 %v3741
    %5100 = vmatpush.bf16.msra.mxu0 %v3725
    %5101 = vmatpush.bf16.msra.mxu0 %v3709
    %5102 = vmatpush.bf16.msra.mxu0 %v3693
    %5103 = vmatpush.bf16.msra.mxu0 %v3677
    %5104 = vmatpush.bf16.msra.mxu0 %v3661
    %5105 = vmatpush.bf16.msra.mxu0 %v3645
    %5106 = vmatpush.bf16.msra.mxu0 %v3629
    %5107 = vmatmul.bf16.gmra.mxu0 %v1403
    %v5108 = vpop.f32.mrf.mxu0
    %v5109 = vadd.f32 %v5096, %v5108
    %v5110 = vpop.f32.mrf.mxu0
    %5111 = vdwg.mxu0
    %5112 = vmatpush.bf16.msra.mxu0 %v3869
    %5113 = vmatpush.bf16.msra.mxu0 %v3853
    %5114 = vmatpush.bf16.msra.mxu0 %v3837
    %5115 = vmatpush.bf16.msra.mxu0 %v3821
    %5116 = vmatpush.bf16.msra.mxu0 %v3805
    %5117 = vmatpush.bf16.msra.mxu0 %v3789
    %5118 = vmatpush.bf16.msra.mxu0 %v3773
    %5119 = vmatpush.bf16.msra.mxu0 %v3757
    %5120 = vmatmul.bf16.gmra.mxu0 %v1404
    %v5121 = vpop.f32.mrf.mxu0
    %v5122 = vadd.f32 %v5109, %v5121
    %v5123 = vpop.f32.mrf.mxu0
    %5124 = vdwg.mxu0
    %5125 = vmatpush.bf16.msra.mxu0 %v3997
    %5126 = vmatpush.bf16.msra.mxu0 %v3981
    %5127 = vmatpush.bf16.msra.mxu0 %v3965
    %5128 = vmatpush.bf16.msra.mxu0 %v3949
    %5129 = vmatpush.bf16.msra.mxu0 %v3933
    %5130 = vmatpush.bf16.msra.mxu0 %v3917
    %5131 = vmatpush.bf16.msra.mxu0 %v3901
    %5132 = vmatpush.bf16.msra.mxu0 %v3885
    %5133 = vmatmul.bf16.gmra.mxu0 %v1405
    %v5134 = vpop.f32.mrf.mxu0
    %v5135 = vadd.f32 %v5122, %v5134
    %v5136 = vpop.f32.mrf.mxu0
    %5137 = vdwg.mxu0
    %5138 = vmatpush.bf16.msra.mxu0 %v3614
    %5139 = vmatpush.bf16.msra.mxu0 %v3598
    %5140 = vmatpush.bf16.msra.mxu0 %v3582
    %5141 = vmatpush.bf16.msra.mxu0 %v3566
    %5142 = vmatpush.bf16.msra.mxu0 %v3550
    %5143 = vmatpush.bf16.msra.mxu0 %v3534
    %5144 = vmatpush.bf16.msra.mxu0 %v3518
    %5145 = vmatpush.bf16.msra.mxu0 %v3502
    %5146 = vmatmul.bf16.gmra.mxu0 %v1402
    %v5147 = vpop.f32.mrf.mxu0
    %v5148 = vadd.f32 %v1934, %v5147
    %v5149 = vpop.f32.mrf.mxu0
    %5150 = vdwg.mxu0
    %5151 = vmatpush.bf16.msra.mxu0 %v3742
    %5152 = vmatpush.bf16.msra.mxu0 %v3726
    %5153 = vmatpush.bf16.msra.mxu0 %v3710
    %5154 = vmatpush.bf16.msra.mxu0 %v3694
    %5155 = vmatpush.bf16.msra.mxu0 %v3678
    %5156 = vmatpush.bf16.msra.mxu0 %v3662
    %5157 = vmatpush.bf16.msra.mxu0 %v3646
    %5158 = vmatpush.bf16.msra.mxu0 %v3630
    %5159 = vmatmul.bf16.gmra.mxu0 %v1403
    %v5160 = vpop.f32.mrf.mxu0
    %v5161 = vadd.f32 %v5148, %v5160
    %v5162 = vpop.f32.mrf.mxu0
    %5163 = vdwg.mxu0
    %5164 = vmatpush.bf16.msra.mxu0 %v3870
    %5165 = vmatpush.bf16.msra.mxu0 %v3854
    %5166 = vmatpush.bf16.msra.mxu0 %v3838
    %5167 = vmatpush.bf16.msra.mxu0 %v3822
    %5168 = vmatpush.bf16.msra.mxu0 %v3806
    %5169 = vmatpush.bf16.msra.mxu0 %v3790
    %5170 = vmatpush.bf16.msra.mxu0 %v3774
    %5171 = vmatpush.bf16.msra.mxu0 %v3758
    %5172 = vmatmul.bf16.gmra.mxu0 %v1404
    %v5173 = vpop.f32.mrf.mxu0
    %v5174 = vadd.f32 %v5161, %v5173
    %v5175 = vpop.f32.mrf.mxu0
    %5176 = vdwg.mxu0
    %5177 = vmatpush.bf16.msra.mxu0 %v3998
    %5178 = vmatpush.bf16.msra.mxu0 %v3982
    %5179 = vmatpush.bf16.msra.mxu0 %v3966
    %5180 = vmatpush.bf16.msra.mxu0 %v3950
    %5181 = vmatpush.bf16.msra.mxu0 %v3934
    %5182 = vmatpush.bf16.msra.mxu0 %v3918
    %5183 = vmatpush.bf16.msra.mxu0 %v3902
    %5184 = vmatpush.bf16.msra.mxu0 %v3886
    %5185 = vmatmul.bf16.gmra.mxu0 %v1405
    %v5186 = vpop.f32.mrf.mxu0
    %v5187 = vadd.f32 %v5174, %v5186
    %v5188 = vpop.f32.mrf.mxu0
    %5189 = vdwg.mxu0
    %5190 = vmatpush.bf16.msra.mxu0 %v3615
    %5191 = vmatpush.bf16.msra.mxu0 %v3599
    %5192 = vmatpush.bf16.msra.mxu0 %v3583
    %5193 = vmatpush.bf16.msra.mxu0 %v3567
    %5194 = vmatpush.bf16.msra.mxu0 %v3551
    %5195 = vmatpush.bf16.msra.mxu0 %v3535
    %5196 = vmatpush.bf16.msra.mxu0 %v3519
    %5197 = vmatpush.bf16.msra.mxu0 %v3503
    %5198 = vmatmul.bf16.gmra.mxu0 %v1402
    %v5199 = vpop.f32.mrf.mxu0
    %v5200 = vadd.f32 %v1935, %v5199
    %v5201 = vpop.f32.mrf.mxu0
    %5202 = vdwg.mxu0
    %5203 = vmatpush.bf16.msra.mxu0 %v3743
    %5204 = vmatpush.bf16.msra.mxu0 %v3727
    %5205 = vmatpush.bf16.msra.mxu0 %v3711
    %5206 = vmatpush.bf16.msra.mxu0 %v3695
    %5207 = vmatpush.bf16.msra.mxu0 %v3679
    %5208 = vmatpush.bf16.msra.mxu0 %v3663
    %5209 = vmatpush.bf16.msra.mxu0 %v3647
    %5210 = vmatpush.bf16.msra.mxu0 %v3631
    %5211 = vmatmul.bf16.gmra.mxu0 %v1403
    %v5212 = vpop.f32.mrf.mxu0
    %v5213 = vadd.f32 %v5200, %v5212
    %v5214 = vpop.f32.mrf.mxu0
    %5215 = vdwg.mxu0
    %5216 = vmatpush.bf16.msra.mxu0 %v3871
    %5217 = vmatpush.bf16.msra.mxu0 %v3855
    %5218 = vmatpush.bf16.msra.mxu0 %v3839
    %5219 = vmatpush.bf16.msra.mxu0 %v3823
    %5220 = vmatpush.bf16.msra.mxu0 %v3807
    %5221 = vmatpush.bf16.msra.mxu0 %v3791
    %5222 = vmatpush.bf16.msra.mxu0 %v3775
    %5223 = vmatpush.bf16.msra.mxu0 %v3759
    %5224 = vmatmul.bf16.gmra.mxu0 %v1404
    %v5225 = vpop.f32.mrf.mxu0
    %v5226 = vadd.f32 %v5213, %v5225
    %v5227 = vpop.f32.mrf.mxu0
    %5228 = vdwg.mxu0
    %5229 = vmatpush.bf16.msra.mxu0 %v3999
    %5230 = vmatpush.bf16.msra.mxu0 %v3983
    %5231 = vmatpush.bf16.msra.mxu0 %v3967
    %5232 = vmatpush.bf16.msra.mxu0 %v3951
    %5233 = vmatpush.bf16.msra.mxu0 %v3935
    %5234 = vmatpush.bf16.msra.mxu0 %v3919
    %5235 = vmatpush.bf16.msra.mxu0 %v3903
    %5236 = vmatpush.bf16.msra.mxu0 %v3887
    %5237 = vmatmul.bf16.gmra.mxu0 %v1405
    %v5238 = vpop.f32.mrf.mxu0
    %v5239 = vadd.f32 %v5226, %v5238
    %v5240 = vpop.f32.mrf.mxu0
    %5241 = vdwg.mxu0
    %5242 = vmatpush.bf16.msra.mxu0 %v3616
    %5243 = vmatpush.bf16.msra.mxu0 %v3600
    %5244 = vmatpush.bf16.msra.mxu0 %v3584
    %5245 = vmatpush.bf16.msra.mxu0 %v3568
    %5246 = vmatpush.bf16.msra.mxu0 %v3552
    %5247 = vmatpush.bf16.msra.mxu0 %v3536
    %5248 = vmatpush.bf16.msra.mxu0 %v3520
    %5249 = vmatpush.bf16.msra.mxu0 %v3504
    %5250 = vmatmul.bf16.gmra.mxu0 %v1402
    %v5251 = vpop.f32.mrf.mxu0
    %v5252 = vadd.f32 %v1936, %v5251
    %v5253 = vpop.f32.mrf.mxu0
    %5254 = vdwg.mxu0
    %5255 = vmatpush.bf16.msra.mxu0 %v3744
    %5256 = vmatpush.bf16.msra.mxu0 %v3728
    %5257 = vmatpush.bf16.msra.mxu0 %v3712
    %5258 = vmatpush.bf16.msra.mxu0 %v3696
    %5259 = vmatpush.bf16.msra.mxu0 %v3680
    %5260 = vmatpush.bf16.msra.mxu0 %v3664
    %5261 = vmatpush.bf16.msra.mxu0 %v3648
    %5262 = vmatpush.bf16.msra.mxu0 %v3632
    %5263 = vmatmul.bf16.gmra.mxu0 %v1403
    %v5264 = vpop.f32.mrf.mxu0
    %v5265 = vadd.f32 %v5252, %v5264
    %v5266 = vpop.f32.mrf.mxu0
    %5267 = vdwg.mxu0
    %5268 = vmatpush.bf16.msra.mxu0 %v3872
    %5269 = vmatpush.bf16.msra.mxu0 %v3856
    %5270 = vmatpush.bf16.msra.mxu0 %v3840
    %5271 = vmatpush.bf16.msra.mxu0 %v3824
    %5272 = vmatpush.bf16.msra.mxu0 %v3808
    %5273 = vmatpush.bf16.msra.mxu0 %v3792
    %5274 = vmatpush.bf16.msra.mxu0 %v3776
    %5275 = vmatpush.bf16.msra.mxu0 %v3760
    %5276 = vmatmul.bf16.gmra.mxu0 %v1404
    %v5277 = vpop.f32.mrf.mxu0
    %v5278 = vadd.f32 %v5265, %v5277
    %v5279 = vpop.f32.mrf.mxu0
    %5280 = vdwg.mxu0
    %5281 = vmatpush.bf16.msra.mxu0 %v4000
    %5282 = vmatpush.bf16.msra.mxu0 %v3984
    %5283 = vmatpush.bf16.msra.mxu0 %v3968
    %5284 = vmatpush.bf16.msra.mxu0 %v3952
    %5285 = vmatpush.bf16.msra.mxu0 %v3936
    %5286 = vmatpush.bf16.msra.mxu0 %v3920
    %5287 = vmatpush.bf16.msra.mxu0 %v3904
    %5288 = vmatpush.bf16.msra.mxu0 %v3888
    %5289 = vmatmul.bf16.gmra.mxu0 %v1405
    %v5290 = vpop.f32.mrf.mxu0
    %v5291 = vadd.f32 %v5278, %v5290
    %v5292 = vpop.f32.mrf.mxu0
    %5293 = vdwg.mxu0
    %5294 = vmatpush.bf16.msra.mxu0 %v3617
    %5295 = vmatpush.bf16.msra.mxu0 %v3601
    %5296 = vmatpush.bf16.msra.mxu0 %v3585
    %5297 = vmatpush.bf16.msra.mxu0 %v3569
    %5298 = vmatpush.bf16.msra.mxu0 %v3553
    %5299 = vmatpush.bf16.msra.mxu0 %v3537
    %5300 = vmatpush.bf16.msra.mxu0 %v3521
    %5301 = vmatpush.bf16.msra.mxu0 %v3505
    %5302 = vmatmul.bf16.gmra.mxu0 %v1402
    %v5303 = vpop.f32.mrf.mxu0
    %v5304 = vadd.f32 %v1937, %v5303
    %v5305 = vpop.f32.mrf.mxu0
    %5306 = vdwg.mxu0
    %5307 = vmatpush.bf16.msra.mxu0 %v3745
    %5308 = vmatpush.bf16.msra.mxu0 %v3729
    %5309 = vmatpush.bf16.msra.mxu0 %v3713
    %5310 = vmatpush.bf16.msra.mxu0 %v3697
    %5311 = vmatpush.bf16.msra.mxu0 %v3681
    %5312 = vmatpush.bf16.msra.mxu0 %v3665
    %5313 = vmatpush.bf16.msra.mxu0 %v3649
    %5314 = vmatpush.bf16.msra.mxu0 %v3633
    %5315 = vmatmul.bf16.gmra.mxu0 %v1403
    %v5316 = vpop.f32.mrf.mxu0
    %v5317 = vadd.f32 %v5304, %v5316
    %v5318 = vpop.f32.mrf.mxu0
    %5319 = vdwg.mxu0
    %5320 = vmatpush.bf16.msra.mxu0 %v3873
    %5321 = vmatpush.bf16.msra.mxu0 %v3857
    %5322 = vmatpush.bf16.msra.mxu0 %v3841
    %5323 = vmatpush.bf16.msra.mxu0 %v3825
    %5324 = vmatpush.bf16.msra.mxu0 %v3809
    %5325 = vmatpush.bf16.msra.mxu0 %v3793
    %5326 = vmatpush.bf16.msra.mxu0 %v3777
    %5327 = vmatpush.bf16.msra.mxu0 %v3761
    %5328 = vmatmul.bf16.gmra.mxu0 %v1404
    %v5329 = vpop.f32.mrf.mxu0
    %v5330 = vadd.f32 %v5317, %v5329
    %v5331 = vpop.f32.mrf.mxu0
    %5332 = vdwg.mxu0
    %5333 = vmatpush.bf16.msra.mxu0 %v4001
    %5334 = vmatpush.bf16.msra.mxu0 %v3985
    %5335 = vmatpush.bf16.msra.mxu0 %v3969
    %5336 = vmatpush.bf16.msra.mxu0 %v3953
    %5337 = vmatpush.bf16.msra.mxu0 %v3937
    %5338 = vmatpush.bf16.msra.mxu0 %v3921
    %5339 = vmatpush.bf16.msra.mxu0 %v3905
    %5340 = vmatpush.bf16.msra.mxu0 %v3889
    %5341 = vmatmul.bf16.gmra.mxu0 %v1405
    %v5342 = vpop.f32.mrf.mxu0
    %v5343 = vadd.f32 %v5330, %v5342
    %v5344 = vpop.f32.mrf.mxu0
    %5345 = vdwg.mxu0
    %v5346 = vmax.f32 %v4563, 0.0
    %v5347 = vmax.f32 %v4615, 0.0
    %v5348 = vmax.f32 %v4667, 0.0
    %v5349 = vmax.f32 %v4719, 0.0
    %v5350 = vmax.f32 %v4771, 0.0
    %v5351 = vmax.f32 %v4823, 0.0
    %v5352 = vmax.f32 %v4875, 0.0
    %v5353 = vmax.f32 %v4927, 0.0
    %v5354 = vmax.f32 %v4979, 0.0
    %v5355 = vmax.f32 %v5031, 0.0
    %v5356 = vmax.f32 %v5083, 0.0
    %v5357 = vmax.f32 %v5135, 0.0
    %v5358 = vmax.f32 %v5187, 0.0
    %v5359 = vmax.f32 %v5239, 0.0
    %v5360 = vmax.f32 %v5291, 0.0
    %v5361 = vmax.f32 %v5343, 0.0
    %v5362 = vpack.c.bf16 %v5346, %v5346
    %v5363 = vpack.c.bf16 %v5347, %v5347
    %v5364 = vpack.c.bf16 %v5348, %v5348
    %v5365 = vpack.c.bf16 %v5349, %v5349
    %v5366 = vpack.c.bf16 %v5350, %v5350
    %v5367 = vpack.c.bf16 %v5351, %v5351
    %v5368 = vpack.c.bf16 %v5352, %v5352
    %v5369 = vpack.c.bf16 %v5353, %v5353
    %v5370 = vpack.c.bf16 %v5354, %v5354
    %v5371 = vpack.c.bf16 %v5355, %v5355
    %v5372 = vpack.c.bf16 %v5356, %v5356
    %v5373 = vpack.c.bf16 %v5357, %v5357
    %v5374 = vpack.c.bf16 %v5358, %v5358
    %v5375 = vpack.c.bf16 %v5359, %v5359
    %v5376 = vpack.c.bf16 %v5360, %v5360
    %v5377 = vpack.c.bf16 %v5361, %v5361
    %v5378 = vld [vmem:[#allocation12] sm:$0xf]
    %v5379 = vld [vmem:[#allocation12 + $0x4] sm:$0xf]
    %v5380 = vld [vmem:[#allocation12 + $0x8] sm:$0xf]
    %v5381 = vld [vmem:[#allocation12 + $0xc] sm:$0xf]
    %v5382 = vld [vmem:[#allocation12 + $0x10] sm:$0xf]
    %v5383 = vld [vmem:[#allocation12 + $0x14] sm:$0xf]
    %v5384 = vld [vmem:[#allocation12 + $0x18] sm:$0xf]
    %v5385 = vld [vmem:[#allocation12 + $0x1c] sm:$0xf]
    %v5386 = vld [vmem:[#allocation12 + $0x20] sm:$0xf]
    %v5387 = vld [vmem:[#allocation12 + $0x24] sm:$0xf]
    %v5388 = vld [vmem:[#allocation12 + $0x28] sm:$0xf]
    %v5389 = vld [vmem:[#allocation12 + $0x2c] sm:$0xf]
    %v5390 = vld [vmem:[#allocation12 + $0x30] sm:$0xf]
    %v5391 = vld [vmem:[#allocation12 + $0x34] sm:$0xf]
    %v5392 = vld [vmem:[#allocation12 + $0x38] sm:$0xf]
    %v5393 = vld [vmem:[#allocation12 + $0x3c] sm:$0xf]
    %v5394 = vld [vmem:[#allocation12 + $0x40] sm:$0xf]
    %v5395 = vld [vmem:[#allocation12 + $0x44] sm:$0xf]
    %v5396 = vld [vmem:[#allocation12 + $0x48] sm:$0xf]
    %v5397 = vld [vmem:[#allocation12 + $0x4c] sm:$0xf]
    %v5398 = vld [vmem:[#allocation12 + $0x50] sm:$0xf]
    %v5399 = vld [vmem:[#allocation12 + $0x54] sm:$0xf]
    %v5400 = vld [vmem:[#allocation12 + $0x58] sm:$0xf]
    %v5401 = vld [vmem:[#allocation12 + $0x5c] sm:$0xf]
    %v5402 = vld [vmem:[#allocation12 + $0x60] sm:$0xf]
    %v5403 = vld [vmem:[#allocation12 + $0x64] sm:$0xf]
    %v5404 = vld [vmem:[#allocation12 + $0x68] sm:$0xf]
    %v5405 = vld [vmem:[#allocation12 + $0x6c] sm:$0xf]
    %v5406 = vld [vmem:[#allocation12 + $0x70] sm:$0xf]
    %v5407 = vld [vmem:[#allocation12 + $0x74] sm:$0xf]
    %v5408 = vld [vmem:[#allocation12 + $0x78] sm:$0xf]
    %v5409 = vld [vmem:[#allocation12 + $0x7c] sm:$0xf]
    %v5410 = vld [vmem:[#allocation12 + $0x80] sm:$0xf]
    %v5411 = vld [vmem:[#allocation12 + $0x84] sm:$0xf]
    %v5412 = vld [vmem:[#allocation12 + $0x88] sm:$0xf]
    %v5413 = vld [vmem:[#allocation12 + $0x8c] sm:$0xf]
    %v5414 = vld [vmem:[#allocation12 + $0x90] sm:$0xf]
    %v5415 = vld [vmem:[#allocation12 + $0x94] sm:$0xf]
    %v5416 = vld [vmem:[#allocation12 + $0x98] sm:$0xf]
    %v5417 = vld [vmem:[#allocation12 + $0x9c] sm:$0xf]
    %v5418 = vld [vmem:[#allocation12 + $0xa0] sm:$0xf]
    %v5419 = vld [vmem:[#allocation12 + $0xa4] sm:$0xf]
    %v5420 = vld [vmem:[#allocation12 + $0xa8] sm:$0xf]
    %v5421 = vld [vmem:[#allocation12 + $0xac] sm:$0xf]
    %v5422 = vld [vmem:[#allocation12 + $0xb0] sm:$0xf]
    %v5423 = vld [vmem:[#allocation12 + $0xb4] sm:$0xf]
    %v5424 = vld [vmem:[#allocation12 + $0xb8] sm:$0xf]
    %v5425 = vld [vmem:[#allocation12 + $0xbc] sm:$0xf]
    %v5426 = vld [vmem:[#allocation12 + $0xc0] sm:$0xf]
    %v5427 = vld [vmem:[#allocation12 + $0xc4] sm:$0xf]
    %v5428 = vld [vmem:[#allocation12 + $0xc8] sm:$0xf]
    %v5429 = vld [vmem:[#allocation12 + $0xcc] sm:$0xf]
    %v5430 = vld [vmem:[#allocation12 + $0xd0] sm:$0xf]
    %v5431 = vld [vmem:[#allocation12 + $0xd4] sm:$0xf]
    %v5432 = vld [vmem:[#allocation12 + $0xd8] sm:$0xf]
    %v5433 = vld [vmem:[#allocation12 + $0xdc] sm:$0xf]
    %v5434 = vld [vmem:[#allocation12 + $0xe0] sm:$0xf]
    %v5435 = vld [vmem:[#allocation12 + $0xe4] sm:$0xf]
    %v5436 = vld [vmem:[#allocation12 + $0xe8] sm:$0xf]
    %v5437 = vld [vmem:[#allocation12 + $0xec] sm:$0xf]
    %v5438 = vld [vmem:[#allocation12 + $0xf0] sm:$0xf]
    %v5439 = vld [vmem:[#allocation12 + $0xf4] sm:$0xf]
    %v5440 = vld [vmem:[#allocation12 + $0xf8] sm:$0xf]
    %v5441 = vld [vmem:[#allocation12 + $0xfc] sm:$0xf]
    %v5442 = vld [vmem:[#allocation12 + $0x100] sm:$0xf]
    %v5443 = vld [vmem:[#allocation12 + $0x104] sm:$0xf]
    %v5444 = vld [vmem:[#allocation12 + $0x108] sm:$0xf]
    %v5445 = vld [vmem:[#allocation12 + $0x10c] sm:$0xf]
    %v5446 = vld [vmem:[#allocation12 + $0x110] sm:$0xf]
    %v5447 = vld [vmem:[#allocation12 + $0x114] sm:$0xf]
    %v5448 = vld [vmem:[#allocation12 + $0x118] sm:$0xf]
    %v5449 = vld [vmem:[#allocation12 + $0x11c] sm:$0xf]
    %v5450 = vld [vmem:[#allocation12 + $0x120] sm:$0xf]
    %v5451 = vld [vmem:[#allocation12 + $0x124] sm:$0xf]
    %v5452 = vld [vmem:[#allocation12 + $0x128] sm:$0xf]
    %v5453 = vld [vmem:[#allocation12 + $0x12c] sm:$0xf]
    %v5454 = vld [vmem:[#allocation12 + $0x130] sm:$0xf]
    %v5455 = vld [vmem:[#allocation12 + $0x134] sm:$0xf]
    %v5456 = vld [vmem:[#allocation12 + $0x138] sm:$0xf]
    %v5457 = vld [vmem:[#allocation12 + $0x13c] sm:$0xf]
    %v5458 = vld [vmem:[#allocation12 + $0x140] sm:$0xf]
    %v5459 = vld [vmem:[#allocation12 + $0x144] sm:$0xf]
    %v5460 = vld [vmem:[#allocation12 + $0x148] sm:$0xf]
    %v5461 = vld [vmem:[#allocation12 + $0x14c] sm:$0xf]
    %v5462 = vld [vmem:[#allocation12 + $0x150] sm:$0xf]
    %v5463 = vld [vmem:[#allocation12 + $0x154] sm:$0xf]
    %v5464 = vld [vmem:[#allocation12 + $0x158] sm:$0xf]
    %v5465 = vld [vmem:[#allocation12 + $0x15c] sm:$0xf]
    %v5466 = vld [vmem:[#allocation12 + $0x160] sm:$0xf]
    %v5467 = vld [vmem:[#allocation12 + $0x164] sm:$0xf]
    %v5468 = vld [vmem:[#allocation12 + $0x168] sm:$0xf]
    %v5469 = vld [vmem:[#allocation12 + $0x16c] sm:$0xf]
    %v5470 = vld [vmem:[#allocation12 + $0x170] sm:$0xf]
    %v5471 = vld [vmem:[#allocation12 + $0x174] sm:$0xf]
    %v5472 = vld [vmem:[#allocation12 + $0x178] sm:$0xf]
    %v5473 = vld [vmem:[#allocation12 + $0x17c] sm:$0xf]
    %v5474 = vld [vmem:[#allocation12 + $0x180] sm:$0xf]
    %v5475 = vld [vmem:[#allocation12 + $0x184] sm:$0xf]
    %v5476 = vld [vmem:[#allocation12 + $0x188] sm:$0xf]
    %v5477 = vld [vmem:[#allocation12 + $0x18c] sm:$0xf]
    %v5478 = vld [vmem:[#allocation12 + $0x190] sm:$0xf]
    %v5479 = vld [vmem:[#allocation12 + $0x194] sm:$0xf]
    %v5480 = vld [vmem:[#allocation12 + $0x198] sm:$0xf]
    %v5481 = vld [vmem:[#allocation12 + $0x19c] sm:$0xf]
    %v5482 = vld [vmem:[#allocation12 + $0x1a0] sm:$0xf]
    %v5483 = vld [vmem:[#allocation12 + $0x1a4] sm:$0xf]
    %v5484 = vld [vmem:[#allocation12 + $0x1a8] sm:$0xf]
    %v5485 = vld [vmem:[#allocation12 + $0x1ac] sm:$0xf]
    %v5486 = vld [vmem:[#allocation12 + $0x1b0] sm:$0xf]
    %v5487 = vld [vmem:[#allocation12 + $0x1b4] sm:$0xf]
    %v5488 = vld [vmem:[#allocation12 + $0x1b8] sm:$0xf]
    %v5489 = vld [vmem:[#allocation12 + $0x1bc] sm:$0xf]
    %v5490 = vld [vmem:[#allocation12 + $0x1c0] sm:$0xf]
    %v5491 = vld [vmem:[#allocation12 + $0x1c4] sm:$0xf]
    %v5492 = vld [vmem:[#allocation12 + $0x1c8] sm:$0xf]
    %v5493 = vld [vmem:[#allocation12 + $0x1cc] sm:$0xf]
    %v5494 = vld [vmem:[#allocation12 + $0x1d0] sm:$0xf]
    %v5495 = vld [vmem:[#allocation12 + $0x1d4] sm:$0xf]
    %v5496 = vld [vmem:[#allocation12 + $0x1d8] sm:$0xf]
    %v5497 = vld [vmem:[#allocation12 + $0x1dc] sm:$0xf]
    %v5498 = vld [vmem:[#allocation12 + $0x1e0] sm:$0xf]
    %v5499 = vld [vmem:[#allocation12 + $0x1e4] sm:$0xf]
    %v5500 = vld [vmem:[#allocation12 + $0x1e8] sm:$0xf]
    %v5501 = vld [vmem:[#allocation12 + $0x1ec] sm:$0xf]
    %v5502 = vld [vmem:[#allocation12 + $0x1f0] sm:$0xf]
    %v5503 = vld [vmem:[#allocation12 + $0x1f4] sm:$0xf]
    %v5504 = vld [vmem:[#allocation12 + $0x1f8] sm:$0xf]
    %v5505 = vld [vmem:[#allocation12 + $0x1fc] sm:$0xf]
    %v5506 = vld [vmem:[#allocation12 + $0x200] sm:$0xf]
    %v5507 = vld [vmem:[#allocation12 + $0x204] sm:$0xf]
    %v5508 = vld [vmem:[#allocation12 + $0x208] sm:$0xf]
    %v5509 = vld [vmem:[#allocation12 + $0x20c] sm:$0xf]
    %v5510 = vld [vmem:[#allocation12 + $0x210] sm:$0xf]
    %v5511 = vld [vmem:[#allocation12 + $0x214] sm:$0xf]
    %v5512 = vld [vmem:[#allocation12 + $0x218] sm:$0xf]
    %v5513 = vld [vmem:[#allocation12 + $0x21c] sm:$0xf]
    %v5514 = vld [vmem:[#allocation12 + $0x220] sm:$0xf]
    %v5515 = vld [vmem:[#allocation12 + $0x224] sm:$0xf]
    %v5516 = vld [vmem:[#allocation12 + $0x228] sm:$0xf]
    %v5517 = vld [vmem:[#allocation12 + $0x22c] sm:$0xf]
    %v5518 = vld [vmem:[#allocation12 + $0x230] sm:$0xf]
    %v5519 = vld [vmem:[#allocation12 + $0x234] sm:$0xf]
    %v5520 = vld [vmem:[#allocation12 + $0x238] sm:$0xf]
    %v5521 = vld [vmem:[#allocation12 + $0x23c] sm:$0xf]
    %v5522 = vld [vmem:[#allocation12 + $0x240] sm:$0xf]
    %v5523 = vld [vmem:[#allocation12 + $0x244] sm:$0xf]
    %v5524 = vld [vmem:[#allocation12 + $0x248] sm:$0xf]
    %v5525 = vld [vmem:[#allocation12 + $0x24c] sm:$0xf]
    %v5526 = vld [vmem:[#allocation12 + $0x250] sm:$0xf]
    %v5527 = vld [vmem:[#allocation12 + $0x254] sm:$0xf]
    %v5528 = vld [vmem:[#allocation12 + $0x258] sm:$0xf]
    %v5529 = vld [vmem:[#allocation12 + $0x25c] sm:$0xf]
    %v5530 = vld [vmem:[#allocation12 + $0x260] sm:$0xf]
    %v5531 = vld [vmem:[#allocation12 + $0x264] sm:$0xf]
    %v5532 = vld [vmem:[#allocation12 + $0x268] sm:$0xf]
    %v5533 = vld [vmem:[#allocation12 + $0x26c] sm:$0xf]
    %v5534 = vld [vmem:[#allocation12 + $0x270] sm:$0xf]
    %v5535 = vld [vmem:[#allocation12 + $0x274] sm:$0xf]
    %v5536 = vld [vmem:[#allocation12 + $0x278] sm:$0xf]
    %v5537 = vld [vmem:[#allocation12 + $0x27c] sm:$0xf]
    %v5538 = vld [vmem:[#allocation12 + $0x280] sm:$0xf]
    %v5539 = vld [vmem:[#allocation12 + $0x284] sm:$0xf]
    %v5540 = vld [vmem:[#allocation12 + $0x288] sm:$0xf]
    %v5541 = vld [vmem:[#allocation12 + $0x28c] sm:$0xf]
    %v5542 = vld [vmem:[#allocation12 + $0x290] sm:$0xf]
    %v5543 = vld [vmem:[#allocation12 + $0x294] sm:$0xf]
    %v5544 = vld [vmem:[#allocation12 + $0x298] sm:$0xf]
    %v5545 = vld [vmem:[#allocation12 + $0x29c] sm:$0xf]
    %v5546 = vld [vmem:[#allocation12 + $0x2a0] sm:$0xf]
    %v5547 = vld [vmem:[#allocation12 + $0x2a4] sm:$0xf]
    %v5548 = vld [vmem:[#allocation12 + $0x2a8] sm:$0xf]
    %v5549 = vld [vmem:[#allocation12 + $0x2ac] sm:$0xf]
    %v5550 = vld [vmem:[#allocation12 + $0x2b0] sm:$0xf]
    %v5551 = vld [vmem:[#allocation12 + $0x2b4] sm:$0xf]
    %v5552 = vld [vmem:[#allocation12 + $0x2b8] sm:$0xf]
    %v5553 = vld [vmem:[#allocation12 + $0x2bc] sm:$0xf]
    %v5554 = vld [vmem:[#allocation12 + $0x2c0] sm:$0xf]
    %v5555 = vld [vmem:[#allocation12 + $0x2c4] sm:$0xf]
    %v5556 = vld [vmem:[#allocation12 + $0x2c8] sm:$0xf]
    %v5557 = vld [vmem:[#allocation12 + $0x2cc] sm:$0xf]
    %v5558 = vld [vmem:[#allocation12 + $0x2d0] sm:$0xf]
    %v5559 = vld [vmem:[#allocation12 + $0x2d4] sm:$0xf]
    %v5560 = vld [vmem:[#allocation12 + $0x2d8] sm:$0xf]
    %v5561 = vld [vmem:[#allocation12 + $0x2dc] sm:$0xf]
    %v5562 = vld [vmem:[#allocation12 + $0x2e0] sm:$0xf]
    %v5563 = vld [vmem:[#allocation12 + $0x2e4] sm:$0xf]
    %v5564 = vld [vmem:[#allocation12 + $0x2e8] sm:$0xf]
    %v5565 = vld [vmem:[#allocation12 + $0x2ec] sm:$0xf]
    %v5566 = vld [vmem:[#allocation12 + $0x2f0] sm:$0xf]
    %v5567 = vld [vmem:[#allocation12 + $0x2f4] sm:$0xf]
    %v5568 = vld [vmem:[#allocation12 + $0x2f8] sm:$0xf]
    %v5569 = vld [vmem:[#allocation12 + $0x2fc] sm:$0xf]
    %v5570 = vld [vmem:[#allocation12 + $0x300] sm:$0xf]
    %v5571 = vld [vmem:[#allocation12 + $0x304] sm:$0xf]
    %v5572 = vld [vmem:[#allocation12 + $0x308] sm:$0xf]
    %v5573 = vld [vmem:[#allocation12 + $0x30c] sm:$0xf]
    %v5574 = vld [vmem:[#allocation12 + $0x310] sm:$0xf]
    %v5575 = vld [vmem:[#allocation12 + $0x314] sm:$0xf]
    %v5576 = vld [vmem:[#allocation12 + $0x318] sm:$0xf]
    %v5577 = vld [vmem:[#allocation12 + $0x31c] sm:$0xf]
    %v5578 = vld [vmem:[#allocation12 + $0x320] sm:$0xf]
    %v5579 = vld [vmem:[#allocation12 + $0x324] sm:$0xf]
    %v5580 = vld [vmem:[#allocation12 + $0x328] sm:$0xf]
    %v5581 = vld [vmem:[#allocation12 + $0x32c] sm:$0xf]
    %v5582 = vld [vmem:[#allocation12 + $0x330] sm:$0xf]
    %v5583 = vld [vmem:[#allocation12 + $0x334] sm:$0xf]
    %v5584 = vld [vmem:[#allocation12 + $0x338] sm:$0xf]
    %v5585 = vld [vmem:[#allocation12 + $0x33c] sm:$0xf]
    %v5586 = vld [vmem:[#allocation12 + $0x340] sm:$0xf]
    %v5587 = vld [vmem:[#allocation12 + $0x344] sm:$0xf]
    %v5588 = vld [vmem:[#allocation12 + $0x348] sm:$0xf]
    %v5589 = vld [vmem:[#allocation12 + $0x34c] sm:$0xf]
    %v5590 = vld [vmem:[#allocation12 + $0x350] sm:$0xf]
    %v5591 = vld [vmem:[#allocation12 + $0x354] sm:$0xf]
    %v5592 = vld [vmem:[#allocation12 + $0x358] sm:$0xf]
    %v5593 = vld [vmem:[#allocation12 + $0x35c] sm:$0xf]
    %v5594 = vld [vmem:[#allocation12 + $0x360] sm:$0xf]
    %v5595 = vld [vmem:[#allocation12 + $0x364] sm:$0xf]
    %v5596 = vld [vmem:[#allocation12 + $0x368] sm:$0xf]
    %v5597 = vld [vmem:[#allocation12 + $0x36c] sm:$0xf]
    %v5598 = vld [vmem:[#allocation12 + $0x370] sm:$0xf]
    %v5599 = vld [vmem:[#allocation12 + $0x374] sm:$0xf]
    %v5600 = vld [vmem:[#allocation12 + $0x378] sm:$0xf]
    %v5601 = vld [vmem:[#allocation12 + $0x37c] sm:$0xf]
    %v5602 = vld [vmem:[#allocation12 + $0x380] sm:$0xf]
    %v5603 = vld [vmem:[#allocation12 + $0x384] sm:$0xf]
    %v5604 = vld [vmem:[#allocation12 + $0x388] sm:$0xf]
    %v5605 = vld [vmem:[#allocation12 + $0x38c] sm:$0xf]
    %v5606 = vld [vmem:[#allocation12 + $0x390] sm:$0xf]
    %v5607 = vld [vmem:[#allocation12 + $0x394] sm:$0xf]
    %v5608 = vld [vmem:[#allocation12 + $0x398] sm:$0xf]
    %v5609 = vld [vmem:[#allocation12 + $0x39c] sm:$0xf]
    %v5610 = vld [vmem:[#allocation12 + $0x3a0] sm:$0xf]
    %v5611 = vld [vmem:[#allocation12 + $0x3a4] sm:$0xf]
    %v5612 = vld [vmem:[#allocation12 + $0x3a8] sm:$0xf]
    %v5613 = vld [vmem:[#allocation12 + $0x3ac] sm:$0xf]
    %v5614 = vld [vmem:[#allocation12 + $0x3b0] sm:$0xf]
    %v5615 = vld [vmem:[#allocation12 + $0x3b4] sm:$0xf]
    %v5616 = vld [vmem:[#allocation12 + $0x3b8] sm:$0xf]
    %v5617 = vld [vmem:[#allocation12 + $0x3bc] sm:$0xf]
    %v5618 = vld [vmem:[#allocation12 + $0x3c0] sm:$0xf]
    %v5619 = vld [vmem:[#allocation12 + $0x3c4] sm:$0xf]
    %v5620 = vld [vmem:[#allocation12 + $0x3c8] sm:$0xf]
    %v5621 = vld [vmem:[#allocation12 + $0x3cc] sm:$0xf]
    %v5622 = vld [vmem:[#allocation12 + $0x3d0] sm:$0xf]
    %v5623 = vld [vmem:[#allocation12 + $0x3d4] sm:$0xf]
    %v5624 = vld [vmem:[#allocation12 + $0x3d8] sm:$0xf]
    %v5625 = vld [vmem:[#allocation12 + $0x3dc] sm:$0xf]
    %v5626 = vld [vmem:[#allocation12 + $0x3e0] sm:$0xf]
    %v5627 = vld [vmem:[#allocation12 + $0x3e4] sm:$0xf]
    %v5628 = vld [vmem:[#allocation12 + $0x3e8] sm:$0xf]
    %v5629 = vld [vmem:[#allocation12 + $0x3ec] sm:$0xf]
    %v5630 = vld [vmem:[#allocation12 + $0x3f0] sm:$0xf]
    %v5631 = vld [vmem:[#allocation12 + $0x3f4] sm:$0xf]
    %v5632 = vld [vmem:[#allocation12 + $0x3f8] sm:$0xf]
    %v5633 = vld [vmem:[#allocation12 + $0x3fc] sm:$0xf]
    %v5634 = vld [vmem:[#allocation13] sm:$0x1]
    %v5636 = vperm.slane %v5634, 0
    %v5894 = vunpack.c.l.b16 %v5378
    %v5895 = vunpack.c.l.b16 %v5379
    %v5896 = vunpack.c.l.b16 %v5380
    %v5897 = vunpack.c.l.b16 %v5381
    %v5898 = vunpack.c.l.b16 %v5382
    %v5899 = vunpack.c.l.b16 %v5383
    %v5900 = vunpack.c.l.b16 %v5384
    %v5901 = vunpack.c.l.b16 %v5385
    %v5902 = vunpack.c.l.b16 %v5386
    %v5903 = vunpack.c.l.b16 %v5387
    %v5904 = vunpack.c.l.b16 %v5388
    %v5905 = vunpack.c.l.b16 %v5389
    %v5906 = vunpack.c.l.b16 %v5390
    %v5907 = vunpack.c.l.b16 %v5391
    %v5908 = vunpack.c.l.b16 %v5392
    %v5909 = vunpack.c.l.b16 %v5393
    %v5910 = vunpack.c.l.b16 %v5394
    %v5911 = vunpack.c.l.b16 %v5395
    %v5912 = vunpack.c.l.b16 %v5396
    %v5913 = vunpack.c.l.b16 %v5397
    %v5914 = vunpack.c.l.b16 %v5398
    %v5915 = vunpack.c.l.b16 %v5399
    %v5916 = vunpack.c.l.b16 %v5400
    %v5917 = vunpack.c.l.b16 %v5401
    %v5918 = vunpack.c.l.b16 %v5402
    %v5919 = vunpack.c.l.b16 %v5403
    %v5920 = vunpack.c.l.b16 %v5404
    %v5921 = vunpack.c.l.b16 %v5405
    %v5922 = vunpack.c.l.b16 %v5406
    %v5923 = vunpack.c.l.b16 %v5407
    %v5924 = vunpack.c.l.b16 %v5408
    %v5925 = vunpack.c.l.b16 %v5409
    %v5926 = vunpack.c.l.b16 %v5410
    %v5927 = vunpack.c.l.b16 %v5411
    %v5928 = vunpack.c.l.b16 %v5412
    %v5929 = vunpack.c.l.b16 %v5413
    %v5930 = vunpack.c.l.b16 %v5414
    %v5931 = vunpack.c.l.b16 %v5415
    %v5932 = vunpack.c.l.b16 %v5416
    %v5933 = vunpack.c.l.b16 %v5417
    %v5934 = vunpack.c.l.b16 %v5418
    %v5935 = vunpack.c.l.b16 %v5419
    %v5936 = vunpack.c.l.b16 %v5420
    %v5937 = vunpack.c.l.b16 %v5421
    %v5938 = vunpack.c.l.b16 %v5422
    %v5939 = vunpack.c.l.b16 %v5423
    %v5940 = vunpack.c.l.b16 %v5424
    %v5941 = vunpack.c.l.b16 %v5425
    %v5942 = vunpack.c.l.b16 %v5426
    %v5943 = vunpack.c.l.b16 %v5427
    %v5944 = vunpack.c.l.b16 %v5428
    %v5945 = vunpack.c.l.b16 %v5429
    %v5946 = vunpack.c.l.b16 %v5430
    %v5947 = vunpack.c.l.b16 %v5431
    %v5948 = vunpack.c.l.b16 %v5432
    %v5949 = vunpack.c.l.b16 %v5433
    %v5950 = vunpack.c.l.b16 %v5434
    %v5951 = vunpack.c.l.b16 %v5435
    %v5952 = vunpack.c.l.b16 %v5436
    %v5953 = vunpack.c.l.b16 %v5437
    %v5954 = vunpack.c.l.b16 %v5438
    %v5955 = vunpack.c.l.b16 %v5439
    %v5956 = vunpack.c.l.b16 %v5440
    %v5957 = vunpack.c.l.b16 %v5441
    %v5958 = vunpack.c.l.b16 %v5442
    %v5959 = vunpack.c.l.b16 %v5443
    %v5960 = vunpack.c.l.b16 %v5444
    %v5961 = vunpack.c.l.b16 %v5445
    %v5962 = vunpack.c.l.b16 %v5446
    %v5963 = vunpack.c.l.b16 %v5447
    %v5964 = vunpack.c.l.b16 %v5448
    %v5965 = vunpack.c.l.b16 %v5449
    %v5966 = vunpack.c.l.b16 %v5450
    %v5967 = vunpack.c.l.b16 %v5451
    %v5968 = vunpack.c.l.b16 %v5452
    %v5969 = vunpack.c.l.b16 %v5453
    %v5970 = vunpack.c.l.b16 %v5454
    %v5971 = vunpack.c.l.b16 %v5455
    %v5972 = vunpack.c.l.b16 %v5456
    %v5973 = vunpack.c.l.b16 %v5457
    %v5974 = vunpack.c.l.b16 %v5458
    %v5975 = vunpack.c.l.b16 %v5459
    %v5976 = vunpack.c.l.b16 %v5460
    %v5977 = vunpack.c.l.b16 %v5461
    %v5978 = vunpack.c.l.b16 %v5462
    %v5979 = vunpack.c.l.b16 %v5463
    %v5980 = vunpack.c.l.b16 %v5464
    %v5981 = vunpack.c.l.b16 %v5465
    %v5982 = vunpack.c.l.b16 %v5466
    %v5983 = vunpack.c.l.b16 %v5467
    %v5984 = vunpack.c.l.b16 %v5468
    %v5985 = vunpack.c.l.b16 %v5469
    %v5986 = vunpack.c.l.b16 %v5470
    %v5987 = vunpack.c.l.b16 %v5471
    %v5988 = vunpack.c.l.b16 %v5472
    %v5989 = vunpack.c.l.b16 %v5473
    %v5990 = vunpack.c.l.b16 %v5474
    %v5991 = vunpack.c.l.b16 %v5475
    %v5992 = vunpack.c.l.b16 %v5476
    %v5993 = vunpack.c.l.b16 %v5477
    %v5994 = vunpack.c.l.b16 %v5478
    %v5995 = vunpack.c.l.b16 %v5479
    %v5996 = vunpack.c.l.b16 %v5480
    %v5997 = vunpack.c.l.b16 %v5481
    %v5998 = vunpack.c.l.b16 %v5482
    %v5999 = vunpack.c.l.b16 %v5483
    %v6000 = vunpack.c.l.b16 %v5484
    %v6001 = vunpack.c.l.b16 %v5485
    %v6002 = vunpack.c.l.b16 %v5486
    %v6003 = vunpack.c.l.b16 %v5487
    %v6004 = vunpack.c.l.b16 %v5488
    %v6005 = vunpack.c.l.b16 %v5489
    %v6006 = vunpack.c.l.b16 %v5490
    %v6007 = vunpack.c.l.b16 %v5491
    %v6008 = vunpack.c.l.b16 %v5492
    %v6009 = vunpack.c.l.b16 %v5493
    %v6010 = vunpack.c.l.b16 %v5494
    %v6011 = vunpack.c.l.b16 %v5495
    %v6012 = vunpack.c.l.b16 %v5496
    %v6013 = vunpack.c.l.b16 %v5497
    %v6014 = vunpack.c.l.b16 %v5498
    %v6015 = vunpack.c.l.b16 %v5499
    %v6016 = vunpack.c.l.b16 %v5500
    %v6017 = vunpack.c.l.b16 %v5501
    %v6018 = vunpack.c.l.b16 %v5502
    %v6019 = vunpack.c.l.b16 %v5503
    %v6020 = vunpack.c.l.b16 %v5504
    %v6021 = vunpack.c.l.b16 %v5505
    %v6022 = vunpack.c.l.b16 %v5506
    %v6023 = vunpack.c.l.b16 %v5507
    %v6024 = vunpack.c.l.b16 %v5508
    %v6025 = vunpack.c.l.b16 %v5509
    %v6026 = vunpack.c.l.b16 %v5510
    %v6027 = vunpack.c.l.b16 %v5511
    %v6028 = vunpack.c.l.b16 %v5512
    %v6029 = vunpack.c.l.b16 %v5513
    %v6030 = vunpack.c.l.b16 %v5514
    %v6031 = vunpack.c.l.b16 %v5515
    %v6032 = vunpack.c.l.b16 %v5516
    %v6033 = vunpack.c.l.b16 %v5517
    %v6034 = vunpack.c.l.b16 %v5518
    %v6035 = vunpack.c.l.b16 %v5519
    %v6036 = vunpack.c.l.b16 %v5520
    %v6037 = vunpack.c.l.b16 %v5521
    %v6038 = vunpack.c.l.b16 %v5522
    %v6039 = vunpack.c.l.b16 %v5523
    %v6040 = vunpack.c.l.b16 %v5524
    %v6041 = vunpack.c.l.b16 %v5525
    %v6042 = vunpack.c.l.b16 %v5526
    %v6043 = vunpack.c.l.b16 %v5527
    %v6044 = vunpack.c.l.b16 %v5528
    %v6045 = vunpack.c.l.b16 %v5529
    %v6046 = vunpack.c.l.b16 %v5530
    %v6047 = vunpack.c.l.b16 %v5531
    %v6048 = vunpack.c.l.b16 %v5532
    %v6049 = vunpack.c.l.b16 %v5533
    %v6050 = vunpack.c.l.b16 %v5534
    %v6051 = vunpack.c.l.b16 %v5535
    %v6052 = vunpack.c.l.b16 %v5536
    %v6053 = vunpack.c.l.b16 %v5537
    %v6054 = vunpack.c.l.b16 %v5538
    %v6055 = vunpack.c.l.b16 %v5539
    %v6056 = vunpack.c.l.b16 %v5540
    %v6057 = vunpack.c.l.b16 %v5541
    %v6058 = vunpack.c.l.b16 %v5542
    %v6059 = vunpack.c.l.b16 %v5543
    %v6060 = vunpack.c.l.b16 %v5544
    %v6061 = vunpack.c.l.b16 %v5545
    %v6062 = vunpack.c.l.b16 %v5546
    %v6063 = vunpack.c.l.b16 %v5547
    %v6064 = vunpack.c.l.b16 %v5548
    %v6065 = vunpack.c.l.b16 %v5549
    %v6066 = vunpack.c.l.b16 %v5550
    %v6067 = vunpack.c.l.b16 %v5551
    %v6068 = vunpack.c.l.b16 %v5552
    %v6069 = vunpack.c.l.b16 %v5553
    %v6070 = vunpack.c.l.b16 %v5554
    %v6071 = vunpack.c.l.b16 %v5555
    %v6072 = vunpack.c.l.b16 %v5556
    %v6073 = vunpack.c.l.b16 %v5557
    %v6074 = vunpack.c.l.b16 %v5558
    %v6075 = vunpack.c.l.b16 %v5559
    %v6076 = vunpack.c.l.b16 %v5560
    %v6077 = vunpack.c.l.b16 %v5561
    %v6078 = vunpack.c.l.b16 %v5562
    %v6079 = vunpack.c.l.b16 %v5563
    %v6080 = vunpack.c.l.b16 %v5564
    %v6081 = vunpack.c.l.b16 %v5565
    %v6082 = vunpack.c.l.b16 %v5566
    %v6083 = vunpack.c.l.b16 %v5567
    %v6084 = vunpack.c.l.b16 %v5568
    %v6085 = vunpack.c.l.b16 %v5569
    %v6086 = vunpack.c.l.b16 %v5570
    %v6087 = vunpack.c.l.b16 %v5571
    %v6088 = vunpack.c.l.b16 %v5572
    %v6089 = vunpack.c.l.b16 %v5573
    %v6090 = vunpack.c.l.b16 %v5574
    %v6091 = vunpack.c.l.b16 %v5575
    %v6092 = vunpack.c.l.b16 %v5576
    %v6093 = vunpack.c.l.b16 %v5577
    %v6094 = vunpack.c.l.b16 %v5578
    %v6095 = vunpack.c.l.b16 %v5579
    %v6096 = vunpack.c.l.b16 %v5580
    %v6097 = vunpack.c.l.b16 %v5581
    %v6098 = vunpack.c.l.b16 %v5582
    %v6099 = vunpack.c.l.b16 %v5583
    %v6100 = vunpack.c.l.b16 %v5584
    %v6101 = vunpack.c.l.b16 %v5585
    %v6102 = vunpack.c.l.b16 %v5586
    %v6103 = vunpack.c.l.b16 %v5587
    %v6104 = vunpack.c.l.b16 %v5588
    %v6105 = vunpack.c.l.b16 %v5589
    %v6106 = vunpack.c.l.b16 %v5590
    %v6107 = vunpack.c.l.b16 %v5591
    %v6108 = vunpack.c.l.b16 %v5592
    %v6109 = vunpack.c.l.b16 %v5593
    %v6110 = vunpack.c.l.b16 %v5594
    %v6111 = vunpack.c.l.b16 %v5595
    %v6112 = vunpack.c.l.b16 %v5596
    %v6113 = vunpack.c.l.b16 %v5597
    %v6114 = vunpack.c.l.b16 %v5598
    %v6115 = vunpack.c.l.b16 %v5599
    %v6116 = vunpack.c.l.b16 %v5600
    %v6117 = vunpack.c.l.b16 %v5601
    %v6118 = vunpack.c.l.b16 %v5602
    %v6119 = vunpack.c.l.b16 %v5603
    %v6120 = vunpack.c.l.b16 %v5604
    %v6121 = vunpack.c.l.b16 %v5605
    %v6122 = vunpack.c.l.b16 %v5606
    %v6123 = vunpack.c.l.b16 %v5607
    %v6124 = vunpack.c.l.b16 %v5608
    %v6125 = vunpack.c.l.b16 %v5609
    %v6126 = vunpack.c.l.b16 %v5610
    %v6127 = vunpack.c.l.b16 %v5611
    %v6128 = vunpack.c.l.b16 %v5612
    %v6129 = vunpack.c.l.b16 %v5613
    %v6130 = vunpack.c.l.b16 %v5614
    %v6131 = vunpack.c.l.b16 %v5615
    %v6132 = vunpack.c.l.b16 %v5616
    %v6133 = vunpack.c.l.b16 %v5617
    %v6134 = vunpack.c.l.b16 %v5618
    %v6135 = vunpack.c.l.b16 %v5619
    %v6136 = vunpack.c.l.b16 %v5620
    %v6137 = vunpack.c.l.b16 %v5621
    %v6138 = vunpack.c.l.b16 %v5622
    %v6139 = vunpack.c.l.b16 %v5623
    %v6140 = vunpack.c.l.b16 %v5624
    %v6141 = vunpack.c.l.b16 %v5625
    %v6142 = vunpack.c.l.b16 %v5626
    %v6143 = vunpack.c.l.b16 %v5627
    %v6144 = vunpack.c.l.b16 %v5628
    %v6145 = vunpack.c.l.b16 %v5629
    %v6146 = vunpack.c.l.b16 %v5630
    %v6147 = vunpack.c.l.b16 %v5631
    %v6148 = vunpack.c.l.b16 %v5632
    %v6149 = vunpack.c.l.b16 %v5633
    %v6150 = vpack.c.b16 %v5895, %v5894
    %v6151 = vpack.c.b16 %v5897, %v5896
    %v6152 = vpack.c.b16 %v5899, %v5898
    %v6153 = vpack.c.b16 %v5901, %v5900
    %v6154 = vpack.c.b16 %v5903, %v5902
    %v6155 = vpack.c.b16 %v5905, %v5904
    %v6156 = vpack.c.b16 %v5907, %v5906
    %v6157 = vpack.c.b16 %v5909, %v5908
    %v6158 = vpack.c.b16 %v5911, %v5910
    %v6159 = vpack.c.b16 %v5913, %v5912
    %v6160 = vpack.c.b16 %v5915, %v5914
    %v6161 = vpack.c.b16 %v5917, %v5916
    %v6162 = vpack.c.b16 %v5919, %v5918
    %v6163 = vpack.c.b16 %v5921, %v5920
    %v6164 = vpack.c.b16 %v5923, %v5922
    %v6165 = vpack.c.b16 %v5925, %v5924
    %v6166 = vpack.c.b16 %v5927, %v5926
    %v6167 = vpack.c.b16 %v5929, %v5928
    %v6168 = vpack.c.b16 %v5931, %v5930
    %v6169 = vpack.c.b16 %v5933, %v5932
    %v6170 = vpack.c.b16 %v5935, %v5934
    %v6171 = vpack.c.b16 %v5937, %v5936
    %v6172 = vpack.c.b16 %v5939, %v5938
    %v6173 = vpack.c.b16 %v5941, %v5940
    %v6174 = vpack.c.b16 %v5943, %v5942
    %v6175 = vpack.c.b16 %v5945, %v5944
    %v6176 = vpack.c.b16 %v5947, %v5946
    %v6177 = vpack.c.b16 %v5949, %v5948
    %v6178 = vpack.c.b16 %v5951, %v5950
    %v6179 = vpack.c.b16 %v5953, %v5952
    %v6180 = vpack.c.b16 %v5955, %v5954
    %v6181 = vpack.c.b16 %v5957, %v5956
    %v6182 = vpack.c.b16 %v5959, %v5958
    %v6183 = vpack.c.b16 %v5961, %v5960
    %v6184 = vpack.c.b16 %v5963, %v5962
    %v6185 = vpack.c.b16 %v5965, %v5964
    %v6186 = vpack.c.b16 %v5967, %v5966
    %v6187 = vpack.c.b16 %v5969, %v5968
    %v6188 = vpack.c.b16 %v5971, %v5970
    %v6189 = vpack.c.b16 %v5973, %v5972
    %v6190 = vpack.c.b16 %v5975, %v5974
    %v6191 = vpack.c.b16 %v5977, %v5976
    %v6192 = vpack.c.b16 %v5979, %v5978
    %v6193 = vpack.c.b16 %v5981, %v5980
    %v6194 = vpack.c.b16 %v5983, %v5982
    %v6195 = vpack.c.b16 %v5985, %v5984
    %v6196 = vpack.c.b16 %v5987, %v5986
    %v6197 = vpack.c.b16 %v5989, %v5988
    %v6198 = vpack.c.b16 %v5991, %v5990
    %v6199 = vpack.c.b16 %v5993, %v5992
    %v6200 = vpack.c.b16 %v5995, %v5994
    %v6201 = vpack.c.b16 %v5997, %v5996
    %v6202 = vpack.c.b16 %v5999, %v5998
    %v6203 = vpack.c.b16 %v6001, %v6000
    %v6204 = vpack.c.b16 %v6003, %v6002
    %v6205 = vpack.c.b16 %v6005, %v6004
    %v6206 = vpack.c.b16 %v6007, %v6006
    %v6207 = vpack.c.b16 %v6009, %v6008
    %v6208 = vpack.c.b16 %v6011, %v6010
    %v6209 = vpack.c.b16 %v6013, %v6012
    %v6210 = vpack.c.b16 %v6015, %v6014
    %v6211 = vpack.c.b16 %v6017, %v6016
    %v6212 = vpack.c.b16 %v6019, %v6018
    %v6213 = vpack.c.b16 %v6021, %v6020
    %v6214 = vpack.c.b16 %v6023, %v6022
    %v6215 = vpack.c.b16 %v6025, %v6024
    %v6216 = vpack.c.b16 %v6027, %v6026
    %v6217 = vpack.c.b16 %v6029, %v6028
    %v6218 = vpack.c.b16 %v6031, %v6030
    %v6219 = vpack.c.b16 %v6033, %v6032
    %v6220 = vpack.c.b16 %v6035, %v6034
    %v6221 = vpack.c.b16 %v6037, %v6036
    %v6222 = vpack.c.b16 %v6039, %v6038
    %v6223 = vpack.c.b16 %v6041, %v6040
    %v6224 = vpack.c.b16 %v6043, %v6042
    %v6225 = vpack.c.b16 %v6045, %v6044
    %v6226 = vpack.c.b16 %v6047, %v6046
    %v6227 = vpack.c.b16 %v6049, %v6048
    %v6228 = vpack.c.b16 %v6051, %v6050
    %v6229 = vpack.c.b16 %v6053, %v6052
    %v6230 = vpack.c.b16 %v6055, %v6054
    %v6231 = vpack.c.b16 %v6057, %v6056
    %v6232 = vpack.c.b16 %v6059, %v6058
    %v6233 = vpack.c.b16 %v6061, %v6060
    %v6234 = vpack.c.b16 %v6063, %v6062
    %v6235 = vpack.c.b16 %v6065, %v6064
    %v6236 = vpack.c.b16 %v6067, %v6066
    %v6237 = vpack.c.b16 %v6069, %v6068
    %v6238 = vpack.c.b16 %v6071, %v6070
    %v6239 = vpack.c.b16 %v6073, %v6072
    %v6240 = vpack.c.b16 %v6075, %v6074
    %v6241 = vpack.c.b16 %v6077, %v6076
    %v6242 = vpack.c.b16 %v6079, %v6078
    %v6243 = vpack.c.b16 %v6081, %v6080
    %v6244 = vpack.c.b16 %v6083, %v6082
    %v6245 = vpack.c.b16 %v6085, %v6084
    %v6246 = vpack.c.b16 %v6087, %v6086
    %v6247 = vpack.c.b16 %v6089, %v6088
    %v6248 = vpack.c.b16 %v6091, %v6090
    %v6249 = vpack.c.b16 %v6093, %v6092
    %v6250 = vpack.c.b16 %v6095, %v6094
    %v6251 = vpack.c.b16 %v6097, %v6096
    %v6252 = vpack.c.b16 %v6099, %v6098
    %v6253 = vpack.c.b16 %v6101, %v6100
    %v6254 = vpack.c.b16 %v6103, %v6102
    %v6255 = vpack.c.b16 %v6105, %v6104
    %v6256 = vpack.c.b16 %v6107, %v6106
    %v6257 = vpack.c.b16 %v6109, %v6108
    %v6258 = vpack.c.b16 %v6111, %v6110
    %v6259 = vpack.c.b16 %v6113, %v6112
    %v6260 = vpack.c.b16 %v6115, %v6114
    %v6261 = vpack.c.b16 %v6117, %v6116
    %v6262 = vpack.c.b16 %v6119, %v6118
    %v6263 = vpack.c.b16 %v6121, %v6120
    %v6264 = vpack.c.b16 %v6123, %v6122
    %v6265 = vpack.c.b16 %v6125, %v6124
    %v6266 = vpack.c.b16 %v6127, %v6126
    %v6267 = vpack.c.b16 %v6129, %v6128
    %v6268 = vpack.c.b16 %v6131, %v6130
    %v6269 = vpack.c.b16 %v6133, %v6132
    %v6270 = vpack.c.b16 %v6135, %v6134
    %v6271 = vpack.c.b16 %v6137, %v6136
    %v6272 = vpack.c.b16 %v6139, %v6138
    %v6273 = vpack.c.b16 %v6141, %v6140
    %v6274 = vpack.c.b16 %v6143, %v6142
    %v6275 = vpack.c.b16 %v6145, %v6144
    %v6276 = vpack.c.b16 %v6147, %v6146
    %v6277 = vpack.c.b16 %v6149, %v6148
    %6406 = vmatpush.bf16.msra.mxu0 %v6157
    %6407 = vmatpush.bf16.msra.mxu0 %v6156
    %6408 = vmatpush.bf16.msra.mxu0 %v6155
    %6409 = vmatpush.bf16.msra.mxu0 %v6154
    %6410 = vmatpush.bf16.msra.mxu0 %v6153
    %6411 = vmatpush.bf16.msra.mxu0 %v6152
    %6412 = vmatpush.bf16.msra.mxu0 %v6151
    %6413 = vmatpush.bf16.msra.mxu0 %v6150
    %6414 = vmatmul.bf16.gmra.mxu0 %v5362
    %v6415 = vpop.f32.mrf.mxu0
    %v6416 = vadd.f32 %v5636, %v6415
    %v6417 = vpop.f32.mrf.mxu0
    %6418 = vdwg.mxu0
    %6419 = vmatpush.bf16.msra.mxu0 %v6165
    %6420 = vmatpush.bf16.msra.mxu0 %v6164
    %6421 = vmatpush.bf16.msra.mxu0 %v6163
    %6422 = vmatpush.bf16.msra.mxu0 %v6162
    %6423 = vmatpush.bf16.msra.mxu0 %v6161
    %6424 = vmatpush.bf16.msra.mxu0 %v6160
    %6425 = vmatpush.bf16.msra.mxu0 %v6159
    %6426 = vmatpush.bf16.msra.mxu0 %v6158
    %6427 = vmatmul.bf16.gmra.mxu0 %v5363
    %v6428 = vpop.f32.mrf.mxu0
    %v6429 = vadd.f32 %v6416, %v6428
    %v6430 = vpop.f32.mrf.mxu0
    %6431 = vdwg.mxu0
    %6432 = vmatpush.bf16.msra.mxu0 %v6173
    %6433 = vmatpush.bf16.msra.mxu0 %v6172
    %6434 = vmatpush.bf16.msra.mxu0 %v6171
    %6435 = vmatpush.bf16.msra.mxu0 %v6170
    %6436 = vmatpush.bf16.msra.mxu0 %v6169
    %6437 = vmatpush.bf16.msra.mxu0 %v6168
    %6438 = vmatpush.bf16.msra.mxu0 %v6167
    %6439 = vmatpush.bf16.msra.mxu0 %v6166
    %6440 = vmatmul.bf16.gmra.mxu0 %v5364
    %v6441 = vpop.f32.mrf.mxu0
    %v6442 = vadd.f32 %v6429, %v6441
    %v6443 = vpop.f32.mrf.mxu0
    %6444 = vdwg.mxu0
    %6445 = vmatpush.bf16.msra.mxu0 %v6181
    %6446 = vmatpush.bf16.msra.mxu0 %v6180
    %6447 = vmatpush.bf16.msra.mxu0 %v6179
    %6448 = vmatpush.bf16.msra.mxu0 %v6178
    %6449 = vmatpush.bf16.msra.mxu0 %v6177
    %6450 = vmatpush.bf16.msra.mxu0 %v6176
    %6451 = vmatpush.bf16.msra.mxu0 %v6175
    %6452 = vmatpush.bf16.msra.mxu0 %v6174
    %6453 = vmatmul.bf16.gmra.mxu0 %v5365
    %v6454 = vpop.f32.mrf.mxu0
    %v6455 = vadd.f32 %v6442, %v6454
    %v6456 = vpop.f32.mrf.mxu0
    %6457 = vdwg.mxu0
    %6458 = vmatpush.bf16.msra.mxu0 %v6189
    %6459 = vmatpush.bf16.msra.mxu0 %v6188
    %6460 = vmatpush.bf16.msra.mxu0 %v6187
    %6461 = vmatpush.bf16.msra.mxu0 %v6186
    %6462 = vmatpush.bf16.msra.mxu0 %v6185
    %6463 = vmatpush.bf16.msra.mxu0 %v6184
    %6464 = vmatpush.bf16.msra.mxu0 %v6183
    %6465 = vmatpush.bf16.msra.mxu0 %v6182
    %6466 = vmatmul.bf16.gmra.mxu0 %v5366
    %v6467 = vpop.f32.mrf.mxu0
    %v6468 = vadd.f32 %v6455, %v6467
    %v6469 = vpop.f32.mrf.mxu0
    %6470 = vdwg.mxu0
    %6471 = vmatpush.bf16.msra.mxu0 %v6197
    %6472 = vmatpush.bf16.msra.mxu0 %v6196
    %6473 = vmatpush.bf16.msra.mxu0 %v6195
    %6474 = vmatpush.bf16.msra.mxu0 %v6194
    %6475 = vmatpush.bf16.msra.mxu0 %v6193
    %6476 = vmatpush.bf16.msra.mxu0 %v6192
    %6477 = vmatpush.bf16.msra.mxu0 %v6191
    %6478 = vmatpush.bf16.msra.mxu0 %v6190
    %6479 = vmatmul.bf16.gmra.mxu0 %v5367
    %v6480 = vpop.f32.mrf.mxu0
    %v6481 = vadd.f32 %v6468, %v6480
    %v6482 = vpop.f32.mrf.mxu0
    %6483 = vdwg.mxu0
    %6484 = vmatpush.bf16.msra.mxu0 %v6205
    %6485 = vmatpush.bf16.msra.mxu0 %v6204
    %6486 = vmatpush.bf16.msra.mxu0 %v6203
    %6487 = vmatpush.bf16.msra.mxu0 %v6202
    %6488 = vmatpush.bf16.msra.mxu0 %v6201
    %6489 = vmatpush.bf16.msra.mxu0 %v6200
    %6490 = vmatpush.bf16.msra.mxu0 %v6199
    %6491 = vmatpush.bf16.msra.mxu0 %v6198
    %6492 = vmatmul.bf16.gmra.mxu0 %v5368
    %v6493 = vpop.f32.mrf.mxu0
    %v6494 = vadd.f32 %v6481, %v6493
    %v6495 = vpop.f32.mrf.mxu0
    %6496 = vdwg.mxu0
    %6497 = vmatpush.bf16.msra.mxu0 %v6213
    %6498 = vmatpush.bf16.msra.mxu0 %v6212
    %6499 = vmatpush.bf16.msra.mxu0 %v6211
    %6500 = vmatpush.bf16.msra.mxu0 %v6210
    %6501 = vmatpush.bf16.msra.mxu0 %v6209
    %6502 = vmatpush.bf16.msra.mxu0 %v6208
    %6503 = vmatpush.bf16.msra.mxu0 %v6207
    %6504 = vmatpush.bf16.msra.mxu0 %v6206
    %6505 = vmatmul.bf16.gmra.mxu0 %v5369
    %v6506 = vpop.f32.mrf.mxu0
    %v6507 = vadd.f32 %v6494, %v6506
    %v6508 = vpop.f32.mrf.mxu0
    %6509 = vdwg.mxu0
    %6510 = vmatpush.bf16.msra.mxu0 %v6221
    %6511 = vmatpush.bf16.msra.mxu0 %v6220
    %6512 = vmatpush.bf16.msra.mxu0 %v6219
    %6513 = vmatpush.bf16.msra.mxu0 %v6218
    %6514 = vmatpush.bf16.msra.mxu0 %v6217
    %6515 = vmatpush.bf16.msra.mxu0 %v6216
    %6516 = vmatpush.bf16.msra.mxu0 %v6215
    %6517 = vmatpush.bf16.msra.mxu0 %v6214
    %6518 = vmatmul.bf16.gmra.mxu0 %v5370
    %v6519 = vpop.f32.mrf.mxu0
    %v6520 = vadd.f32 %v6507, %v6519
    %v6521 = vpop.f32.mrf.mxu0
    %6522 = vdwg.mxu0
    %6523 = vmatpush.bf16.msra.mxu0 %v6229
    %6524 = vmatpush.bf16.msra.mxu0 %v6228
    %6525 = vmatpush.bf16.msra.mxu0 %v6227
    %6526 = vmatpush.bf16.msra.mxu0 %v6226
    %6527 = vmatpush.bf16.msra.mxu0 %v6225
    %6528 = vmatpush.bf16.msra.mxu0 %v6224
    %6529 = vmatpush.bf16.msra.mxu0 %v6223
    %6530 = vmatpush.bf16.msra.mxu0 %v6222
    %6531 = vmatmul.bf16.gmra.mxu0 %v5371
    %v6532 = vpop.f32.mrf.mxu0
    %v6533 = vadd.f32 %v6520, %v6532
    %v6534 = vpop.f32.mrf.mxu0
    %6535 = vdwg.mxu0
    %6536 = vmatpush.bf16.msra.mxu0 %v6237
    %6537 = vmatpush.bf16.msra.mxu0 %v6236
    %6538 = vmatpush.bf16.msra.mxu0 %v6235
    %6539 = vmatpush.bf16.msra.mxu0 %v6234
    %6540 = vmatpush.bf16.msra.mxu0 %v6233
    %6541 = vmatpush.bf16.msra.mxu0 %v6232
    %6542 = vmatpush.bf16.msra.mxu0 %v6231
    %6543 = vmatpush.bf16.msra.mxu0 %v6230
    %6544 = vmatmul.bf16.gmra.mxu0 %v5372
    %v6545 = vpop.f32.mrf.mxu0
    %v6546 = vadd.f32 %v6533, %v6545
    %v6547 = vpop.f32.mrf.mxu0
    %6548 = vdwg.mxu0
    %6549 = vmatpush.bf16.msra.mxu0 %v6245
    %6550 = vmatpush.bf16.msra.mxu0 %v6244
    %6551 = vmatpush.bf16.msra.mxu0 %v6243
    %6552 = vmatpush.bf16.msra.mxu0 %v6242
    %6553 = vmatpush.bf16.msra.mxu0 %v6241
    %6554 = vmatpush.bf16.msra.mxu0 %v6240
    %6555 = vmatpush.bf16.msra.mxu0 %v6239
    %6556 = vmatpush.bf16.msra.mxu0 %v6238
    %6557 = vmatmul.bf16.gmra.mxu0 %v5373
    %v6558 = vpop.f32.mrf.mxu0
    %v6559 = vadd.f32 %v6546, %v6558
    %v6560 = vpop.f32.mrf.mxu0
    %6561 = vdwg.mxu0
    %6562 = vmatpush.bf16.msra.mxu0 %v6253
    %6563 = vmatpush.bf16.msra.mxu0 %v6252
    %6564 = vmatpush.bf16.msra.mxu0 %v6251
    %6565 = vmatpush.bf16.msra.mxu0 %v6250
    %6566 = vmatpush.bf16.msra.mxu0 %v6249
    %6567 = vmatpush.bf16.msra.mxu0 %v6248
    %6568 = vmatpush.bf16.msra.mxu0 %v6247
    %6569 = vmatpush.bf16.msra.mxu0 %v6246
    %6570 = vmatmul.bf16.gmra.mxu0 %v5374
    %v6571 = vpop.f32.mrf.mxu0
    %v6572 = vadd.f32 %v6559, %v6571
    %v6573 = vpop.f32.mrf.mxu0
    %6574 = vdwg.mxu0
    %6575 = vmatpush.bf16.msra.mxu0 %v6261
    %6576 = vmatpush.bf16.msra.mxu0 %v6260
    %6577 = vmatpush.bf16.msra.mxu0 %v6259
    %6578 = vmatpush.bf16.msra.mxu0 %v6258
    %6579 = vmatpush.bf16.msra.mxu0 %v6257
    %6580 = vmatpush.bf16.msra.mxu0 %v6256
    %6581 = vmatpush.bf16.msra.mxu0 %v6255
    %6582 = vmatpush.bf16.msra.mxu0 %v6254
    %6583 = vmatmul.bf16.gmra.mxu0 %v5375
    %v6584 = vpop.f32.mrf.mxu0
    %v6585 = vadd.f32 %v6572, %v6584
    %v6586 = vpop.f32.mrf.mxu0
    %6587 = vdwg.mxu0
    %6588 = vmatpush.bf16.msra.mxu0 %v6269
    %6589 = vmatpush.bf16.msra.mxu0 %v6268
    %6590 = vmatpush.bf16.msra.mxu0 %v6267
    %6591 = vmatpush.bf16.msra.mxu0 %v6266
    %6592 = vmatpush.bf16.msra.mxu0 %v6265
    %6593 = vmatpush.bf16.msra.mxu0 %v6264
    %6594 = vmatpush.bf16.msra.mxu0 %v6263
    %6595 = vmatpush.bf16.msra.mxu0 %v6262
    %6596 = vmatmul.bf16.gmra.mxu0 %v5376
    %v6597 = vpop.f32.mrf.mxu0
    %v6598 = vadd.f32 %v6585, %v6597
    %v6599 = vpop.f32.mrf.mxu0
    %6600 = vdwg.mxu0
    %6601 = vmatpush.bf16.msra.mxu0 %v6277
    %6602 = vmatpush.bf16.msra.mxu0 %v6276
    %6603 = vmatpush.bf16.msra.mxu0 %v6275
    %6604 = vmatpush.bf16.msra.mxu0 %v6274
    %6605 = vmatpush.bf16.msra.mxu0 %v6273
    %6606 = vmatpush.bf16.msra.mxu0 %v6272
    %6607 = vmatpush.bf16.msra.mxu0 %v6271
    %6608 = vmatpush.bf16.msra.mxu0 %v6270
    %6609 = vmatmul.bf16.gmra.mxu0 %v5377
    %v6610 = vpop.f32.mrf.mxu0
    %v6611 = vadd.f32 %v6598, %v6610
    %v6612 = vpop.f32.mrf.mxu0
    %6613 = vdwg.mxu0
    %6614 = vst [vmem:[%s9] sm:$0xff] %v6611
    // Predicated region
    $region70: #{encoder_forward.1} parent=1 // pred_check
      _
    $region71: #{encoder_forward.1} parent=1 // pred_check_branch
      %6616 = sbr.rel (0) target = $region73
    $region72: #{encoder_forward.1} parent=1 // pred_region
      _
    $region73: #{encoder_forward.1} parent=1 // pred_fallthru
      _
    // Predicated region
    $region74: #{encoder_forward.1} parent=1 // pred_check
      _
    $region75: #{encoder_forward.1} parent=1 // pred_check_branch
      %6618 = sbr.rel (0) target = $region77
    $region76: #{encoder_forward.1} parent=1 // pred_region
      _
    $region77: #{encoder_forward.1} parent=1 // pred_fallthru
      _
    %6619 = vsyncpa [#allocation3], 1
    %6620 = vsyncpa [#allocation5], 1
    %6621 = vsyncpa [#allocation8], 1
    %6622 = vsyncpa [#allocation11], 1
    %6623 = vsyncpa [#allocation14], 1

</llo_original>
